<compile_context>
chip_gen: v5e
topology: v5e:2x2
jax: 0.10.0
libtpu: 0.0.40
codegen_flags: <defaults>
</compile_context>

<pallas_src>
import math

import jax
import jax.numpy as jnp
import numpy as np
from jax.experimental import pallas as pl
from jax.experimental.pallas import tpu as pltpu

# ---- module hyper-parameters (small, but consistent with the module) ----
D = 64            # dim
H = 4             # num_attention_heads
DH = 16           # attention_head_dim
I = H * DH        # attention inner dim (= dim)
FF = 4 * D        # feed-forward inner dim (mult=4, gelu-approximate)
S = 16            # image (sample) tokens
L = 8             # text (context) tokens
T = S + L         # joint tokens
B = 2             # batch
EPS = 1e-6

PARAM_ORDER = [
    "n1_w", "n1_b", "n1c_w", "n1c_b",
    "wq", "bq", "wk", "bk", "wv", "bv",
    "waq", "baq", "wak", "bak", "wav", "bav",
    "wo", "bo", "wao", "bao",
    "ff1_w", "ff1_b", "ff2_w", "ff2_b",
    "cf1_w", "cf1_b", "cf2_w", "cf2_b",
]

PARAM_SHAPES = {
    "n1_w": (D, 6 * D), "n1_b": (1, 6 * D),
    "n1c_w": (D, 6 * D), "n1c_b": (1, 6 * D),
    "wq": (D, I), "bq": (1, I), "wk": (D, I), "bk": (1, I), "wv": (D, I), "bv": (1, I),
    "waq": (D, I), "baq": (1, I), "wak": (D, I), "bak": (1, I), "wav": (D, I), "bav": (1, I),
    "wo": (I, D), "bo": (1, D), "wao": (I, D), "bao": (1, D),
    "ff1_w": (D, FF), "ff1_b": (1, FF), "ff2_w": (FF, D), "ff2_b": (1, D),
    "cf1_w": (D, FF), "cf1_b": (1, FF), "cf2_w": (FF, D), "cf2_b": (1, D),
}


def _layer_norm(x, eps=EPS):
    # LayerNorm with elementwise_affine=False (matches nn.LayerNorm(dim, eps=1e-6))
    m = jnp.mean(x, axis=-1, keepdims=True)
    v = jnp.mean((x - m) ** 2, axis=-1, keepdims=True)
    return (x - m) * jax.lax.rsqrt(v + eps)


def _joint_block_kernel(
    h_ref, c_ref, t_ref,
    n1f_w, n1f_b,
    wqkv_bd, bqkv_j,
    wout_bd, bout_bd,
    ff1_bd, ff1b_j,
    ff2_bd, ff2b_bd,
    h_out, c_out,
):
    f32 = jnp.float32
    bf16 = jnp.bfloat16
    nb = h_ref.shape[0]                       # static: whole batch in one grid step

    h = h_ref[...].astype(f32)                # (nb, S, D)
    c = c_ref[...].astype(f32)                # (nb, L, D)
    t = t_ref[...].astype(f32)                # (nb, D)

    # ---- fused AdaLayerNormZero: norm1 + norm1_context share one dot over silu(temb) ----
    silu_t = t * jax.nn.sigmoid(t)
    emb = jnp.dot(silu_t.astype(bf16), n1f_w[...],
                  preferred_element_type=f32) + n1f_b[...]             # (nb, 12D)
    mods = [emb[:, i * D:(i + 1) * D][:, None, :] for i in range(12)]  # each (nb, 1, D)
    (shift_msa, scale_msa, gate_msa, shift_mlp, scale_mlp, gate_mlp,
     c_shift_msa, c_scale_msa, c_gate_msa, c_shift_mlp, c_scale_mlp, c_gate_mlp) = mods

    # ---- norm1 with implicit (nb,1,D) broadcasting (no materialized row broadcasts) ----
    norm_h = _layer_norm(h) * (1.0 + scale_msa) + shift_msa            # (nb, S, D) f32
    norm_c = _layer_norm(c) * (1.0 + c_scale_msa) + c_shift_msa        # (nb, L, D) f32

    # ---- zero-padded joint layout -> single block-diagonal QKV matmul (K=128) ----
    zs = jnp.zeros((nb, S, D), f32)
    zl = jnp.zeros((nb, L, D), f32)
    joint_in = jnp.concatenate(
        [jnp.concatenate([norm_h, zs], axis=-1),
         jnp.concatenate([zl, norm_c], axis=-1)], axis=1)              # (nb, T, 2D)
    qkv = jnp.dot(joint_in.reshape(nb * T, 2 * D).astype(bf16), wqkv_bd[...],
                  preferred_element_type=f32)                          # (nb*T, 3I)
    # per-row (sample vs context) bias, 1/sqrt(DH) already folded into the q columns
    qkv = (qkv.reshape(nb, T, 3 * I) + bqkv_j[...][None, :, :]).reshape(nb * T, 3 * I)

    # ---- joint self-attention; softmax batched across (batch, head) ----
    scores = []
    for b in range(nb):
        rows = slice(b * T, (b + 1) * T)
        for hh in range(H):
            q = qkv[rows, hh * DH:(hh + 1) * DH].astype(bf16)          # (T, DH), pre-scaled
            k = qkv[rows, I + hh * DH:I + (hh + 1) * DH].astype(bf16)  # (T, DH)
            scores.append(jnp.dot(q, k.T, preferred_element_type=f32))  # (T, T)
    s_all = jnp.concatenate(scores, axis=0)                            # (nb*H*T, T)
    s_all = s_all - jnp.max(s_all, axis=-1, keepdims=True)
    e_all = jnp.exp(s_all)
    p_all = e_all * pl.reciprocal(jnp.sum(e_all, axis=-1, keepdims=True), approx=True)

    # ---- PV matmuls with the packed output projection folded into the head loop ----
    wout = wout_bd[...]                                                # (I, 2D) bf16
    attn_parts = []
    for b in range(nb):
        rows = slice(b * T, (b + 1) * T)
        acc = jnp.zeros((T, 2 * D), f32)
        for hh in range(H):
            p = p_all[(b * H + hh) * T:(b * H + hh + 1) * T, :].astype(bf16)
            v = qkv[rows, 2 * I + hh * DH:2 * I + (hh + 1) * DH].astype(bf16)
            o = jnp.dot(p, v, preferred_element_type=f32)              # (T, DH)
            acc = acc + jnp.dot(o.astype(bf16), wout[hh * DH:(hh + 1) * DH, :],
                                preferred_element_type=f32)            # (T, 2D)
        attn_parts.append(acc)
    attn_joint = (jnp.concatenate(attn_parts, axis=0).reshape(nb, T, 2 * D)
                  + bout_bd[...])                                      # (+[bo | bao])

    attn_out = attn_joint[:, :S, :D]                                   # sample attention
    ctx_attn_out = attn_joint[:, S:, D:]                               # context attention
    # to_out[1] / dropout is identity in eval mode.

    # ---- gated residuals + norm2 modulation (f32 elementwise) ----
    h1 = h + gate_msa * attn_out                                       # (nb, S, D)
    c1 = c + c_gate_msa * ctx_attn_out                                 # (nb, L, D)
    nh2 = _layer_norm(h1) * (1.0 + scale_mlp) + shift_mlp
    nc2 = _layer_norm(c1) * (1.0 + c_scale_mlp) + c_shift_mlp

    # ---- block-diagonal feed-forward over stacked (nb*T) rows, 128-lane-dense output ----
    ff_in = jnp.concatenate(
        [jnp.concatenate([nh2, zs], axis=-1),
         jnp.concatenate([zl, nc2], axis=-1)], axis=1)                 # (nb, T, 2D)
    mid = jnp.dot(ff_in.reshape(nb * T, 2 * D).astype(bf16), ff1_bd[...],
                  preferred_element_type=f32)                          # (nb*T, FF)
    mid = jax.nn.gelu(mid.reshape(nb, T, FF) + ff1b_j[...][None, :, :], approximate=True)
    ff_out = (jnp.dot(mid.reshape(nb * T, FF).astype(bf16), ff2_bd[...],
                      preferred_element_type=f32).reshape(nb, T, 2 * D)
              + ff2b_bd[...])                                          # (nb, T, 2D)

    h_out[...] = (h1 + gate_mlp * ff_out[:, :S, :D]).astype(h_out.dtype)
    c_out[...] = (c1 + c_gate_mlp * ff_out[:, S:, D:]).astype(c_out.dtype)


def _pack_params(p):
    """Fuse/pack weights in the wrapper (runs once in XLA on HBM); matmul weights -> bf16."""
    bf = jnp.bfloat16
    scale = 1.0 / math.sqrt(DH)

    # AdaLayerNormZero (sample + context) fused into one (D, 12D) weight.
    n1f_w = jnp.concatenate([p["n1_w"], p["n1c_w"]], axis=1).astype(bf)      # (D, 12D)
    n1f_b = jnp.concatenate([p["n1_b"], p["n1c_b"]], axis=1)                 # (1, 12D) f32

    # Block-diagonal QKV: rows 0:D -> sample stream, rows D:2D -> context stream.
    w_s = jnp.concatenate([p["wq"] * scale, p["wk"], p["wv"]], axis=1)       # (D, 3I)
    w_c = jnp.concatenate([p["waq"] * scale, p["wak"], p["wav"]], axis=1)    # (D, 3I)
    wqkv_bd = jnp.concatenate([w_s, w_c], axis=0).astype(bf)                 # (2D, 3I)
    b_s = jnp.concatenate([p["bq"] * scale, p["bk"], p["bv"]], axis=1)       # (1, 3I)
    b_c = jnp.concatenate([p["baq"] * scale, p["bak"], p["bav"]], axis=1)    # (1, 3I)
    bqkv_j = jnp.concatenate([jnp.tile(b_s, (S, 1)), jnp.tile(b_c, (L, 1))], axis=0)  # (T, 3I)

    # Packed output projections: columns 0:D -> wo (sample), D:2D -> wao (context).
    wout_bd = jnp.concatenate([p["wo"], p["wao"]], axis=1).astype(bf)        # (I, 2D)
    bout_bd = jnp.concatenate([p["bo"], p["bao"]], axis=1)                   # (1, 2D)

    # Block-diagonal feed-forward stacks.
    ff1_bd = jnp.concatenate([p["ff1_w"], p["cf1_w"]], axis=0).astype(bf)    # (2D, FF)
    ff1b_j = jnp.concatenate([jnp.tile(p["ff1_b"], (S, 1)),
                              jnp.tile(p["cf1_b"], (L, 1))], axis=0)         # (T, FF)
    ff2_bd = jnp.concatenate([p["ff2_w"], p["cf2_w"]], axis=1).astype(bf)    # (FF, 2D)
    ff2b_bd = jnp.concatenate([p["ff2_b"], p["cf2_b"]], axis=1)              # (1, 2D)

    return [n1f_w, n1f_b, wqkv_bd, bqkv_j, wout_bd, bout_bd,
            ff1_bd, ff1b_j, ff2_bd, ff2b_bd]


def joint_transformer_block(hidden, encoder, temb, params):
    weights = _pack_params(params)

    def full_spec(a):
        return pl.BlockSpec(a.shape, lambda g, _n=a.ndim: (0,) * _n)

    in_specs = ([full_spec(hidden), full_spec(encoder), full_spec(temb)]
                + [full_spec(w) for w in weights])
    out_specs = (full_spec(hidden), full_spec(encoder))
    out_shape = (
        jax.ShapeDtypeStruct(hidden.shape, hidden.dtype),
        jax.ShapeDtypeStruct(encoder.shape, encoder.dtype),
    )

    h_out, c_out = pl.pallas_call(
        _joint_block_kernel,
        grid=(1,),                                  # whole (tiny) batch in one step
        in_specs=in_specs,
        out_specs=out_specs,
        out_shape=out_shape,
        compiler_params=pltpu.CompilerParams(dimension_semantics=("arbitrary",)),
    )(hidden, encoder, temb, *weights)

    # PyTorch returns (encoder_hidden_states, hidden_states)
    return c_out, h_out


def init_params(key):
    keys = jax.random.split(key, len(PARAM_ORDER))
    params = {}
    for k, name in zip(keys, PARAM_ORDER):
        params[name] = (0.02 * jax.random.normal(k, PARAM_SHAPES[name])).astype(jnp.float32)
    return params


def reference(h, c, t, p):
    """Pure-JAX f32 mirror of the block (batched, unfused weights, exact softmax)."""
    silu = t * jax.nn.sigmoid(t)
    emb = silu @ p["n1_w"] + p["n1_b"]
    sh_msa, sc_msa, g_msa, sh_mlp, sc_mlp, g_mlp = jnp.split(emb, 6, axis=-1)
    cemb = silu @ p["n1c_w"] + p["n1c_b"]
    csh_msa, csc_msa, cg_msa, csh_mlp, csc_mlp, cg_mlp = jnp.split(cemb, 6, axis=-1)

    nh = _layer_norm(h) * (1 + sc_msa[:, None]) + sh_msa[:, None]
    nc = _layer_norm(c) * (1 + csc_msa[:, None]) + csh_msa[:, None]

    q = nh @ p["wq"] + p["bq"]
    k = nh @ p["wk"] + p["bk"]
    v = nh @ p["wv"] + p["bv"]
    cq = nc @ p["waq"] + p["baq"]
    ck = nc @ p["wak"] + p["bak"]
    cv = nc @ p["wav"] + p["bav"]

    Q = jnp.concatenate([q, cq], axis=1).reshape(B, T, H, DH)
    K = jnp.concatenate([k, ck], axis=1).reshape(B, T, H, DH)
    V = jnp.concatenate([v, cv], axis=1).reshape(B, T, H, DH)
    scores = jnp.einsum("bqhd,bkhd->bhqk", Q, K) / math.sqrt(DH)
    probs = jax.nn.softmax(scores, axis=-1)
    o = jnp.einsum("bhqk,bkhd->bqhd", probs, V).reshape(B, T, I)
    attn_h, attn_c = o[:, :S], o[:, S:]
    attn_out = attn_h @ p["wo"] + p["bo"]
    ctx_out = attn_c @ p["wao"] + p["bao"]

    h1 = h + g_msa[:, None] * attn_out
    nh2 = _layer_norm(h1) * (1 + sc_mlp[:, None]) + sh_mlp[:, None]
    ff = jax.nn.gelu(nh2 @ p["ff1_w"] + p["ff1_b"], approximate=True) @ p["ff2_w"] + p["ff2_b"]
    h2 = h1 + g_mlp[:, None] * ff

    c1 = c + cg_msa[:, None] * ctx_out
    nc2 = _layer_norm(c1) * (1 + csc_mlp[:, None]) + csh_mlp[:, None]
    cff = jax.nn.gelu(nc2 @ p["cf1_w"] + p["cf1_b"], approximate=True) @ p["cf2_w"] + p["cf2_b"]
    c2 = c1 + cg_mlp[:, None] * cff
    return c2, h2


if __name__ == "__main__":
    key = jax.random.PRNGKey(0)
    k_h, k_c, k_t, k_p = jax.random.split(key, 4)
    hidden_states = jax.random.normal(k_h, (B, S, D), jnp.float32)
    encoder_hidden_states = jax.random.normal(k_c, (B, L, D), jnp.float32)
    temb = jax.random.normal(k_t, (B, D), jnp.float32)
    params = init_params(k_p)

    fn = jax.jit(joint_transformer_block)
    enc_out, hid_out = fn(hidden_states, encoder_hidden_states, temb, params)
    jax.block_until_ready((enc_out, hid_out))

    ref_enc, ref_hid = reference(hidden_states, encoder_hidden_states, temb, params)
    # Tolerance relaxed vs. a pure-f32 kernel: matmul operands are bf16 and the softmax
    # denominator uses the EUP approximate reciprocal (pl.reciprocal(approx=True)).
    np.testing.assert_allclose(np.asarray(hid_out), np.asarray(ref_hid), rtol=2e-2, atol=2e-2)
    np.testing.assert_allclose(np.asarray(enc_out), np.asarray(ref_enc), rtol=2e-2, atol=2e-2)

    print("KERNEL_OK")
</pallas_src>

<mosaic_0001>
module attributes {stable_mosaic.version = 11 : i64} {
  func.func @_joint_block_kernel(%arg0: i32, %arg1: memref<2x16x64xf32, #tpu.memory_space<vmem>>, %arg2: memref<2x8x64xf32, #tpu.memory_space<vmem>>, %arg3: memref<2x64xf32, #tpu.memory_space<vmem>>, %arg4: memref<64x768xbf16, #tpu.memory_space<vmem>>, %arg5: memref<1x768xf32, #tpu.memory_space<vmem>>, %arg6: memref<128x192xbf16, #tpu.memory_space<vmem>>, %arg7: memref<24x192xf32, #tpu.memory_space<vmem>>, %arg8: memref<64x128xbf16, #tpu.memory_space<vmem>>, %arg9: memref<1x128xf32, #tpu.memory_space<vmem>>, %arg10: memref<128x256xbf16, #tpu.memory_space<vmem>>, %arg11: memref<24x256xf32, #tpu.memory_space<vmem>>, %arg12: memref<256x128xbf16, #tpu.memory_space<vmem>>, %arg13: memref<1x128xf32, #tpu.memory_space<vmem>>, %arg14: memref<2x16x64xf32, #tpu.memory_space<vmem>>, %arg15: memref<2x8x64xf32, #tpu.memory_space<vmem>>) attributes {dimension_semantics = [#tpu.dimension_semantics<arbitrary>], iteration_bounds = array<i64: 1>, scalar_prefetch = 0 : i64, scratch_operands = 0 : i64, tpu.core_type = #tpu.core_type<tc>, window_params = [{pipeline_mode = #tpu.pipeline_mode<synchronous>, transform_indices = @transform_0, window_bounds = array<i64: 2, 16, 64>}, {pipeline_mode = #tpu.pipeline_mode<synchronous>, transform_indices = @transform_1, window_bounds = array<i64: 2, 8, 64>}, {pipeline_mode = #tpu.pipeline_mode<synchronous>, transform_indices = @transform_2, window_bounds = array<i64: 2, 64>}, {pipeline_mode = #tpu.pipeline_mode<synchronous>, transform_indices = @transform_3, window_bounds = array<i64: 64, 768>}, {pipeline_mode = #tpu.pipeline_mode<synchronous>, transform_indices = @transform_4, window_bounds = array<i64: 1, 768>}, {pipeline_mode = #tpu.pipeline_mode<synchronous>, transform_indices = @transform_5, window_bounds = array<i64: 128, 192>}, {pipeline_mode = #tpu.pipeline_mode<synchronous>, transform_indices = @transform_6, window_bounds = array<i64: 24, 192>}, {pipeline_mode = #tpu.pipeline_mode<synchronous>, transform_indices = @transform_7, window_bounds = array<i64: 64, 128>}, {pipeline_mode = #tpu.pipeline_mode<synchronous>, transform_indices = @transform_8, window_bounds = array<i64: 1, 128>}, {pipeline_mode = #tpu.pipeline_mode<synchronous>, transform_indices = @transform_9, window_bounds = array<i64: 128, 256>}, {pipeline_mode = #tpu.pipeline_mode<synchronous>, transform_indices = @transform_10, window_bounds = array<i64: 24, 256>}, {pipeline_mode = #tpu.pipeline_mode<synchronous>, transform_indices = @transform_11, window_bounds = array<i64: 256, 128>}, {pipeline_mode = #tpu.pipeline_mode<synchronous>, transform_indices = @transform_12, window_bounds = array<i64: 1, 128>}, {pipeline_mode = #tpu.pipeline_mode<synchronous>, transform_indices = @transform_13, window_bounds = array<i64: 2, 16, 64>}, {pipeline_mode = #tpu.pipeline_mode<synchronous>, transform_indices = @transform_14, window_bounds = array<i64: 2, 8, 64>}]} {
    %c0 = arith.constant 0 : index
    %c0_0 = arith.constant 0 : index
    %c0_1 = arith.constant 0 : index
    %0 = vector.load %arg1[%c0, %c0_0, %c0_1] : memref<2x16x64xf32, #tpu.memory_space<vmem>>, vector<2x16x64xf32>
    %c0_2 = arith.constant 0 : index
    %c0_3 = arith.constant 0 : index
    %c0_4 = arith.constant 0 : index
    %1 = vector.load %arg2[%c0_2, %c0_3, %c0_4] : memref<2x8x64xf32, #tpu.memory_space<vmem>>, vector<2x8x64xf32>
    %c0_5 = arith.constant 0 : index
    %c0_6 = arith.constant 0 : index
    %2 = vector.load %arg3[%c0_5, %c0_6] : memref<2x64xf32, #tpu.memory_space<vmem>>, vector<2x64xf32>
    %3 = arith.negf %2 : vector<2x64xf32>
    %4 = math.exp %3 : vector<2x64xf32>
    %cst = arith.constant 1.000000e+00 : f32
    %5 = vector.broadcast %cst : f32 to vector<2x64xf32>
    %6 = arith.addf %5, %4 : vector<2x64xf32>
    %7 = arith.divf %5, %6 : vector<2x64xf32>
    %8 = arith.mulf %2, %7 : vector<2x64xf32>
    %9 = arith.truncf %8 : vector<2x64xf32> to vector<2x64xbf16>
    %c0_7 = arith.constant 0 : index
    %c0_8 = arith.constant 0 : index
    %10 = vector.load %arg4[%c0_7, %c0_8] : memref<64x768xbf16, #tpu.memory_space<vmem>>, vector<64x768xbf16>
    %cst_9 = arith.constant dense<0.000000e+00> : vector<2x768xf32>
    %11 = tpu.matmul %9, %10, %cst_9 {dimension_numbers = #tpu.dot_dimension_numbers<[1], [0], [0], [1], [0, 0, 1, 1], [], []>} : vector<2x64xbf16>, vector<64x768xbf16>, vector<2x768xf32> -> vector<2x768xf32>
    %c0_10 = arith.constant 0 : index
    %c0_11 = arith.constant 0 : index
    %12 = vector.load %arg5[%c0_10, %c0_11] : memref<1x768xf32, #tpu.memory_space<vmem>>, vector<1x768xf32>
    %13 = vector.broadcast %12 : vector<1x768xf32> to vector<2x768xf32>
    %14 = arith.addf %11, %13 : vector<2x768xf32>
    %15 = vector.extract_strided_slice %14 {offsets = [0, 0], sizes = [2, 64], strides = [1, 1]} : vector<2x768xf32> to vector<2x64xf32>
    %16 = vector.shape_cast %15 : vector<2x64xf32> to vector<2x1x64xf32>
    %17 = vector.extract_strided_slice %14 {offsets = [0, 64], sizes = [2, 64], strides = [1, 1]} : vector<2x768xf32> to vector<2x64xf32>
    %18 = vector.shape_cast %17 : vector<2x64xf32> to vector<2x1x64xf32>
    %19 = vector.extract_strided_slice %14 {offsets = [0, 128], sizes = [2, 64], strides = [1, 1]} : vector<2x768xf32> to vector<2x64xf32>
    %20 = vector.shape_cast %19 : vector<2x64xf32> to vector<2x1x64xf32>
    %21 = vector.extract_strided_slice %14 {offsets = [0, 192], sizes = [2, 64], strides = [1, 1]} : vector<2x768xf32> to vector<2x64xf32>
    %22 = vector.shape_cast %21 : vector<2x64xf32> to vector<2x1x64xf32>
    %23 = vector.extract_strided_slice %14 {offsets = [0, 256], sizes = [2, 64], strides = [1, 1]} : vector<2x768xf32> to vector<2x64xf32>
    %24 = vector.shape_cast %23 : vector<2x64xf32> to vector<2x1x64xf32>
    %25 = vector.extract_strided_slice %14 {offsets = [0, 320], sizes = [2, 64], strides = [1, 1]} : vector<2x768xf32> to vector<2x64xf32>
    %26 = vector.shape_cast %25 : vector<2x64xf32> to vector<2x1x64xf32>
    %27 = vector.extract_strided_slice %14 {offsets = [0, 384], sizes = [2, 64], strides = [1, 1]} : vector<2x768xf32> to vector<2x64xf32>
    %28 = vector.shape_cast %27 : vector<2x64xf32> to vector<2x1x64xf32>
    %29 = vector.extract_strided_slice %14 {offsets = [0, 448], sizes = [2, 64], strides = [1, 1]} : vector<2x768xf32> to vector<2x64xf32>
    %30 = vector.shape_cast %29 : vector<2x64xf32> to vector<2x1x64xf32>
    %31 = vector.extract_strided_slice %14 {offsets = [0, 512], sizes = [2, 64], strides = [1, 1]} : vector<2x768xf32> to vector<2x64xf32>
    %32 = vector.shape_cast %31 : vector<2x64xf32> to vector<2x1x64xf32>
    %33 = vector.extract_strided_slice %14 {offsets = [0, 576], sizes = [2, 64], strides = [1, 1]} : vector<2x768xf32> to vector<2x64xf32>
    %34 = vector.shape_cast %33 : vector<2x64xf32> to vector<2x1x64xf32>
    %35 = vector.extract_strided_slice %14 {offsets = [0, 640], sizes = [2, 64], strides = [1, 1]} : vector<2x768xf32> to vector<2x64xf32>
    %36 = vector.shape_cast %35 : vector<2x64xf32> to vector<2x1x64xf32>
    %37 = vector.extract_strided_slice %14 {offsets = [0, 704], sizes = [2, 64], strides = [1, 1]} : vector<2x768xf32> to vector<2x64xf32>
    %38 = vector.shape_cast %37 : vector<2x64xf32> to vector<2x1x64xf32>
    %cst_12 = arith.constant dense<0.000000e+00> : vector<2x16xf32>
    %39 = vector.multi_reduction <add>, %0, %cst_12 [2] : vector<2x16x64xf32> to vector<2x16xf32>
    %40 = vector.shape_cast %39 : vector<2x16xf32> to vector<2x16x1xf32>
    %cst_13 = arith.constant 6.400000e+01 : f32
    %41 = vector.broadcast %cst_13 : f32 to vector<2x16x1xf32>
    %42 = arith.divf %40, %41 : vector<2x16x1xf32>
    %43 = vector.broadcast %42 : vector<2x16x1xf32> to vector<2x16x64xf32>
    %44 = arith.subf %0, %43 : vector<2x16x64xf32>
    %45 = arith.mulf %44, %44 : vector<2x16x64xf32>
    %cst_14 = arith.constant dense<0.000000e+00> : vector<2x16xf32>
    %46 = vector.multi_reduction <add>, %45, %cst_14 [2] : vector<2x16x64xf32> to vector<2x16xf32>
    %47 = vector.shape_cast %46 : vector<2x16xf32> to vector<2x16x1xf32>
    %cst_15 = arith.constant 6.400000e+01 : f32
    %48 = vector.broadcast %cst_15 : f32 to vector<2x16x1xf32>
    %49 = arith.divf %47, %48 : vector<2x16x1xf32>
    %50 = vector.broadcast %42 : vector<2x16x1xf32> to vector<2x16x64xf32>
    %51 = arith.subf %0, %50 : vector<2x16x64xf32>
    %cst_16 = arith.constant 9.99999997E-7 : f32
    %52 = vector.broadcast %cst_16 : f32 to vector<2x16x1xf32>
    %53 = arith.addf %49, %52 : vector<2x16x1xf32>
    %54 = math.rsqrt %53 : vector<2x16x1xf32>
    %55 = vector.broadcast %54 : vector<2x16x1xf32> to vector<2x16x64xf32>
    %56 = arith.mulf %51, %55 : vector<2x16x64xf32>
    %cst_17 = arith.constant 1.000000e+00 : f32
    %57 = vector.broadcast %cst_17 : f32 to vector<2x1x64xf32>
    %58 = arith.addf %57, %18 : vector<2x1x64xf32>
    %59 = vector.broadcast %58 : vector<2x1x64xf32> to vector<2x16x64xf32>
    %60 = arith.mulf %56, %59 : vector<2x16x64xf32>
    %61 = vector.broadcast %16 : vector<2x1x64xf32> to vector<2x16x64xf32>
    %62 = arith.addf %60, %61 : vector<2x16x64xf32>
    %cst_18 = arith.constant dense<0.000000e+00> : vector<2x8xf32>
    %63 = vector.multi_reduction <add>, %1, %cst_18 [2] : vector<2x8x64xf32> to vector<2x8xf32>
    %64 = vector.shape_cast %63 : vector<2x8xf32> to vector<2x8x1xf32>
    %cst_19 = arith.constant 6.400000e+01 : f32
    %65 = vector.broadcast %cst_19 : f32 to vector<2x8x1xf32>
    %66 = arith.divf %64, %65 : vector<2x8x1xf32>
    %67 = vector.broadcast %66 : vector<2x8x1xf32> to vector<2x8x64xf32>
    %68 = arith.subf %1, %67 : vector<2x8x64xf32>
    %69 = arith.mulf %68, %68 : vector<2x8x64xf32>
    %cst_20 = arith.constant dense<0.000000e+00> : vector<2x8xf32>
    %70 = vector.multi_reduction <add>, %69, %cst_20 [2] : vector<2x8x64xf32> to vector<2x8xf32>
    %71 = vector.shape_cast %70 : vector<2x8xf32> to vector<2x8x1xf32>
    %cst_21 = arith.constant 6.400000e+01 : f32
    %72 = vector.broadcast %cst_21 : f32 to vector<2x8x1xf32>
    %73 = arith.divf %71, %72 : vector<2x8x1xf32>
    %74 = vector.broadcast %66 : vector<2x8x1xf32> to vector<2x8x64xf32>
    %75 = arith.subf %1, %74 : vector<2x8x64xf32>
    %cst_22 = arith.constant 9.99999997E-7 : f32
    %76 = vector.broadcast %cst_22 : f32 to vector<2x8x1xf32>
    %77 = arith.addf %73, %76 : vector<2x8x1xf32>
    %78 = math.rsqrt %77 : vector<2x8x1xf32>
    %79 = vector.broadcast %78 : vector<2x8x1xf32> to vector<2x8x64xf32>
    %80 = arith.mulf %75, %79 : vector<2x8x64xf32>
    %cst_23 = arith.constant 1.000000e+00 : f32
    %81 = vector.broadcast %cst_23 : f32 to vector<2x1x64xf32>
    %82 = arith.addf %81, %30 : vector<2x1x64xf32>
    %83 = vector.broadcast %82 : vector<2x1x64xf32> to vector<2x8x64xf32>
    %84 = arith.mulf %80, %83 : vector<2x8x64xf32>
    %85 = vector.broadcast %28 : vector<2x1x64xf32> to vector<2x8x64xf32>
    %86 = arith.addf %84, %85 : vector<2x8x64xf32>
    %cst_24 = arith.constant 0.000000e+00 : f32
    %87 = vector.broadcast %cst_24 : f32 to vector<2x16x64xf32>
    %cst_25 = arith.constant 0.000000e+00 : f32
    %88 = vector.broadcast %cst_25 : f32 to vector<2x8x64xf32>
    %89 = tpu.concatenate %62, %87 in 2 : vector<2x16x64xf32>, vector<2x16x64xf32> -> vector<2x16x128xf32>
    %90 = tpu.concatenate %88, %86 in 2 : vector<2x8x64xf32>, vector<2x8x64xf32> -> vector<2x8x128xf32>
    %91 = tpu.concatenate %89, %90 in 1 : vector<2x16x128xf32>, vector<2x8x128xf32> -> vector<2x24x128xf32>
    %92 = vector.shape_cast %91 : vector<2x24x128xf32> to vector<48x128xf32>
    %93 = arith.truncf %92 : vector<48x128xf32> to vector<48x128xbf16>
    %c0_26 = arith.constant 0 : index
    %c0_27 = arith.constant 0 : index
    %94 = vector.load %arg6[%c0_26, %c0_27] : memref<128x192xbf16, #tpu.memory_space<vmem>>, vector<128x192xbf16>
    %cst_28 = arith.constant dense<0.000000e+00> : vector<48x192xf32>
    %95 = tpu.matmul %93, %94, %cst_28 {dimension_numbers = #tpu.dot_dimension_numbers<[1], [0], [0], [1], [0, 0, 1, 1], [], []>} : vector<48x128xbf16>, vector<128x192xbf16>, vector<48x192xf32> -> vector<48x192xf32>
    %96 = vector.shape_cast %95 : vector<48x192xf32> to vector<2x24x192xf32>
    %c0_29 = arith.constant 0 : index
    %c0_30 = arith.constant 0 : index
    %97 = vector.load %arg7[%c0_29, %c0_30] : memref<24x192xf32, #tpu.memory_space<vmem>>, vector<24x192xf32>
    %98 = vector.shape_cast %97 : vector<24x192xf32> to vector<1x24x192xf32>
    %99 = vector.broadcast %98 : vector<1x24x192xf32> to vector<2x24x192xf32>
    %100 = arith.addf %96, %99 : vector<2x24x192xf32>
    %101 = vector.shape_cast %100 : vector<2x24x192xf32> to vector<48x192xf32>
    %102 = vector.extract_strided_slice %101 {offsets = [0, 0], sizes = [24, 16], strides = [1, 1]} : vector<48x192xf32> to vector<24x16xf32>
    %103 = arith.truncf %102 : vector<24x16xf32> to vector<24x16xbf16>
    %104 = vector.extract_strided_slice %101 {offsets = [0, 64], sizes = [24, 16], strides = [1, 1]} : vector<48x192xf32> to vector<24x16xf32>
    %105 = arith.truncf %104 : vector<24x16xf32> to vector<24x16xbf16>
    %106 = tpu.transpose %105, [1, 0] : vector<24x16xbf16> -> vector<16x24xbf16>
    %cst_31 = arith.constant dense<0.000000e+00> : vector<24x24xf32>
    %107 = tpu.matmul %103, %106, %cst_31 {dimension_numbers = #tpu.dot_dimension_numbers<[1], [0], [0], [1], [0, 0, 1, 1], [], []>} : vector<24x16xbf16>, vector<16x24xbf16>, vector<24x24xf32> -> vector<24x24xf32>
    %108 = vector.extract_strided_slice %101 {offsets = [0, 16], sizes = [24, 16], strides = [1, 1]} : vector<48x192xf32> to vector<24x16xf32>
    %109 = arith.truncf %108 : vector<24x16xf32> to vector<24x16xbf16>
    %110 = vector.extract_strided_slice %101 {offsets = [0, 80], sizes = [24, 16], strides = [1, 1]} : vector<48x192xf32> to vector<24x16xf32>
    %111 = arith.truncf %110 : vector<24x16xf32> to vector<24x16xbf16>
    %112 = tpu.transpose %111, [1, 0] : vector<24x16xbf16> -> vector<16x24xbf16>
    %cst_32 = arith.constant dense<0.000000e+00> : vector<24x24xf32>
    %113 = tpu.matmul %109, %112, %cst_32 {dimension_numbers = #tpu.dot_dimension_numbers<[1], [0], [0], [1], [0, 0, 1, 1], [], []>} : vector<24x16xbf16>, vector<16x24xbf16>, vector<24x24xf32> -> vector<24x24xf32>
    %114 = vector.extract_strided_slice %101 {offsets = [0, 32], sizes = [24, 16], strides = [1, 1]} : vector<48x192xf32> to vector<24x16xf32>
    %115 = arith.truncf %114 : vector<24x16xf32> to vector<24x16xbf16>
    %116 = vector.extract_strided_slice %101 {offsets = [0, 96], sizes = [24, 16], strides = [1, 1]} : vector<48x192xf32> to vector<24x16xf32>
    %117 = arith.truncf %116 : vector<24x16xf32> to vector<24x16xbf16>
    %118 = tpu.transpose %117, [1, 0] : vector<24x16xbf16> -> vector<16x24xbf16>
    %cst_33 = arith.constant dense<0.000000e+00> : vector<24x24xf32>
    %119 = tpu.matmul %115, %118, %cst_33 {dimension_numbers = #tpu.dot_dimension_numbers<[1], [0], [0], [1], [0, 0, 1, 1], [], []>} : vector<24x16xbf16>, vector<16x24xbf16>, vector<24x24xf32> -> vector<24x24xf32>
    %120 = vector.extract_strided_slice %101 {offsets = [0, 48], sizes = [24, 16], strides = [1, 1]} : vector<48x192xf32> to vector<24x16xf32>
    %121 = arith.truncf %120 : vector<24x16xf32> to vector<24x16xbf16>
    %122 = vector.extract_strided_slice %101 {offsets = [0, 112], sizes = [24, 16], strides = [1, 1]} : vector<48x192xf32> to vector<24x16xf32>
    %123 = arith.truncf %122 : vector<24x16xf32> to vector<24x16xbf16>
    %124 = tpu.transpose %123, [1, 0] : vector<24x16xbf16> -> vector<16x24xbf16>
    %cst_34 = arith.constant dense<0.000000e+00> : vector<24x24xf32>
    %125 = tpu.matmul %121, %124, %cst_34 {dimension_numbers = #tpu.dot_dimension_numbers<[1], [0], [0], [1], [0, 0, 1, 1], [], []>} : vector<24x16xbf16>, vector<16x24xbf16>, vector<24x24xf32> -> vector<24x24xf32>
    %126 = vector.extract_strided_slice %101 {offsets = [24, 0], sizes = [24, 16], strides = [1, 1]} : vector<48x192xf32> to vector<24x16xf32>
    %127 = arith.truncf %126 : vector<24x16xf32> to vector<24x16xbf16>
    %128 = vector.extract_strided_slice %101 {offsets = [24, 64], sizes = [24, 16], strides = [1, 1]} : vector<48x192xf32> to vector<24x16xf32>
    %129 = arith.truncf %128 : vector<24x16xf32> to vector<24x16xbf16>
    %130 = tpu.transpose %129, [1, 0] : vector<24x16xbf16> -> vector<16x24xbf16>
    %cst_35 = arith.constant dense<0.000000e+00> : vector<24x24xf32>
    %131 = tpu.matmul %127, %130, %cst_35 {dimension_numbers = #tpu.dot_dimension_numbers<[1], [0], [0], [1], [0, 0, 1, 1], [], []>} : vector<24x16xbf16>, vector<16x24xbf16>, vector<24x24xf32> -> vector<24x24xf32>
    %132 = vector.extract_strided_slice %101 {offsets = [24, 16], sizes = [24, 16], strides = [1, 1]} : vector<48x192xf32> to vector<24x16xf32>
    %133 = arith.truncf %132 : vector<24x16xf32> to vector<24x16xbf16>
    %134 = vector.extract_strided_slice %101 {offsets = [24, 80], sizes = [24, 16], strides = [1, 1]} : vector<48x192xf32> to vector<24x16xf32>
    %135 = arith.truncf %134 : vector<24x16xf32> to vector<24x16xbf16>
    %136 = tpu.transpose %135, [1, 0] : vector<24x16xbf16> -> vector<16x24xbf16>
    %cst_36 = arith.constant dense<0.000000e+00> : vector<24x24xf32>
    %137 = tpu.matmul %133, %136, %cst_36 {dimension_numbers = #tpu.dot_dimension_numbers<[1], [0], [0], [1], [0, 0, 1, 1], [], []>} : vector<24x16xbf16>, vector<16x24xbf16>, vector<24x24xf32> -> vector<24x24xf32>
    %138 = vector.extract_strided_slice %101 {offsets = [24, 32], sizes = [24, 16], strides = [1, 1]} : vector<48x192xf32> to vector<24x16xf32>
    %139 = arith.truncf %138 : vector<24x16xf32> to vector<24x16xbf16>
    %140 = vector.extract_strided_slice %101 {offsets = [24, 96], sizes = [24, 16], strides = [1, 1]} : vector<48x192xf32> to vector<24x16xf32>
    %141 = arith.truncf %140 : vector<24x16xf32> to vector<24x16xbf16>
    %142 = tpu.transpose %141, [1, 0] : vector<24x16xbf16> -> vector<16x24xbf16>
    %cst_37 = arith.constant dense<0.000000e+00> : vector<24x24xf32>
    %143 = tpu.matmul %139, %142, %cst_37 {dimension_numbers = #tpu.dot_dimension_numbers<[1], [0], [0], [1], [0, 0, 1, 1], [], []>} : vector<24x16xbf16>, vector<16x24xbf16>, vector<24x24xf32> -> vector<24x24xf32>
    %144 = vector.extract_strided_slice %101 {offsets = [24, 48], sizes = [24, 16], strides = [1, 1]} : vector<48x192xf32> to vector<24x16xf32>
    %145 = arith.truncf %144 : vector<24x16xf32> to vector<24x16xbf16>
    %146 = vector.extract_strided_slice %101 {offsets = [24, 112], sizes = [24, 16], strides = [1, 1]} : vector<48x192xf32> to vector<24x16xf32>
    %147 = arith.truncf %146 : vector<24x16xf32> to vector<24x16xbf16>
    %148 = tpu.transpose %147, [1, 0] : vector<24x16xbf16> -> vector<16x24xbf16>
    %cst_38 = arith.constant dense<0.000000e+00> : vector<24x24xf32>
    %149 = tpu.matmul %145, %148, %cst_38 {dimension_numbers = #tpu.dot_dimension_numbers<[1], [0], [0], [1], [0, 0, 1, 1], [], []>} : vector<24x16xbf16>, vector<16x24xbf16>, vector<24x24xf32> -> vector<24x24xf32>
    %150 = tpu.concatenate %107, %113, %119, %125, %131, %137, %143, %149 in 0 : vector<24x24xf32>, vector<24x24xf32>, vector<24x24xf32>, vector<24x24xf32>, vector<24x24xf32>, vector<24x24xf32>, vector<24x24xf32>, vector<24x24xf32> -> vector<192x24xf32>
    %cst_39 = arith.constant dense<0xFF800000> : vector<192xf32>
    %151 = vector.multi_reduction <maximumf>, %150, %cst_39 [1] : vector<192x24xf32> to vector<192xf32>
    %152 = vector.shape_cast %151 : vector<192xf32> to vector<192x1xf32>
    %153 = vector.broadcast %152 : vector<192x1xf32> to vector<192x24xf32>
    %154 = arith.subf %150, %153 : vector<192x24xf32>
    %155 = math.exp %154 : vector<192x24xf32>
    %cst_40 = arith.constant dense<0.000000e+00> : vector<192xf32>
    %156 = vector.multi_reduction <add>, %155, %cst_40 [1] : vector<192x24xf32> to vector<192xf32>
    %157 = vector.shape_cast %156 : vector<192xf32> to vector<192x1xf32>
    %158 = tpu.reciprocal %157 {approx = true} : vector<192x1xf32> -> vector<192x1xf32>
    %159 = vector.broadcast %158 : vector<192x1xf32> to vector<192x24xf32>
    %160 = arith.mulf %155, %159 : vector<192x24xf32>
    %c0_41 = arith.constant 0 : index
    %c0_42 = arith.constant 0 : index
    %161 = vector.load %arg8[%c0_41, %c0_42] : memref<64x128xbf16, #tpu.memory_space<vmem>>, vector<64x128xbf16>
    %cst_43 = arith.constant 0.000000e+00 : f32
    %162 = vector.broadcast %cst_43 : f32 to vector<24x128xf32>
    %163 = vector.extract_strided_slice %160 {offsets = [0, 0], sizes = [24, 24], strides = [1, 1]} : vector<192x24xf32> to vector<24x24xf32>
    %164 = arith.truncf %163 : vector<24x24xf32> to vector<24x24xbf16>
    %165 = vector.extract_strided_slice %101 {offsets = [0, 128], sizes = [24, 16], strides = [1, 1]} : vector<48x192xf32> to vector<24x16xf32>
    %166 = arith.truncf %165 : vector<24x16xf32> to vector<24x16xbf16>
    %cst_44 = arith.constant dense<0.000000e+00> : vector<24x16xf32>
    %167 = tpu.matmul %164, %166, %cst_44 {dimension_numbers = #tpu.dot_dimension_numbers<[1], [0], [0], [1], [0, 0, 1, 1], [], []>} : vector<24x24xbf16>, vector<24x16xbf16>, vector<24x16xf32> -> vector<24x16xf32>
    %168 = arith.truncf %167 : vector<24x16xf32> to vector<24x16xbf16>
    %169 = vector.extract_strided_slice %161 {offsets = [0, 0], sizes = [16, 128], strides = [1, 1]} : vector<64x128xbf16> to vector<16x128xbf16>
    %cst_45 = arith.constant dense<0.000000e+00> : vector<24x128xf32>
    %170 = tpu.matmul %168, %169, %cst_45 {dimension_numbers = #tpu.dot_dimension_numbers<[1], [0], [0], [1], [0, 0, 1, 1], [], []>} : vector<24x16xbf16>, vector<16x128xbf16>, vector<24x128xf32> -> vector<24x128xf32>
    %171 = arith.addf %162, %170 : vector<24x128xf32>
    %172 = vector.extract_strided_slice %160 {offsets = [24, 0], sizes = [24, 24], strides = [1, 1]} : vector<192x24xf32> to vector<24x24xf32>
    %173 = arith.truncf %172 : vector<24x24xf32> to vector<24x24xbf16>
    %174 = vector.extract_strided_slice %101 {offsets = [0, 144], sizes = [24, 16], strides = [1, 1]} : vector<48x192xf32> to vector<24x16xf32>
    %175 = arith.truncf %174 : vector<24x16xf32> to vector<24x16xbf16>
    %cst_46 = arith.constant dense<0.000000e+00> : vector<24x16xf32>
    %176 = tpu.matmul %173, %175, %cst_46 {dimension_numbers = #tpu.dot_dimension_numbers<[1], [0], [0], [1], [0, 0, 1, 1], [], []>} : vector<24x24xbf16>, vector<24x16xbf16>, vector<24x16xf32> -> vector<24x16xf32>
    %177 = arith.truncf %176 : vector<24x16xf32> to vector<24x16xbf16>
    %178 = vector.extract_strided_slice %161 {offsets = [16, 0], sizes = [16, 128], strides = [1, 1]} : vector<64x128xbf16> to vector<16x128xbf16>
    %cst_47 = arith.constant dense<0.000000e+00> : vector<24x128xf32>
    %179 = tpu.matmul %177, %178, %cst_47 {dimension_numbers = #tpu.dot_dimension_numbers<[1], [0], [0], [1], [0, 0, 1, 1], [], []>} : vector<24x16xbf16>, vector<16x128xbf16>, vector<24x128xf32> -> vector<24x128xf32>
    %180 = arith.addf %171, %179 : vector<24x128xf32>
    %181 = vector.extract_strided_slice %160 {offsets = [48, 0], sizes = [24, 24], strides = [1, 1]} : vector<192x24xf32> to vector<24x24xf32>
    %182 = arith.truncf %181 : vector<24x24xf32> to vector<24x24xbf16>
    %183 = vector.extract_strided_slice %101 {offsets = [0, 160], sizes = [24, 16], strides = [1, 1]} : vector<48x192xf32> to vector<24x16xf32>
    %184 = arith.truncf %183 : vector<24x16xf32> to vector<24x16xbf16>
    %cst_48 = arith.constant dense<0.000000e+00> : vector<24x16xf32>
    %185 = tpu.matmul %182, %184, %cst_48 {dimension_numbers = #tpu.dot_dimension_numbers<[1], [0], [0], [1], [0, 0, 1, 1], [], []>} : vector<24x24xbf16>, vector<24x16xbf16>, vector<24x16xf32> -> vector<24x16xf32>
    %186 = arith.truncf %185 : vector<24x16xf32> to vector<24x16xbf16>
    %187 = vector.extract_strided_slice %161 {offsets = [32, 0], sizes = [16, 128], strides = [1, 1]} : vector<64x128xbf16> to vector<16x128xbf16>
    %cst_49 = arith.constant dense<0.000000e+00> : vector<24x128xf32>
    %188 = tpu.matmul %186, %187, %cst_49 {dimension_numbers = #tpu.dot_dimension_numbers<[1], [0], [0], [1], [0, 0, 1, 1], [], []>} : vector<24x16xbf16>, vector<16x128xbf16>, vector<24x128xf32> -> vector<24x128xf32>
    %189 = arith.addf %180, %188 : vector<24x128xf32>
    %190 = vector.extract_strided_slice %160 {offsets = [72, 0], sizes = [24, 24], strides = [1, 1]} : vector<192x24xf32> to vector<24x24xf32>
    %191 = arith.truncf %190 : vector<24x24xf32> to vector<24x24xbf16>
    %192 = vector.extract_strided_slice %101 {offsets = [0, 176], sizes = [24, 16], strides = [1, 1]} : vector<48x192xf32> to vector<24x16xf32>
    %193 = arith.truncf %192 : vector<24x16xf32> to vector<24x16xbf16>
    %cst_50 = arith.constant dense<0.000000e+00> : vector<24x16xf32>
    %194 = tpu.matmul %191, %193, %cst_50 {dimension_numbers = #tpu.dot_dimension_numbers<[1], [0], [0], [1], [0, 0, 1, 1], [], []>} : vector<24x24xbf16>, vector<24x16xbf16>, vector<24x16xf32> -> vector<24x16xf32>
    %195 = arith.truncf %194 : vector<24x16xf32> to vector<24x16xbf16>
    %196 = vector.extract_strided_slice %161 {offsets = [48, 0], sizes = [16, 128], strides = [1, 1]} : vector<64x128xbf16> to vector<16x128xbf16>
    %cst_51 = arith.constant dense<0.000000e+00> : vector<24x128xf32>
    %197 = tpu.matmul %195, %196, %cst_51 {dimension_numbers = #tpu.dot_dimension_numbers<[1], [0], [0], [1], [0, 0, 1, 1], [], []>} : vector<24x16xbf16>, vector<16x128xbf16>, vector<24x128xf32> -> vector<24x128xf32>
    %198 = arith.addf %189, %197 : vector<24x128xf32>
    %cst_52 = arith.constant 0.000000e+00 : f32
    %199 = vector.broadcast %cst_52 : f32 to vector<24x128xf32>
    %200 = vector.extract_strided_slice %160 {offsets = [96, 0], sizes = [24, 24], strides = [1, 1]} : vector<192x24xf32> to vector<24x24xf32>
    %201 = arith.truncf %200 : vector<24x24xf32> to vector<24x24xbf16>
    %202 = vector.extract_strided_slice %101 {offsets = [24, 128], sizes = [24, 16], strides = [1, 1]} : vector<48x192xf32> to vector<24x16xf32>
    %203 = arith.truncf %202 : vector<24x16xf32> to vector<24x16xbf16>
    %cst_53 = arith.constant dense<0.000000e+00> : vector<24x16xf32>
    %204 = tpu.matmul %201, %203, %cst_53 {dimension_numbers = #tpu.dot_dimension_numbers<[1], [0], [0], [1], [0, 0, 1, 1], [], []>} : vector<24x24xbf16>, vector<24x16xbf16>, vector<24x16xf32> -> vector<24x16xf32>
    %205 = arith.truncf %204 : vector<24x16xf32> to vector<24x16xbf16>
    %206 = vector.extract_strided_slice %161 {offsets = [0, 0], sizes = [16, 128], strides = [1, 1]} : vector<64x128xbf16> to vector<16x128xbf16>
    %cst_54 = arith.constant dense<0.000000e+00> : vector<24x128xf32>
    %207 = tpu.matmul %205, %206, %cst_54 {dimension_numbers = #tpu.dot_dimension_numbers<[1], [0], [0], [1], [0, 0, 1, 1], [], []>} : vector<24x16xbf16>, vector<16x128xbf16>, vector<24x128xf32> -> vector<24x128xf32>
    %208 = arith.addf %199, %207 : vector<24x128xf32>
    %209 = vector.extract_strided_slice %160 {offsets = [120, 0], sizes = [24, 24], strides = [1, 1]} : vector<192x24xf32> to vector<24x24xf32>
    %210 = arith.truncf %209 : vector<24x24xf32> to vector<24x24xbf16>
    %211 = vector.extract_strided_slice %101 {offsets = [24, 144], sizes = [24, 16], strides = [1, 1]} : vector<48x192xf32> to vector<24x16xf32>
    %212 = arith.truncf %211 : vector<24x16xf32> to vector<24x16xbf16>
    %cst_55 = arith.constant dense<0.000000e+00> : vector<24x16xf32>
    %213 = tpu.matmul %210, %212, %cst_55 {dimension_numbers = #tpu.dot_dimension_numbers<[1], [0], [0], [1], [0, 0, 1, 1], [], []>} : vector<24x24xbf16>, vector<24x16xbf16>, vector<24x16xf32> -> vector<24x16xf32>
    %214 = arith.truncf %213 : vector<24x16xf32> to vector<24x16xbf16>
    %215 = vector.extract_strided_slice %161 {offsets = [16, 0], sizes = [16, 128], strides = [1, 1]} : vector<64x128xbf16> to vector<16x128xbf16>
    %cst_56 = arith.constant dense<0.000000e+00> : vector<24x128xf32>
    %216 = tpu.matmul %214, %215, %cst_56 {dimension_numbers = #tpu.dot_dimension_numbers<[1], [0], [0], [1], [0, 0, 1, 1], [], []>} : vector<24x16xbf16>, vector<16x128xbf16>, vector<24x128xf32> -> vector<24x128xf32>
    %217 = arith.addf %208, %216 : vector<24x128xf32>
    %218 = vector.extract_strided_slice %160 {offsets = [144, 0], sizes = [24, 24], strides = [1, 1]} : vector<192x24xf32> to vector<24x24xf32>
    %219 = arith.truncf %218 : vector<24x24xf32> to vector<24x24xbf16>
    %220 = vector.extract_strided_slice %101 {offsets = [24, 160], sizes = [24, 16], strides = [1, 1]} : vector<48x192xf32> to vector<24x16xf32>
    %221 = arith.truncf %220 : vector<24x16xf32> to vector<24x16xbf16>
    %cst_57 = arith.constant dense<0.000000e+00> : vector<24x16xf32>
    %222 = tpu.matmul %219, %221, %cst_57 {dimension_numbers = #tpu.dot_dimension_numbers<[1], [0], [0], [1], [0, 0, 1, 1], [], []>} : vector<24x24xbf16>, vector<24x16xbf16>, vector<24x16xf32> -> vector<24x16xf32>
    %223 = arith.truncf %222 : vector<24x16xf32> to vector<24x16xbf16>
    %224 = vector.extract_strided_slice %161 {offsets = [32, 0], sizes = [16, 128], strides = [1, 1]} : vector<64x128xbf16> to vector<16x128xbf16>
    %cst_58 = arith.constant dense<0.000000e+00> : vector<24x128xf32>
    %225 = tpu.matmul %223, %224, %cst_58 {dimension_numbers = #tpu.dot_dimension_numbers<[1], [0], [0], [1], [0, 0, 1, 1], [], []>} : vector<24x16xbf16>, vector<16x128xbf16>, vector<24x128xf32> -> vector<24x128xf32>
    %226 = arith.addf %217, %225 : vector<24x128xf32>
    %227 = vector.extract_strided_slice %160 {offsets = [168, 0], sizes = [24, 24], strides = [1, 1]} : vector<192x24xf32> to vector<24x24xf32>
    %228 = arith.truncf %227 : vector<24x24xf32> to vector<24x24xbf16>
    %229 = vector.extract_strided_slice %101 {offsets = [24, 176], sizes = [24, 16], strides = [1, 1]} : vector<48x192xf32> to vector<24x16xf32>
    %230 = arith.truncf %229 : vector<24x16xf32> to vector<24x16xbf16>
    %cst_59 = arith.constant dense<0.000000e+00> : vector<24x16xf32>
    %231 = tpu.matmul %228, %230, %cst_59 {dimension_numbers = #tpu.dot_dimension_numbers<[1], [0], [0], [1], [0, 0, 1, 1], [], []>} : vector<24x24xbf16>, vector<24x16xbf16>, vector<24x16xf32> -> vector<24x16xf32>
    %232 = arith.truncf %231 : vector<24x16xf32> to vector<24x16xbf16>
    %233 = vector.extract_strided_slice %161 {offsets = [48, 0], sizes = [16, 128], strides = [1, 1]} : vector<64x128xbf16> to vector<16x128xbf16>
    %cst_60 = arith.constant dense<0.000000e+00> : vector<24x128xf32>
    %234 = tpu.matmul %232, %233, %cst_60 {dimension_numbers = #tpu.dot_dimension_numbers<[1], [0], [0], [1], [0, 0, 1, 1], [], []>} : vector<24x16xbf16>, vector<16x128xbf16>, vector<24x128xf32> -> vector<24x128xf32>
    %235 = arith.addf %226, %234 : vector<24x128xf32>
    %236 = tpu.concatenate %198, %235 in 0 : vector<24x128xf32>, vector<24x128xf32> -> vector<48x128xf32>
    %237 = vector.shape_cast %236 : vector<48x128xf32> to vector<2x24x128xf32>
    %c0_61 = arith.constant 0 : index
    %c0_62 = arith.constant 0 : index
    %238 = vector.load %arg9[%c0_61, %c0_62] : memref<1x128xf32, #tpu.memory_space<vmem>>, vector<1x128xf32>
    %239 = vector.shape_cast %238 : vector<1x128xf32> to vector<1x1x128xf32>
    %240 = vector.broadcast %239 : vector<1x1x128xf32> to vector<2x24x128xf32>
    %241 = arith.addf %237, %240 : vector<2x24x128xf32>
    %242 = vector.extract_strided_slice %241 {offsets = [0, 0, 0], sizes = [2, 16, 64], strides = [1, 1, 1]} : vector<2x24x128xf32> to vector<2x16x64xf32>
    %243 = vector.extract_strided_slice %241 {offsets = [0, 16, 64], sizes = [2, 8, 64], strides = [1, 1, 1]} : vector<2x24x128xf32> to vector<2x8x64xf32>
    %244 = vector.broadcast %20 : vector<2x1x64xf32> to vector<2x16x64xf32>
    %245 = arith.mulf %244, %242 : vector<2x16x64xf32>
    %246 = arith.addf %0, %245 : vector<2x16x64xf32>
    %247 = vector.broadcast %32 : vector<2x1x64xf32> to vector<2x8x64xf32>
    %248 = arith.mulf %247, %243 : vector<2x8x64xf32>
    %249 = arith.addf %1, %248 : vector<2x8x64xf32>
    %cst_63 = arith.constant dense<0.000000e+00> : vector<2x16xf32>
    %250 = vector.multi_reduction <add>, %246, %cst_63 [2] : vector<2x16x64xf32> to vector<2x16xf32>
    %251 = vector.shape_cast %250 : vector<2x16xf32> to vector<2x16x1xf32>
    %cst_64 = arith.constant 6.400000e+01 : f32
    %252 = vector.broadcast %cst_64 : f32 to vector<2x16x1xf32>
    %253 = arith.divf %251, %252 : vector<2x16x1xf32>
    %254 = vector.broadcast %253 : vector<2x16x1xf32> to vector<2x16x64xf32>
    %255 = arith.subf %246, %254 : vector<2x16x64xf32>
    %256 = arith.mulf %255, %255 : vector<2x16x64xf32>
    %cst_65 = arith.constant dense<0.000000e+00> : vector<2x16xf32>
    %257 = vector.multi_reduction <add>, %256, %cst_65 [2] : vector<2x16x64xf32> to vector<2x16xf32>
    %258 = vector.shape_cast %257 : vector<2x16xf32> to vector<2x16x1xf32>
    %cst_66 = arith.constant 6.400000e+01 : f32
    %259 = vector.broadcast %cst_66 : f32 to vector<2x16x1xf32>
    %260 = arith.divf %258, %259 : vector<2x16x1xf32>
    %261 = vector.broadcast %253 : vector<2x16x1xf32> to vector<2x16x64xf32>
    %262 = arith.subf %246, %261 : vector<2x16x64xf32>
    %cst_67 = arith.constant 9.99999997E-7 : f32
    %263 = vector.broadcast %cst_67 : f32 to vector<2x16x1xf32>
    %264 = arith.addf %260, %263 : vector<2x16x1xf32>
    %265 = math.rsqrt %264 : vector<2x16x1xf32>
    %266 = vector.broadcast %265 : vector<2x16x1xf32> to vector<2x16x64xf32>
    %267 = arith.mulf %262, %266 : vector<2x16x64xf32>
    %cst_68 = arith.constant 1.000000e+00 : f32
    %268 = vector.broadcast %cst_68 : f32 to vector<2x1x64xf32>
    %269 = arith.addf %268, %24 : vector<2x1x64xf32>
    %270 = vector.broadcast %269 : vector<2x1x64xf32> to vector<2x16x64xf32>
    %271 = arith.mulf %267, %270 : vector<2x16x64xf32>
    %272 = vector.broadcast %22 : vector<2x1x64xf32> to vector<2x16x64xf32>
    %273 = arith.addf %271, %272 : vector<2x16x64xf32>
    %cst_69 = arith.constant dense<0.000000e+00> : vector<2x8xf32>
    %274 = vector.multi_reduction <add>, %249, %cst_69 [2] : vector<2x8x64xf32> to vector<2x8xf32>
    %275 = vector.shape_cast %274 : vector<2x8xf32> to vector<2x8x1xf32>
    %cst_70 = arith.constant 6.400000e+01 : f32
    %276 = vector.broadcast %cst_70 : f32 to vector<2x8x1xf32>
    %277 = arith.divf %275, %276 : vector<2x8x1xf32>
    %278 = vector.broadcast %277 : vector<2x8x1xf32> to vector<2x8x64xf32>
    %279 = arith.subf %249, %278 : vector<2x8x64xf32>
    %280 = arith.mulf %279, %279 : vector<2x8x64xf32>
    %cst_71 = arith.constant dense<0.000000e+00> : vector<2x8xf32>
    %281 = vector.multi_reduction <add>, %280, %cst_71 [2] : vector<2x8x64xf32> to vector<2x8xf32>
    %282 = vector.shape_cast %281 : vector<2x8xf32> to vector<2x8x1xf32>
    %cst_72 = arith.constant 6.400000e+01 : f32
    %283 = vector.broadcast %cst_72 : f32 to vector<2x8x1xf32>
    %284 = arith.divf %282, %283 : vector<2x8x1xf32>
    %285 = vector.broadcast %277 : vector<2x8x1xf32> to vector<2x8x64xf32>
    %286 = arith.subf %249, %285 : vector<2x8x64xf32>
    %cst_73 = arith.constant 9.99999997E-7 : f32
    %287 = vector.broadcast %cst_73 : f32 to vector<2x8x1xf32>
    %288 = arith.addf %284, %287 : vector<2x8x1xf32>
    %289 = math.rsqrt %288 : vector<2x8x1xf32>
    %290 = vector.broadcast %289 : vector<2x8x1xf32> to vector<2x8x64xf32>
    %291 = arith.mulf %286, %290 : vector<2x8x64xf32>
    %cst_74 = arith.constant 1.000000e+00 : f32
    %292 = vector.broadcast %cst_74 : f32 to vector<2x1x64xf32>
    %293 = arith.addf %292, %36 : vector<2x1x64xf32>
    %294 = vector.broadcast %293 : vector<2x1x64xf32> to vector<2x8x64xf32>
    %295 = arith.mulf %291, %294 : vector<2x8x64xf32>
    %296 = vector.broadcast %34 : vector<2x1x64xf32> to vector<2x8x64xf32>
    %297 = arith.addf %295, %296 : vector<2x8x64xf32>
    %298 = tpu.concatenate %273, %87 in 2 : vector<2x16x64xf32>, vector<2x16x64xf32> -> vector<2x16x128xf32>
    %299 = tpu.concatenate %88, %297 in 2 : vector<2x8x64xf32>, vector<2x8x64xf32> -> vector<2x8x128xf32>
    %300 = tpu.concatenate %298, %299 in 1 : vector<2x16x128xf32>, vector<2x8x128xf32> -> vector<2x24x128xf32>
    %301 = vector.shape_cast %300 : vector<2x24x128xf32> to vector<48x128xf32>
    %302 = arith.truncf %301 : vector<48x128xf32> to vector<48x128xbf16>
    %c0_75 = arith.constant 0 : index
    %c0_76 = arith.constant 0 : index
    %303 = vector.load %arg10[%c0_75, %c0_76] : memref<128x256xbf16, #tpu.memory_space<vmem>>, vector<128x256xbf16>
    %cst_77 = arith.constant dense<0.000000e+00> : vector<48x256xf32>
    %304 = tpu.matmul %302, %303, %cst_77 {dimension_numbers = #tpu.dot_dimension_numbers<[1], [0], [0], [1], [0, 0, 1, 1], [], []>} : vector<48x128xbf16>, vector<128x256xbf16>, vector<48x256xf32> -> vector<48x256xf32>
    %305 = vector.shape_cast %304 : vector<48x256xf32> to vector<2x24x256xf32>
    %c0_78 = arith.constant 0 : index
    %c0_79 = arith.constant 0 : index
    %306 = vector.load %arg11[%c0_78, %c0_79] : memref<24x256xf32, #tpu.memory_space<vmem>>, vector<24x256xf32>
    %307 = vector.shape_cast %306 : vector<24x256xf32> to vector<1x24x256xf32>
    %308 = vector.broadcast %307 : vector<1x24x256xf32> to vector<2x24x256xf32>
    %309 = arith.addf %305, %308 : vector<2x24x256xf32>
    %310 = arith.mulf %309, %309 : vector<2x24x256xf32>
    %311 = arith.mulf %309, %310 : vector<2x24x256xf32>
    %cst_80 = arith.constant 4.471500e-02 : f32
    %312 = vector.broadcast %cst_80 : f32 to vector<2x24x256xf32>
    %313 = arith.mulf %312, %311 : vector<2x24x256xf32>
    %314 = arith.addf %309, %313 : vector<2x24x256xf32>
    %cst_81 = arith.constant 0.797884583 : f32
    %315 = vector.broadcast %cst_81 : f32 to vector<2x24x256xf32>
    %316 = arith.mulf %315, %314 : vector<2x24x256xf32>
    %317 = math.tanh %316 : vector<2x24x256xf32>
    %cst_82 = arith.constant 1.000000e+00 : f32
    %318 = vector.broadcast %cst_82 : f32 to vector<2x24x256xf32>
    %319 = arith.addf %318, %317 : vector<2x24x256xf32>
    %cst_83 = arith.constant 5.000000e-01 : f32
    %320 = vector.broadcast %cst_83 : f32 to vector<2x24x256xf32>
    %321 = arith.mulf %320, %319 : vector<2x24x256xf32>
    %322 = arith.mulf %309, %321 : vector<2x24x256xf32>
    %323 = vector.shape_cast %322 : vector<2x24x256xf32> to vector<48x256xf32>
    %324 = arith.truncf %323 : vector<48x256xf32> to vector<48x256xbf16>
    %c0_84 = arith.constant 0 : index
    %c0_85 = arith.constant 0 : index
    %325 = vector.load %arg12[%c0_84, %c0_85] : memref<256x128xbf16, #tpu.memory_space<vmem>>, vector<256x128xbf16>
    %cst_86 = arith.constant dense<0.000000e+00> : vector<48x128xf32>
    %326 = tpu.matmul %324, %325, %cst_86 {dimension_numbers = #tpu.dot_dimension_numbers<[1], [0], [0], [1], [0, 0, 1, 1], [], []>} : vector<48x256xbf16>, vector<256x128xbf16>, vector<48x128xf32> -> vector<48x128xf32>
    %327 = vector.shape_cast %326 : vector<48x128xf32> to vector<2x24x128xf32>
    %c0_87 = arith.constant 0 : index
    %c0_88 = arith.constant 0 : index
    %328 = vector.load %arg13[%c0_87, %c0_88] : memref<1x128xf32, #tpu.memory_space<vmem>>, vector<1x128xf32>
    %329 = vector.shape_cast %328 : vector<1x128xf32> to vector<1x1x128xf32>
    %330 = vector.broadcast %329 : vector<1x1x128xf32> to vector<2x24x128xf32>
    %331 = arith.addf %327, %330 : vector<2x24x128xf32>
    %332 = vector.extract_strided_slice %331 {offsets = [0, 0, 0], sizes = [2, 16, 64], strides = [1, 1, 1]} : vector<2x24x128xf32> to vector<2x16x64xf32>
    %333 = vector.broadcast %26 : vector<2x1x64xf32> to vector<2x16x64xf32>
    %334 = arith.mulf %333, %332 : vector<2x16x64xf32>
    %335 = arith.addf %246, %334 : vector<2x16x64xf32>
    %c0_89 = arith.constant 0 : index
    %c0_90 = arith.constant 0 : index
    %c0_91 = arith.constant 0 : index
    %336 = vector.load %arg14[%c0_89, %c0_90, %c0_91] : memref<2x16x64xf32, #tpu.memory_space<vmem>>, vector<2x16x64xf32>
    tpu.vector_store %arg14[%c0_89, %c0_90, %c0_91], %335 {strides = array<i32>} : memref<2x16x64xf32, #tpu.memory_space<vmem>>, vector<2x16x64xf32>,
    %337 = vector.extract_strided_slice %331 {offsets = [0, 16, 64], sizes = [2, 8, 64], strides = [1, 1, 1]} : vector<2x24x128xf32> to vector<2x8x64xf32>
    %338 = vector.broadcast %38 : vector<2x1x64xf32> to vector<2x8x64xf32>
    %339 = arith.mulf %338, %337 : vector<2x8x64xf32>
    %340 = arith.addf %249, %339 : vector<2x8x64xf32>
    %c0_92 = arith.constant 0 : index
    %c0_93 = arith.constant 0 : index
    %c0_94 = arith.constant 0 : index
    %341 = vector.load %arg15[%c0_92, %c0_93, %c0_94] : memref<2x8x64xf32, #tpu.memory_space<vmem>>, vector<2x8x64xf32>
    tpu.vector_store %arg15[%c0_92, %c0_93, %c0_94], %340 {strides = array<i32>} : memref<2x8x64xf32, #tpu.memory_space<vmem>>, vector<2x8x64xf32>,
    return
  }
  func.func @transform_0(%arg0: i32) -> (i32, i32, i32) {
    %c0_i32 = arith.constant 0 : i32
    %c0_i32_0 = arith.constant 0 : i32
    %c0_i32_1 = arith.constant 0 : i32
    %c0_i32_2 = arith.constant 0 : i32
    return %c0_i32, %c0_i32_0, %c0_i32_1 : i32, i32, i32
  }
  func.func @transform_1(%arg0: i32) -> (i32, i32, i32) {
    %c0_i32 = arith.constant 0 : i32
    %c0_i32_0 = arith.constant 0 : i32
    %c0_i32_1 = arith.constant 0 : i32
    %c0_i32_2 = arith.constant 0 : i32
    return %c0_i32, %c0_i32_0, %c0_i32_1 : i32, i32, i32
  }
  func.func @transform_2(%arg0: i32) -> (i32, i32) {
    %c0_i32 = arith.constant 0 : i32
    %c0_i32_0 = arith.constant 0 : i32
    %c0_i32_1 = arith.constant 0 : i32
    return %c0_i32, %c0_i32_0 : i32, i32
  }
  func.func @transform_3(%arg0: i32) -> (i32, i32) {
    %c0_i32 = arith.constant 0 : i32
    %c0_i32_0 = arith.constant 0 : i32
    %c0_i32_1 = arith.constant 0 : i32
    return %c0_i32, %c0_i32_0 : i32, i32
  }
  func.func @transform_4(%arg0: i32) -> (i32, i32) {
    %c0_i32 = arith.constant 0 : i32
    %c0_i32_0 = arith.constant 0 : i32
    %c0_i32_1 = arith.constant 0 : i32
    return %c0_i32, %c0_i32_0 : i32, i32
  }
  func.func @transform_5(%arg0: i32) -> (i32, i32) {
    %c0_i32 = arith.constant 0 : i32
    %c0_i32_0 = arith.constant 0 : i32
    %c0_i32_1 = arith.constant 0 : i32
    return %c0_i32, %c0_i32_0 : i32, i32
  }
  func.func @transform_6(%arg0: i32) -> (i32, i32) {
    %c0_i32 = arith.constant 0 : i32
    %c0_i32_0 = arith.constant 0 : i32
    %c0_i32_1 = arith.constant 0 : i32
    return %c0_i32, %c0_i32_0 : i32, i32
  }
  func.func @transform_7(%arg0: i32) -> (i32, i32) {
    %c0_i32 = arith.constant 0 : i32
    %c0_i32_0 = arith.constant 0 : i32
    %c0_i32_1 = arith.constant 0 : i32
    return %c0_i32, %c0_i32_0 : i32, i32
  }
  func.func @transform_8(%arg0: i32) -> (i32, i32) {
    %c0_i32 = arith.constant 0 : i32
    %c0_i32_0 = arith.constant 0 : i32
    %c0_i32_1 = arith.constant 0 : i32
    return %c0_i32, %c0_i32_0 : i32, i32
  }
  func.func @transform_9(%arg0: i32) -> (i32, i32) {
    %c0_i32 = arith.constant 0 : i32
    %c0_i32_0 = arith.constant 0 : i32
    %c0_i32_1 = arith.constant 0 : i32
    return %c0_i32, %c0_i32_0 : i32, i32
  }
  func.func @transform_10(%arg0: i32) -> (i32, i32) {
    %c0_i32 = arith.constant 0 : i32
    %c0_i32_0 = arith.constant 0 : i32
    %c0_i32_1 = arith.constant 0 : i32
    return %c0_i32, %c0_i32_0 : i32, i32
  }
  func.func @transform_11(%arg0: i32) -> (i32, i32) {
    %c0_i32 = arith.constant 0 : i32
    %c0_i32_0 = arith.constant 0 : i32
    %c0_i32_1 = arith.constant 0 : i32
    return %c0_i32, %c0_i32_0 : i32, i32
  }
  func.func @transform_12(%arg0: i32) -> (i32, i32) {
    %c0_i32 = arith.constant 0 : i32
    %c0_i32_0 = arith.constant 0 : i32
    %c0_i32_1 = arith.constant 0 : i32
    return %c0_i32, %c0_i32_0 : i32, i32
  }
  func.func @transform_13(%arg0: i32) -> (i32, i32, i32) {
    %c0_i32 = arith.constant 0 : i32
    %c0_i32_0 = arith.constant 0 : i32
    %c0_i32_1 = arith.constant 0 : i32
    %c0_i32_2 = arith.constant 0 : i32
    return %c0_i32, %c0_i32_0, %c0_i32_1 : i32, i32, i32
  }
  func.func @transform_14(%arg0: i32) -> (i32, i32, i32) {
    %c0_i32 = arith.constant 0 : i32
    %c0_i32_0 = arith.constant 0 : i32
    %c0_i32_1 = arith.constant 0 : i32
    %c0_i32_2 = arith.constant 0 : i32
    return %c0_i32, %c0_i32_0, %c0_i32_1 : i32, i32, i32
  }
}

</mosaic_0001>

<llo_original>
// kernel: joint_transformer_block.1
$region0: #{joint_transformer_block.1}
  #allocation0 [shape = 'u32[]', space=smem, size = 0x4, offset = 0x4, fixed_abs, tag = 'smem constant byte address 0x4 - core index']
  #allocation1 [shape = 'u32[72,128]{1,0:T(1,128)}', space=vmem, size = 0x9000, scoped, tag = 'internal scratch']
  %s0 = inlined_call_operand.vmem [shape: f32[2,16,64], index: 0, kind: input, shape index: {}]
  %s1 = inlined_call_operand.vmem [shape: f32[2,8,64], index: 1, kind: input, shape index: {}]
  %s2 = inlined_call_operand.vmem [shape: f32[2,64], index: 2, kind: input, shape index: {}]
  %s3 = inlined_call_operand.vmem [shape: bf16[64,768], index: 3, kind: input, shape index: {}]
  %s4 = inlined_call_operand.vmem [shape: f32[1,768], index: 4, kind: input, shape index: {}]
  %s5 = inlined_call_operand.vmem [shape: bf16[128,192], index: 5, kind: input, shape index: {}]
  %s6 = inlined_call_operand.vmem [shape: f32[24,192], index: 6, kind: input, shape index: {}]
  %s7 = inlined_call_operand.vmem [shape: bf16[64,128], index: 7, kind: input, shape index: {}]
  %s8 = inlined_call_operand.vmem [shape: f32[1,128], index: 8, kind: input, shape index: {}]
  %s9 = inlined_call_operand.vmem [shape: bf16[128,256], index: 9, kind: input, shape index: {}]
  %s10 = inlined_call_operand.vmem [shape: f32[24,256], index: 10, kind: input, shape index: {}]
  %s11 = inlined_call_operand.vmem [shape: bf16[256,128], index: 11, kind: input, shape index: {}]
  %s12 = inlined_call_operand.vmem [shape: f32[1,128], index: 12, kind: input, shape index: {}]
  %s13 = inlined_call_operand.hbm [shape: f32[2,16,64], index: 13, kind: output, shape index: {0}]
  %s14 = inlined_call_operand.hbm [shape: f32[2,8,64], index: 14, kind: output, shape index: {1}]
  %15 = xla_tuple %s13, %s14
  %s16 = sld [smem:[#allocation0]]
  $region70: #{joint_transformer_block.1} parent=0
    _
  %s18 = ssub.s32 1, %s16
  %s19 = scalar_select 0, %s18, %s16
  $region1: #{joint_transformer_block.1} parent=0
    #allocation2 [shape = 'u8[16384]{0}', space=vmem, size = 0x4000, scoped, tag = 'output window, operand 0, single buffered']
    #allocation3 [shape = 's32[1]{0}', space=sflag, size = 0x4, scoped, tag = 'scoped memory for joint_transformer_block.1']
    #allocation4 [shape = 'u8[8192]{0}', space=vmem, size = 0x2000, scoped, tag = 'output window, operand 1, single buffered']
    #allocation5 [shape = 's32[1]{0}', space=sflag, size = 0x4, scoped, tag = 'scoped memory for joint_transformer_block.1']
    %20 = vsyncpa [#allocation3], 0
    %21 = vsyncpa [#allocation5], 0
    // Predicated region
    $region2: #{joint_transformer_block.1} parent=1 // pred_check
      _
    $region3: #{joint_transformer_block.1} parent=1 // pred_check_branch
      %23 = sbr.rel (0) target = $region5
    $region4: #{joint_transformer_block.1} parent=1 // pred_region
      _
    $region5: #{joint_transformer_block.1} parent=1 // pred_fallthru
      _
    // Predicated region
    $region6: #{joint_transformer_block.1} parent=1 // pred_check
      _
    $region7: #{joint_transformer_block.1} parent=1 // pred_check_branch
      %25 = sbr.rel (0) target = $region9
    $region8: #{joint_transformer_block.1} parent=1 // pred_region
      _
    $region9: #{joint_transformer_block.1} parent=1 // pred_fallthru
      _
    // Predicated region
    $region10: #{joint_transformer_block.1} parent=1 // pred_check
      _
    $region11: #{joint_transformer_block.1} parent=1 // pred_check_branch
      %27 = sbr.rel (0) target = $region13
    $region12: #{joint_transformer_block.1} parent=1 // pred_region
      _
    $region13: #{joint_transformer_block.1} parent=1 // pred_fallthru
      _
    // Predicated region
    $region14: #{joint_transformer_block.1} parent=1 // pred_check
      _
    $region15: #{joint_transformer_block.1} parent=1 // pred_check_branch
      %29 = sbr.rel (0) target = $region17
    $region16: #{joint_transformer_block.1} parent=1 // pred_region
      _
    $region17: #{joint_transformer_block.1} parent=1 // pred_fallthru
      _
    // Predicated region
    $region18: #{joint_transformer_block.1} parent=1 // pred_check
      _
    $region19: #{joint_transformer_block.1} parent=1 // pred_check_branch
      %31 = sbr.rel (0) target = $region21
    $region20: #{joint_transformer_block.1} parent=1 // pred_region
      _
    $region21: #{joint_transformer_block.1} parent=1 // pred_fallthru
      _
    // Predicated region
    $region22: #{joint_transformer_block.1} parent=1 // pred_check
      _
    $region23: #{joint_transformer_block.1} parent=1 // pred_check_branch
      %33 = sbr.rel (0) target = $region25
    $region24: #{joint_transformer_block.1} parent=1 // pred_region
      _
    $region25: #{joint_transformer_block.1} parent=1 // pred_fallthru
      _
    // Predicated region
    $region26: #{joint_transformer_block.1} parent=1 // pred_check
      _
    $region27: #{joint_transformer_block.1} parent=1 // pred_check_branch
      %35 = sbr.rel (0) target = $region29
    $region28: #{joint_transformer_block.1} parent=1 // pred_region
      _
    $region29: #{joint_transformer_block.1} parent=1 // pred_fallthru
      _
    // Predicated region
    $region30: #{joint_transformer_block.1} parent=1 // pred_check
      _
    $region31: #{joint_transformer_block.1} parent=1 // pred_check_branch
      %37 = sbr.rel (0) target = $region33
    $region32: #{joint_transformer_block.1} parent=1 // pred_region
      _
    $region33: #{joint_transformer_block.1} parent=1 // pred_fallthru
      _
    // Predicated region
    $region34: #{joint_transformer_block.1} parent=1 // pred_check
      _
    $region35: #{joint_transformer_block.1} parent=1 // pred_check_branch
      %39 = sbr.rel (0) target = $region37
    $region36: #{joint_transformer_block.1} parent=1 // pred_region
      _
    $region37: #{joint_transformer_block.1} parent=1 // pred_fallthru
      _
    // Predicated region
    $region38: #{joint_transformer_block.1} parent=1 // pred_check
      _
    $region39: #{joint_transformer_block.1} parent=1 // pred_check_branch
      %41 = sbr.rel (0) target = $region41
    $region40: #{joint_transformer_block.1} parent=1 // pred_region
      _
    $region41: #{joint_transformer_block.1} parent=1 // pred_fallthru
      _
    // Predicated region
    $region42: #{joint_transformer_block.1} parent=1 // pred_check
      _
    $region43: #{joint_transformer_block.1} parent=1 // pred_check_branch
      %43 = sbr.rel (0) target = $region45
    $region44: #{joint_transformer_block.1} parent=1 // pred_region
      _
    $region45: #{joint_transformer_block.1} parent=1 // pred_fallthru
      _
    // Predicated region
    $region46: #{joint_transformer_block.1} parent=1 // pred_check
      _
    $region47: #{joint_transformer_block.1} parent=1 // pred_check_branch
      %45 = sbr.rel (0) target = $region49
    $region48: #{joint_transformer_block.1} parent=1 // pred_region
      _
    $region49: #{joint_transformer_block.1} parent=1 // pred_fallthru
      _
    // Predicated region
    $region50: #{joint_transformer_block.1} parent=1 // pred_check
      _
    $region51: #{joint_transformer_block.1} parent=1 // pred_check_branch
      %47 = sbr.rel (0) target = $region53
    $region52: #{joint_transformer_block.1} parent=1 // pred_region
      _
    $region53: #{joint_transformer_block.1} parent=1 // pred_fallthru
      _
    %v49 = vld [vmem:[%s0] sm:$0xff]
    %v50 = vld [vmem:[%s0 + $0x8] sm:$0xff]
    %v51 = vld [vmem:[%s0 + $0x10] sm:$0xff]
    %v52 = vld [vmem:[%s0 + $0x18] sm:$0xff]
    %v53 = vld [vmem:[%s1] sm:$0xff]
    %v54 = vld [vmem:[%s1 + $0x8] sm:$0xff]
    %v55 = vld [vmem:[%s2] sm:$0x3]
    %v56 = vxor.u32 %v55, 2147483648
    %v57 = vmul.f32 %v56, 1.442695
    %v58 = vpow.pop %v57
    %v59 = vadd.f32 %v58, 1.0
    %v60 = vrcp.pop %v59
    %v61 = vmul.f32 %v59, %v60
    %v62 = vsub.f32 1.0, %v61
    %v63 = vmul.f32 %v60, %v62
    %v64 = vadd.f32 %v60, %v63
    %vm65 = vweird.f32 %v59
    %vm66 = vweird.f32 %v60
    %vm67 = vmor %vm65, %vm66
    %v68 = vsel %vm67, %v60, %v64
    %v69 = vand.u32 2147483647, %v59
    %vm70 = vcmp.eq.f32.partialorder %v69, 8.507059e+37
    %v71 = vand.u32 %v59, 2147483648
    %v72 = vor.u32 1.1754944e-38, %v71
    %v73 = vsel %vm70, %v72, %v68
    %v74 = vmul.f32 1.0, %v73
    %v75 = vmul.f32 %v55, %v74
    %v76 = vpack.c.bf16 %v75, %v75
    %v77 = vld [vmem:[%s3] sm:$0xff]
    %v78 = vld [vmem:[%s3 + $0x8] sm:$0xff]
    %v79 = vld [vmem:[%s3 + $0x10] sm:$0xff]
    %v80 = vld [vmem:[%s3 + $0x18] sm:$0xff]
    %v81 = vld [vmem:[%s3 + $0x20] sm:$0xff]
    %v82 = vld [vmem:[%s3 + $0x28] sm:$0xff]
    %v83 = vld [vmem:[%s3 + $0x30] sm:$0xff]
    %v84 = vld [vmem:[%s3 + $0x38] sm:$0xff]
    %v85 = vld [vmem:[%s3 + $0x40] sm:$0xff]
    %v86 = vld [vmem:[%s3 + $0x48] sm:$0xff]
    %v87 = vld [vmem:[%s3 + $0x50] sm:$0xff]
    %v88 = vld [vmem:[%s3 + $0x58] sm:$0xff]
    %v89 = vld [vmem:[%s3 + $0x60] sm:$0xff]
    %v90 = vld [vmem:[%s3 + $0x68] sm:$0xff]
    %v91 = vld [vmem:[%s3 + $0x70] sm:$0xff]
    %v92 = vld [vmem:[%s3 + $0x78] sm:$0xff]
    %v93 = vld [vmem:[%s3 + $0x80] sm:$0xff]
    %v94 = vld [vmem:[%s3 + $0x88] sm:$0xff]
    %v95 = vld [vmem:[%s3 + $0x90] sm:$0xff]
    %v96 = vld [vmem:[%s3 + $0x98] sm:$0xff]
    %v97 = vld [vmem:[%s3 + $0xa0] sm:$0xff]
    %v98 = vld [vmem:[%s3 + $0xa8] sm:$0xff]
    %v99 = vld [vmem:[%s3 + $0xb0] sm:$0xff]
    %v100 = vld [vmem:[%s3 + $0xb8] sm:$0xff]
    %v101 = vld [vmem:[%s4] sm:$0x3f]
    %v103 = vperm.slane %v101, 0
    %v104 = vperm.slane %v101, 1
    %v105 = vperm.slane %v101, 2
    %v106 = vperm.slane %v101, 3
    %v107 = vperm.slane %v101, 4
    %v108 = vperm.slane %v101, 5
    %v139 = vunpack.c.l.b16 %v77
    %v140 = vunpack.c.h.b16 %v77
    %v141 = vunpack.c.l.b16 %v78
    %v142 = vunpack.c.h.b16 %v78
    %v143 = vunpack.c.l.b16 %v79
    %v144 = vunpack.c.h.b16 %v79
    %v145 = vunpack.c.l.b16 %v80
    %v146 = vunpack.c.h.b16 %v80
    %v147 = vunpack.c.l.b16 %v81
    %v148 = vunpack.c.h.b16 %v81
    %v149 = vunpack.c.l.b16 %v82
    %v150 = vunpack.c.h.b16 %v82
    %v151 = vunpack.c.l.b16 %v83
    %v152 = vunpack.c.h.b16 %v83
    %v153 = vunpack.c.l.b16 %v84
    %v154 = vunpack.c.h.b16 %v84
    %v155 = vunpack.c.l.b16 %v85
    %v156 = vunpack.c.h.b16 %v85
    %v157 = vunpack.c.l.b16 %v86
    %v158 = vunpack.c.h.b16 %v86
    %v159 = vunpack.c.l.b16 %v87
    %v160 = vunpack.c.h.b16 %v87
    %v161 = vunpack.c.l.b16 %v88
    %v162 = vunpack.c.h.b16 %v88
    %v163 = vunpack.c.l.b16 %v89
    %v164 = vunpack.c.h.b16 %v89
    %v165 = vunpack.c.l.b16 %v90
    %v166 = vunpack.c.h.b16 %v90
    %v167 = vunpack.c.l.b16 %v91
    %v168 = vunpack.c.h.b16 %v91
    %v169 = vunpack.c.l.b16 %v92
    %v170 = vunpack.c.h.b16 %v92
    %v171 = vunpack.c.l.b16 %v93
    %v172 = vunpack.c.h.b16 %v93
    %v173 = vunpack.c.l.b16 %v94
    %v174 = vunpack.c.h.b16 %v94
    %v175 = vunpack.c.l.b16 %v95
    %v176 = vunpack.c.h.b16 %v95
    %v177 = vunpack.c.l.b16 %v96
    %v178 = vunpack.c.h.b16 %v96
    %v179 = vunpack.c.l.b16 %v97
    %v180 = vunpack.c.h.b16 %v97
    %v181 = vunpack.c.l.b16 %v98
    %v182 = vunpack.c.h.b16 %v98
    %v183 = vunpack.c.l.b16 %v99
    %v184 = vunpack.c.h.b16 %v99
    %v185 = vunpack.c.l.b16 %v100
    %v186 = vunpack.c.h.b16 %v100
    %v187 = vpack.c.b16 %v145, %v139
    %v188 = vpack.c.b16 %v146, %v140
    %v189 = vpack.c.b16 %v147, %v141
    %v190 = vpack.c.b16 %v148, %v142
    %v191 = vpack.c.b16 %v149, %v143
    %v192 = vpack.c.b16 %v150, %v144
    %v193 = vpack.c.b16 %v157, %v151
    %v194 = vpack.c.b16 %v158, %v152
    %v195 = vpack.c.b16 %v159, %v153
    %v196 = vpack.c.b16 %v160, %v154
    %v197 = vpack.c.b16 %v161, %v155
    %v198 = vpack.c.b16 %v162, %v156
    %v199 = vpack.c.b16 %v169, %v163
    %v200 = vpack.c.b16 %v170, %v164
    %v201 = vpack.c.b16 %v171, %v165
    %v202 = vpack.c.b16 %v172, %v166
    %v203 = vpack.c.b16 %v173, %v167
    %v204 = vpack.c.b16 %v174, %v168
    %v205 = vpack.c.b16 %v181, %v175
    %v206 = vpack.c.b16 %v182, %v176
    %v207 = vpack.c.b16 %v183, %v177
    %v208 = vpack.c.b16 %v184, %v178
    %v209 = vpack.c.b16 %v185, %v179
    %v210 = vpack.c.b16 %v186, %v180
    %vm235 = vcmask 523264
    %v237 = vsel %vm235, %v76, 0
    %239 = vmatpush.bf16.msra.mxu0 0
    %240 = vmatpush.bf16.msra.mxu0 0
    %241 = vmatpush.bf16.msra.mxu0 0
    %242 = vmatpush.bf16.msra.mxu0 0
    %243 = vmatpush.bf16.msra.mxu0 %v205
    %244 = vmatpush.bf16.msra.mxu0 %v199
    %245 = vmatpush.bf16.msra.mxu0 %v193
    %246 = vmatpush.bf16.msra.mxu0 %v187
    %247 = vmatmul.bf16.gmra.mxu0 %v237
    %v248 = vpop.f32.mrf.mxu0
    %v249 = vadd.f32 %v103, %v248
    %v250 = vpop.f32.mrf.mxu0
    %251 = vdwg.mxu0
    %252 = vmatpush.bf16.msra.mxu0 0
    %253 = vmatpush.bf16.msra.mxu0 0
    %254 = vmatpush.bf16.msra.mxu0 0
    %255 = vmatpush.bf16.msra.mxu0 0
    %256 = vmatpush.bf16.msra.mxu0 %v206
    %257 = vmatpush.bf16.msra.mxu0 %v200
    %258 = vmatpush.bf16.msra.mxu0 %v194
    %259 = vmatpush.bf16.msra.mxu0 %v188
    %260 = vmatmul.bf16.gmra.mxu0 %v237
    %v261 = vpop.f32.mrf.mxu0
    %v262 = vadd.f32 %v104, %v261
    %v263 = vpop.f32.mrf.mxu0
    %264 = vdwg.mxu0
    %265 = vmatpush.bf16.msra.mxu0 0
    %266 = vmatpush.bf16.msra.mxu0 0
    %267 = vmatpush.bf16.msra.mxu0 0
    %268 = vmatpush.bf16.msra.mxu0 0
    %269 = vmatpush.bf16.msra.mxu0 %v207
    %270 = vmatpush.bf16.msra.mxu0 %v201
    %271 = vmatpush.bf16.msra.mxu0 %v195
    %272 = vmatpush.bf16.msra.mxu0 %v189
    %273 = vmatmul.bf16.gmra.mxu0 %v237
    %v274 = vpop.f32.mrf.mxu0
    %v275 = vadd.f32 %v105, %v274
    %v276 = vpop.f32.mrf.mxu0
    %277 = vdwg.mxu0
    %278 = vmatpush.bf16.msra.mxu0 0
    %279 = vmatpush.bf16.msra.mxu0 0
    %280 = vmatpush.bf16.msra.mxu0 0
    %281 = vmatpush.bf16.msra.mxu0 0
    %282 = vmatpush.bf16.msra.mxu0 %v208
    %283 = vmatpush.bf16.msra.mxu0 %v202
    %284 = vmatpush.bf16.msra.mxu0 %v196
    %285 = vmatpush.bf16.msra.mxu0 %v190
    %286 = vmatmul.bf16.gmra.mxu0 %v237
    %v287 = vpop.f32.mrf.mxu0
    %v288 = vadd.f32 %v106, %v287
    %v289 = vpop.f32.mrf.mxu0
    %290 = vdwg.mxu0
    %291 = vmatpush.bf16.msra.mxu0 0
    %292 = vmatpush.bf16.msra.mxu0 0
    %293 = vmatpush.bf16.msra.mxu0 0
    %294 = vmatpush.bf16.msra.mxu0 0
    %295 = vmatpush.bf16.msra.mxu0 %v209
    %296 = vmatpush.bf16.msra.mxu0 %v203
    %297 = vmatpush.bf16.msra.mxu0 %v197
    %298 = vmatpush.bf16.msra.mxu0 %v191
    %299 = vmatmul.bf16.gmra.mxu0 %v237
    %v300 = vpop.f32.mrf.mxu0
    %v301 = vadd.f32 %v107, %v300
    %v302 = vpop.f32.mrf.mxu0
    %303 = vdwg.mxu0
    %304 = vmatpush.bf16.msra.mxu0 0
    %305 = vmatpush.bf16.msra.mxu0 0
    %306 = vmatpush.bf16.msra.mxu0 0
    %307 = vmatpush.bf16.msra.mxu0 0
    %308 = vmatpush.bf16.msra.mxu0 %v210
    %309 = vmatpush.bf16.msra.mxu0 %v204
    %310 = vmatpush.bf16.msra.mxu0 %v198
    %311 = vmatpush.bf16.msra.mxu0 %v192
    %312 = vmatmul.bf16.gmra.mxu0 %v237
    %v313 = vpop.f32.mrf.mxu0
    %v314 = vadd.f32 %v108, %v313
    %v315 = vpop.f32.mrf.mxu0
    %316 = vdwg.mxu0
    %v318 = vrot.slane %v249, 1
    %v321 = vrot.slane %v262, 1
    %v323 = vrot.slane %v275, 1
    %v326 = vrot.slane %v288, 1
    %v329 = vrot.slane %v301, 1
    %v331 = vrot.slane %v314, 1
    %v333 = vsel %vm235, %v49, 0.0
    %334 = vadd.xlane.f32.xlu0 %v333
    %v335 = vpop.xlane.xlu0 %334
    %v336 = vsel %vm235, %v50, 0.0
    %337 = vadd.xlane.f32.xlu0 %v336
    %v338 = vpop.xlane.xlu0 %337
    %v339 = vsel %vm235, %v51, 0.0
    %340 = vadd.xlane.f32.xlu0 %v339
    %v341 = vpop.xlane.xlu0 %340
    %v342 = vsel %vm235, %v52, 0.0
    %343 = vadd.xlane.f32.xlu0 %v342
    %v344 = vpop.xlane.xlu0 %343
    %v345 = vrcp.pop 64.0
    %v346 = vmul.f32 64.0, %v345
    %v347 = vsub.f32 1.0, %v346
    %v348 = vmul.f32 %v345, %v347
    %v349 = vadd.f32 %v345, %v348
    %vm350 = vweird.f32 %v345
    %v351 = vsel %vm350, %v345, %v349
    %v352 = vmul.f32 %v335, %v351
    %v353 = vmul.f32 %v338, %v351
    %v354 = vmul.f32 %v341, %v351
    %v355 = vmul.f32 %v344, %v351
    %v356 = vsub.f32 %v49, %v352
    %v357 = vsub.f32 %v50, %v353
    %v358 = vsub.f32 %v51, %v354
    %v359 = vsub.f32 %v52, %v355
    %v360 = vmul.f32 %v356, %v356
    %v361 = vmul.f32 %v357, %v357
    %v362 = vmul.f32 %v358, %v358
    %v363 = vmul.f32 %v359, %v359
    %v364 = vsel %vm235, %v360, 0.0
    %365 = vadd.xlane.f32.xlu0 %v364
    %v366 = vpop.xlane.xlu0 %365
    %v367 = vsel %vm235, %v361, 0.0
    %368 = vadd.xlane.f32.xlu0 %v367
    %v369 = vpop.xlane.xlu0 %368
    %v370 = vsel %vm235, %v362, 0.0
    %371 = vadd.xlane.f32.xlu0 %v370
    %v372 = vpop.xlane.xlu0 %371
    %v373 = vsel %vm235, %v363, 0.0
    %374 = vadd.xlane.f32.xlu0 %v373
    %v375 = vpop.xlane.xlu0 %374
    %v376 = vmul.f32 %v366, %v351
    %v377 = vmul.f32 %v369, %v351
    %v378 = vmul.f32 %v372, %v351
    %v379 = vmul.f32 %v375, %v351
    %v380 = vadd.f32 %v376, 1e-06
    %v381 = vadd.f32 %v377, 1e-06
    %v382 = vadd.f32 %v378, 1e-06
    %v383 = vadd.f32 %v379, 1e-06
    %v384 = vrsqrt.pop %v380
    %v385 = vmul.f32 %v384, %v380
    %v386 = vmul.f32 %v385, %v384
    %v387 = vmul.f32 0.5, %v386
    %v388 = vsub.f32 1.5, %v387
    %v389 = vmul.f32 %v384, %v388
    %vm390 = vweird.f32 %v380
    %vm391 = vweird.f32 %v384
    %vm392 = vmor %vm390, %vm391
    %v393 = vsel %vm392, %v384, %v389
    %v394 = vrsqrt.pop %v381
    %v395 = vmul.f32 %v394, %v381
    %v396 = vmul.f32 %v395, %v394
    %v397 = vmul.f32 0.5, %v396
    %v398 = vsub.f32 1.5, %v397
    %v399 = vmul.f32 %v394, %v398
    %vm400 = vweird.f32 %v381
    %vm401 = vweird.f32 %v394
    %vm402 = vmor %vm400, %vm401
    %v403 = vsel %vm402, %v394, %v399
    %v404 = vrsqrt.pop %v382
    %v405 = vmul.f32 %v404, %v382
    %v406 = vmul.f32 %v405, %v404
    %v407 = vmul.f32 0.5, %v406
    %v408 = vsub.f32 1.5, %v407
    %v409 = vmul.f32 %v404, %v408
    %vm410 = vweird.f32 %v382
    %vm411 = vweird.f32 %v404
    %vm412 = vmor %vm410, %vm411
    %v413 = vsel %vm412, %v404, %v409
    %v414 = vrsqrt.pop %v383
    %v415 = vmul.f32 %v414, %v383
    %v416 = vmul.f32 %v415, %v414
    %v417 = vmul.f32 0.5, %v416
    %v418 = vsub.f32 1.5, %v417
    %v419 = vmul.f32 %v414, %v418
    %vm420 = vweird.f32 %v383
    %vm421 = vweird.f32 %v414
    %vm422 = vmor %vm420, %vm421
    %v423 = vsel %vm422, %v414, %v419
    %v424 = vmul.f32 %v356, %v393
    %v425 = vmul.f32 %v357, %v403
    %v426 = vmul.f32 %v358, %v413
    %v427 = vmul.f32 %v359, %v423
    %v428 = vadd.f32 %v249, 1.0
    %v429 = vadd.f32 %v318, 1.0
    %v432 = vperm.slane %v428, 0
    %v433 = vperm.slane %v429, 0
    %434 = vrot.lane.b32.xlu0 %v432, 64
    %v435 = vpop.permute.xlu0 %434
    %436 = vrot.lane.b32.xlu0 %v433, 64
    %v437 = vpop.permute.xlu0 %436
    %v440 = vmul.f32 %v424, %v435
    %v441 = vmul.f32 %v425, %v435
    %v442 = vmul.f32 %v426, %v437
    %v443 = vmul.f32 %v427, %v437
    %v444 = vperm.slane %v249, 0
    %v445 = vperm.slane %v318, 0
    %v448 = vadd.f32 %v440, %v444
    %v449 = vadd.f32 %v441, %v444
    %v450 = vadd.f32 %v442, %v445
    %v451 = vadd.f32 %v443, %v445
    %v452 = vsel %vm235, %v53, 0.0
    %453 = vadd.xlane.f32.xlu0 %v452
    %v454 = vpop.xlane.xlu0 %453
    %v455 = vsel %vm235, %v54, 0.0
    %456 = vadd.xlane.f32.xlu0 %v455
    %v457 = vpop.xlane.xlu0 %456
    %v458 = vmul.f32 %v454, %v351
    %v459 = vmul.f32 %v457, %v351
    %v460 = vsub.f32 %v53, %v458
    %v461 = vsub.f32 %v54, %v459
    %v462 = vmul.f32 %v460, %v460
    %v463 = vmul.f32 %v461, %v461
    %v464 = vsel %vm235, %v462, 0.0
    %465 = vadd.xlane.f32.xlu0 %v464
    %v466 = vpop.xlane.xlu0 %465
    %v467 = vsel %vm235, %v463, 0.0
    %468 = vadd.xlane.f32.xlu0 %v467
    %v469 = vpop.xlane.xlu0 %468
    %v470 = vmul.f32 %v466, %v351
    %v471 = vmul.f32 %v469, %v351
    %v472 = vadd.f32 %v470, 1e-06
    %v473 = vadd.f32 %v471, 1e-06
    %v474 = vrsqrt.pop %v472
    %v475 = vmul.f32 %v474, %v472
    %v476 = vmul.f32 %v475, %v474
    %v477 = vmul.f32 0.5, %v476
    %v478 = vsub.f32 1.5, %v477
    %v479 = vmul.f32 %v474, %v478
    %vm480 = vweird.f32 %v472
    %vm481 = vweird.f32 %v474
    %vm482 = vmor %vm480, %vm481
    %v483 = vsel %vm482, %v474, %v479
    %v484 = vrsqrt.pop %v473
    %v485 = vmul.f32 %v484, %v473
    %v486 = vmul.f32 %v485, %v484
    %v487 = vmul.f32 0.5, %v486
    %v488 = vsub.f32 1.5, %v487
    %v489 = vmul.f32 %v484, %v488
    %vm490 = vweird.f32 %v473
    %vm491 = vweird.f32 %v484
    %vm492 = vmor %vm490, %vm491
    %v493 = vsel %vm492, %v484, %v489
    %v494 = vmul.f32 %v460, %v483
    %v495 = vmul.f32 %v461, %v493
    %v496 = vadd.f32 %v288, 1.0
    %v497 = vadd.f32 %v326, 1.0
    %v500 = vperm.slane %v496, 0
    %v501 = vperm.slane %v497, 0
    %502 = vrot.lane.b32.xlu0 %v500, 64
    %v503 = vpop.permute.xlu0 %502
    %504 = vrot.lane.b32.xlu0 %v501, 64
    %v505 = vpop.permute.xlu0 %504
    %v508 = vmul.f32 %v494, %v503
    %v509 = vmul.f32 %v495, %v505
    %v510 = vperm.slane %v288, 0
    %v511 = vperm.slane %v326, 0
    %v514 = vadd.f32 %v508, %v510
    %v515 = vadd.f32 %v509, %v511
    %v516 = vsel %vm235, %v448, 0.0
    %v517 = vsel %vm235, %v449, 0.0
    %v518 = vsel %vm235, %v450, 0.0
    %v519 = vsel %vm235, %v451, 0.0
    %522 = vrot.lane.b32.xlu0 %v514, 64
    %v523 = vpop.permute.xlu0 %522
    %524 = vrot.lane.b32.xlu0 %v515, 64
    %v525 = vpop.permute.xlu0 %524
    %v528 = vsel %vm235, 0.0, %v523
    %v529 = vsel %vm235, 0.0, %v525
    %v530 = vpack.c.bf16 %v517, %v516
    %v531 = vpack.c.bf16 %v518, %v528
    %v532 = vpack.c.bf16 %v529, %v519
    %v533 = vld [vmem:[%s5] sm:$0xff]
    %v534 = vld [vmem:[%s5 + $0x8] sm:$0xff]
    %v535 = vld [vmem:[%s5 + $0x10] sm:$0xff]
    %v536 = vld [vmem:[%s5 + $0x18] sm:$0xff]
    %v537 = vld [vmem:[%s5 + $0x20] sm:$0xff]
    %v538 = vld [vmem:[%s5 + $0x28] sm:$0xff]
    %v539 = vld [vmem:[%s5 + $0x30] sm:$0xff]
    %v540 = vld [vmem:[%s5 + $0x38] sm:$0xff]
    %v541 = vld [vmem:[%s5 + $0x40] sm:$0xff]
    %v542 = vld [vmem:[%s5 + $0x48] sm:$0xff]
    %v543 = vld [vmem:[%s5 + $0x50] sm:$0xff]
    %v544 = vld [vmem:[%s5 + $0x58] sm:$0xff]
    %v545 = vld [vmem:[%s5 + $0x60] sm:$0xff]
    %v546 = vld [vmem:[%s5 + $0x68] sm:$0xff]
    %v547 = vld [vmem:[%s5 + $0x70] sm:$0xff]
    %v548 = vld [vmem:[%s5 + $0x78] sm:$0xff]
    %v565 = vunpack.c.l.b16 %v533
    %v566 = vunpack.c.h.b16 %v533
    %v567 = vunpack.c.l.b16 %v534
    %v568 = vunpack.c.h.b16 %v534
    %v569 = vunpack.c.l.b16 %v535
    %v570 = vunpack.c.h.b16 %v535
    %v571 = vunpack.c.l.b16 %v536
    %v572 = vunpack.c.h.b16 %v536
    %v573 = vunpack.c.l.b16 %v537
    %v574 = vunpack.c.h.b16 %v537
    %v575 = vunpack.c.l.b16 %v538
    %v576 = vunpack.c.h.b16 %v538
    %v577 = vunpack.c.l.b16 %v539
    %v578 = vunpack.c.h.b16 %v539
    %v579 = vunpack.c.l.b16 %v540
    %v580 = vunpack.c.h.b16 %v540
    %v581 = vunpack.c.l.b16 %v541
    %v582 = vunpack.c.h.b16 %v541
    %v583 = vunpack.c.l.b16 %v542
    %v584 = vunpack.c.h.b16 %v542
    %v585 = vunpack.c.l.b16 %v543
    %v586 = vunpack.c.h.b16 %v543
    %v587 = vunpack.c.l.b16 %v544
    %v588 = vunpack.c.h.b16 %v544
    %v589 = vunpack.c.l.b16 %v545
    %v590 = vunpack.c.h.b16 %v545
    %v591 = vunpack.c.l.b16 %v546
    %v592 = vunpack.c.h.b16 %v546
    %v593 = vunpack.c.l.b16 %v547
    %v594 = vunpack.c.h.b16 %v547
    %v595 = vunpack.c.l.b16 %v548
    %v596 = vunpack.c.h.b16 %v548
    %v597 = vpack.c.b16 %v567, %v565
    %v598 = vpack.c.b16 %v568, %v566
    %v599 = vpack.c.b16 %v571, %v569
    %v600 = vpack.c.b16 %v572, %v570
    %v601 = vpack.c.b16 %v575, %v573
    %v602 = vpack.c.b16 %v576, %v574
    %v603 = vpack.c.b16 %v579, %v577
    %v604 = vpack.c.b16 %v580, %v578
    %v605 = vpack.c.b16 %v583, %v581
    %v606 = vpack.c.b16 %v584, %v582
    %v607 = vpack.c.b16 %v587, %v585
    %v608 = vpack.c.b16 %v588, %v586
    %v609 = vpack.c.b16 %v591, %v589
    %v610 = vpack.c.b16 %v592, %v590
    %v611 = vpack.c.b16 %v595, %v593
    %v612 = vpack.c.b16 %v596, %v594
    %629 = vmatpush.bf16.msra.mxu0 %v611
    %630 = vmatpush.bf16.msra.mxu0 %v609
    %631 = vmatpush.bf16.msra.mxu0 %v607
    %632 = vmatpush.bf16.msra.mxu0 %v605
    %633 = vmatpush.bf16.msra.mxu0 %v603
    %634 = vmatpush.bf16.msra.mxu0 %v601
    %635 = vmatpush.bf16.msra.mxu0 %v599
    %636 = vmatpush.bf16.msra.mxu0 %v597
    %637 = vmatmul.bf16.gmra.mxu0 %v530
    %v638 = vpop.f32.mrf.mxu0
    %v639 = vadd.f32 0.0, %v638
    %v640 = vpop.f32.mrf.mxu0
    %v641 = vadd.f32 0.0, %v640
    %642 = vmatmul.bf16.gmra.mxu0 %v531
    %v643 = vpop.f32.mrf.mxu0
    %v644 = vadd.f32 0.0, %v643
    %v645 = vpop.f32.mrf.mxu0
    %v646 = vadd.f32 0.0, %v645
    %647 = vmatmul.bf16.gmra.mxu0 %v532
    %v648 = vpop.f32.mrf.mxu0
    %v649 = vadd.f32 0.0, %v648
    %v650 = vpop.f32.mrf.mxu0
    %v651 = vadd.f32 0.0, %v650
    %652 = vdwg.mxu0
    %653 = vmatpush.bf16.msra.mxu0 %v612
    %654 = vmatpush.bf16.msra.mxu0 %v610
    %655 = vmatpush.bf16.msra.mxu0 %v608
    %656 = vmatpush.bf16.msra.mxu0 %v606
    %657 = vmatpush.bf16.msra.mxu0 %v604
    %658 = vmatpush.bf16.msra.mxu0 %v602
    %659 = vmatpush.bf16.msra.mxu0 %v600
    %660 = vmatpush.bf16.msra.mxu0 %v598
    %661 = vmatmul.bf16.gmra.mxu0 %v530
    %v662 = vpop.f32.mrf.mxu0
    %v663 = vadd.f32 0.0, %v662
    %v664 = vpop.f32.mrf.mxu0
    %v665 = vadd.f32 0.0, %v664
    %666 = vmatmul.bf16.gmra.mxu0 %v531
    %v667 = vpop.f32.mrf.mxu0
    %v668 = vadd.f32 0.0, %v667
    %v669 = vpop.f32.mrf.mxu0
    %v670 = vadd.f32 0.0, %v669
    %671 = vmatmul.bf16.gmra.mxu0 %v532
    %v672 = vpop.f32.mrf.mxu0
    %v673 = vadd.f32 0.0, %v672
    %v674 = vpop.f32.mrf.mxu0
    %v675 = vadd.f32 0.0, %v674
    %676 = vdwg.mxu0
    %v677 = vld [vmem:[%s6] sm:$0xff]
    %v678 = vld [vmem:[%s6 + $0x8] sm:$0xff]
    %v679 = vld [vmem:[%s6 + $0x10] sm:$0xff]
    %v680 = vld [vmem:[%s6 + $0x18] sm:$0xff]
    %v681 = vld [vmem:[%s6 + $0x20] sm:$0xff]
    %v682 = vld [vmem:[%s6 + $0x28] sm:$0xff]
    %v683 = vadd.f32 %v639, %v677
    %v684 = vadd.f32 %v663, %v678
    %v685 = vadd.f32 %v641, %v679
    %v686 = vadd.f32 %v665, %v680
    %v687 = vadd.f32 %v644, %v681
    %v688 = vadd.f32 %v668, %v682
    %v689 = vadd.f32 %v646, %v677
    %v690 = vadd.f32 %v670, %v678
    %v691 = vadd.f32 %v649, %v679
    %v692 = vadd.f32 %v673, %v680
    %v693 = vadd.f32 %v651, %v681
    %v694 = vadd.f32 %v675, %v682
    %v695 = vpack.c.bf16 %v685, %v683
    %v696 = vpack.c.bf16 %v687, %v687
    %699 = vrot.lane.b32.xlu0 %v695, 64
    %v700 = vpop.permute.xlu0 %699
    %701 = vrot.lane.b32.xlu0 %v696, 64
    %v702 = vpop.permute.xlu0 %701
    %vm703 = vcmask 130048
    %v705 = vsel %vm703, %v695, 0
    %v708 = vsel %vm703, %v696, 0
    %v711 = vsel %vm703, %v700, 0
    %v714 = vsel %vm703, %v702, 0
    %716 = vmatpush.bf16.xpose.msra.mxu0 0
    %717 = vmatpush.bf16.xpose.msra.mxu0 0
    %718 = vmatpush.bf16.xpose.msra.mxu0 0
    %719 = vmatpush.bf16.xpose.msra.mxu0 0
    %720 = vmatpush.bf16.xpose.msra.mxu0 0
    %721 = vmatpush.bf16.xpose.msra.mxu0 0
    %722 = vmatpush.bf16.xpose.msra.mxu0 %v714
    %723 = vmatpush.bf16.xpose.msra.mxu0 %v711
    %724 = vmatmul.bf16.gmra.mxu0 %v705
    %v725 = vpop.f32.mrf.mxu0
    %v726 = vadd.f32 0.0, %v725
    %v727 = vpop.f32.mrf.mxu0
    %v728 = vadd.f32 0.0, %v727
    %729 = vmatmul.bf16.gmra.mxu0 %v708
    %v730 = vpop.f32.mrf.mxu0
    %v731 = vadd.f32 0.0, %v730
    %v732 = vpop.f32.mrf.mxu0
    %733 = vdwg.mxu0
    %734 = vrot.lane.b32.xlu0 %v695, 112
    %v735 = vpop.permute.xlu0 %734
    %736 = vrot.lane.b32.xlu0 %v696, 112
    %v737 = vpop.permute.xlu0 %736
    %738 = vrot.lane.b32.xlu0 %v695, 48
    %v739 = vpop.permute.xlu0 %738
    %740 = vrot.lane.b32.xlu0 %v696, 48
    %v741 = vpop.permute.xlu0 %740
    %v743 = vsel %vm703, %v735, 0
    %v746 = vsel %vm703, %v737, 0
    %v749 = vsel %vm703, %v739, 0
    %v752 = vsel %vm703, %v741, 0
    %754 = vmatpush.bf16.xpose.msra.mxu0 0
    %755 = vmatpush.bf16.xpose.msra.mxu0 0
    %756 = vmatpush.bf16.xpose.msra.mxu0 0
    %757 = vmatpush.bf16.xpose.msra.mxu0 0
    %758 = vmatpush.bf16.xpose.msra.mxu0 0
    %759 = vmatpush.bf16.xpose.msra.mxu0 0
    %760 = vmatpush.bf16.xpose.msra.mxu0 %v752
    %761 = vmatpush.bf16.xpose.msra.mxu0 %v749
    %762 = vmatmul.bf16.gmra.mxu0 %v743
    %v763 = vpop.f32.mrf.mxu0
    %v764 = vadd.f32 0.0, %v763
    %v765 = vpop.f32.mrf.mxu0
    %v766 = vadd.f32 0.0, %v765
    %767 = vmatmul.bf16.gmra.mxu0 %v746
    %v768 = vpop.f32.mrf.mxu0
    %v769 = vadd.f32 0.0, %v768
    %v770 = vpop.f32.mrf.mxu0
    %771 = vdwg.mxu0
    %772 = vrot.lane.b32.xlu0 %v695, 96
    %v773 = vpop.permute.xlu0 %772
    %774 = vrot.lane.b32.xlu0 %v696, 96
    %v775 = vpop.permute.xlu0 %774
    %776 = vrot.lane.b32.xlu0 %v695, 32
    %v777 = vpop.permute.xlu0 %776
    %778 = vrot.lane.b32.xlu0 %v696, 32
    %v779 = vpop.permute.xlu0 %778
    %v781 = vsel %vm703, %v773, 0
    %v784 = vsel %vm703, %v775, 0
    %v787 = vsel %vm703, %v777, 0
    %v790 = vsel %vm703, %v779, 0
    %792 = vmatpush.bf16.xpose.msra.mxu0 0
    %793 = vmatpush.bf16.xpose.msra.mxu0 0
    %794 = vmatpush.bf16.xpose.msra.mxu0 0
    %795 = vmatpush.bf16.xpose.msra.mxu0 0
    %796 = vmatpush.bf16.xpose.msra.mxu0 0
    %797 = vmatpush.bf16.xpose.msra.mxu0 0
    %798 = vmatpush.bf16.xpose.msra.mxu0 %v790
    %799 = vmatpush.bf16.xpose.msra.mxu0 %v787
    %800 = vmatmul.bf16.gmra.mxu0 %v781
    %v801 = vpop.f32.mrf.mxu0
    %v802 = vadd.f32 0.0, %v801
    %v803 = vpop.f32.mrf.mxu0
    %v804 = vadd.f32 0.0, %v803
    %805 = vmatmul.bf16.gmra.mxu0 %v784
    %v806 = vpop.f32.mrf.mxu0
    %v807 = vadd.f32 0.0, %v806
    %v808 = vpop.f32.mrf.mxu0
    %809 = vdwg.mxu0
    %810 = vrot.lane.b32.xlu0 %v695, 80
    %v811 = vpop.permute.xlu0 %810
    %812 = vrot.lane.b32.xlu0 %v696, 80
    %v813 = vpop.permute.xlu0 %812
    %814 = vrot.lane.b32.xlu0 %v695, 16
    %v815 = vpop.permute.xlu0 %814
    %816 = vrot.lane.b32.xlu0 %v696, 16
    %v817 = vpop.permute.xlu0 %816
    %v819 = vsel %vm703, %v811, 0
    %v822 = vsel %vm703, %v813, 0
    %v825 = vsel %vm703, %v815, 0
    %v828 = vsel %vm703, %v817, 0
    %830 = vmatpush.bf16.xpose.msra.mxu0 0
    %831 = vmatpush.bf16.xpose.msra.mxu0 0
    %832 = vmatpush.bf16.xpose.msra.mxu0 0
    %833 = vmatpush.bf16.xpose.msra.mxu0 0
    %834 = vmatpush.bf16.xpose.msra.mxu0 0
    %835 = vmatpush.bf16.xpose.msra.mxu0 0
    %836 = vmatpush.bf16.xpose.msra.mxu0 %v828
    %837 = vmatpush.bf16.xpose.msra.mxu0 %v825
    %838 = vmatmul.bf16.gmra.mxu0 %v819
    %v839 = vpop.f32.mrf.mxu0
    %v840 = vadd.f32 0.0, %v839
    %v841 = vpop.f32.mrf.mxu0
    %v842 = vadd.f32 0.0, %v841
    %843 = vmatmul.bf16.gmra.mxu0 %v822
    %v844 = vpop.f32.mrf.mxu0
    %v845 = vadd.f32 0.0, %v844
    %v846 = vpop.f32.mrf.mxu0
    %847 = vdwg.mxu0
    %v848 = vpack.c.bf16 %v691, %v689
    %v849 = vpack.c.bf16 %v693, %v693
    %852 = vrot.lane.b32.xlu0 %v848, 64
    %v853 = vpop.permute.xlu0 %852
    %854 = vrot.lane.b32.xlu0 %v849, 64
    %v855 = vpop.permute.xlu0 %854
    %v857 = vsel %vm703, %v848, 0
    %v860 = vsel %vm703, %v849, 0
    %v863 = vsel %vm703, %v853, 0
    %v866 = vsel %vm703, %v855, 0
    %868 = vmatpush.bf16.xpose.msra.mxu0 0
    %869 = vmatpush.bf16.xpose.msra.mxu0 0
    %870 = vmatpush.bf16.xpose.msra.mxu0 0
    %871 = vmatpush.bf16.xpose.msra.mxu0 0
    %872 = vmatpush.bf16.xpose.msra.mxu0 0
    %873 = vmatpush.bf16.xpose.msra.mxu0 0
    %874 = vmatpush.bf16.xpose.msra.mxu0 %v866
    %875 = vmatpush.bf16.xpose.msra.mxu0 %v863
    %876 = vmatmul.bf16.gmra.mxu0 %v857
    %v877 = vpop.f32.mrf.mxu0
    %v878 = vadd.f32 0.0, %v877
    %v879 = vpop.f32.mrf.mxu0
    %v880 = vadd.f32 0.0, %v879
    %881 = vmatmul.bf16.gmra.mxu0 %v860
    %v882 = vpop.f32.mrf.mxu0
    %v883 = vadd.f32 0.0, %v882
    %v884 = vpop.f32.mrf.mxu0
    %885 = vdwg.mxu0
    %886 = vrot.lane.b32.xlu0 %v848, 112
    %v887 = vpop.permute.xlu0 %886
    %888 = vrot.lane.b32.xlu0 %v849, 112
    %v889 = vpop.permute.xlu0 %888
    %890 = vrot.lane.b32.xlu0 %v848, 48
    %v891 = vpop.permute.xlu0 %890
    %892 = vrot.lane.b32.xlu0 %v849, 48
    %v893 = vpop.permute.xlu0 %892
    %v895 = vsel %vm703, %v887, 0
    %v898 = vsel %vm703, %v889, 0
    %v901 = vsel %vm703, %v891, 0
    %v904 = vsel %vm703, %v893, 0
    %906 = vmatpush.bf16.xpose.msra.mxu0 0
    %907 = vmatpush.bf16.xpose.msra.mxu0 0
    %908 = vmatpush.bf16.xpose.msra.mxu0 0
    %909 = vmatpush.bf16.xpose.msra.mxu0 0
    %910 = vmatpush.bf16.xpose.msra.mxu0 0
    %911 = vmatpush.bf16.xpose.msra.mxu0 0
    %912 = vmatpush.bf16.xpose.msra.mxu0 %v904
    %913 = vmatpush.bf16.xpose.msra.mxu0 %v901
    %914 = vmatmul.bf16.gmra.mxu0 %v895
    %v915 = vpop.f32.mrf.mxu0
    %v916 = vadd.f32 0.0, %v915
    %v917 = vpop.f32.mrf.mxu0
    %v918 = vadd.f32 0.0, %v917
    %919 = vmatmul.bf16.gmra.mxu0 %v898
    %v920 = vpop.f32.mrf.mxu0
    %v921 = vadd.f32 0.0, %v920
    %v922 = vpop.f32.mrf.mxu0
    %923 = vdwg.mxu0
    %924 = vrot.lane.b32.xlu0 %v848, 96
    %v925 = vpop.permute.xlu0 %924
    %926 = vrot.lane.b32.xlu0 %v849, 96
    %v927 = vpop.permute.xlu0 %926
    %928 = vrot.lane.b32.xlu0 %v848, 32
    %v929 = vpop.permute.xlu0 %928
    %930 = vrot.lane.b32.xlu0 %v849, 32
    %v931 = vpop.permute.xlu0 %930
    %v933 = vsel %vm703, %v925, 0
    %v936 = vsel %vm703, %v927, 0
    %v939 = vsel %vm703, %v929, 0
    %v942 = vsel %vm703, %v931, 0
    %944 = vmatpush.bf16.xpose.msra.mxu0 0
    %945 = vmatpush.bf16.xpose.msra.mxu0 0
    %946 = vmatpush.bf16.xpose.msra.mxu0 0
    %947 = vmatpush.bf16.xpose.msra.mxu0 0
    %948 = vmatpush.bf16.xpose.msra.mxu0 0
    %949 = vmatpush.bf16.xpose.msra.mxu0 0
    %950 = vmatpush.bf16.xpose.msra.mxu0 %v942
    %951 = vmatpush.bf16.xpose.msra.mxu0 %v939
    %952 = vmatmul.bf16.gmra.mxu0 %v933
    %v953 = vpop.f32.mrf.mxu0
    %v954 = vadd.f32 0.0, %v953
    %v955 = vpop.f32.mrf.mxu0
    %v956 = vadd.f32 0.0, %v955
    %957 = vmatmul.bf16.gmra.mxu0 %v936
    %v958 = vpop.f32.mrf.mxu0
    %v959 = vadd.f32 0.0, %v958
    %v960 = vpop.f32.mrf.mxu0
    %961 = vdwg.mxu0
    %962 = vrot.lane.b32.xlu0 %v848, 80
    %v963 = vpop.permute.xlu0 %962
    %964 = vrot.lane.b32.xlu0 %v849, 80
    %v965 = vpop.permute.xlu0 %964
    %966 = vrot.lane.b32.xlu0 %v848, 16
    %v967 = vpop.permute.xlu0 %966
    %968 = vrot.lane.b32.xlu0 %v849, 16
    %v969 = vpop.permute.xlu0 %968
    %v971 = vsel %vm703, %v963, 0
    %v974 = vsel %vm703, %v965, 0
    %v977 = vsel %vm703, %v967, 0
    %v980 = vsel %vm703, %v969, 0
    %982 = vmatpush.bf16.xpose.msra.mxu0 0
    %983 = vmatpush.bf16.xpose.msra.mxu0 0
    %984 = vmatpush.bf16.xpose.msra.mxu0 0
    %985 = vmatpush.bf16.xpose.msra.mxu0 0
    %986 = vmatpush.bf16.xpose.msra.mxu0 0
    %987 = vmatpush.bf16.xpose.msra.mxu0 0
    %988 = vmatpush.bf16.xpose.msra.mxu0 %v980
    %989 = vmatpush.bf16.xpose.msra.mxu0 %v977
    %990 = vmatmul.bf16.gmra.mxu0 %v971
    %v991 = vpop.f32.mrf.mxu0
    %v992 = vadd.f32 0.0, %v991
    %v993 = vpop.f32.mrf.mxu0
    %v994 = vadd.f32 0.0, %v993
    %995 = vmatmul.bf16.gmra.mxu0 %v974
    %v996 = vpop.f32.mrf.mxu0
    %v997 = vadd.f32 0.0, %v996
    %v998 = vpop.f32.mrf.mxu0
    %999 = vdwg.mxu0
    %vm1000 = vcmask 195584
    %v1001 = vsel %vm1000, %v726, -inf
    %1002 = vmax.xlane.f32.xlu0 %v1001
    %v1003 = vpop.xlane.xlu0 %1002
    %v1004 = vsel %vm1000, %v728, -inf
    %1005 = vmax.xlane.f32.xlu0 %v1004
    %v1006 = vpop.xlane.xlu0 %1005
    %v1007 = vsel %vm1000, %v731, -inf
    %1008 = vmax.xlane.f32.xlu0 %v1007
    %v1009 = vpop.xlane.xlu0 %1008
    %v1010 = vsel %vm1000, %v764, -inf
    %1011 = vmax.xlane.f32.xlu0 %v1010
    %v1012 = vpop.xlane.xlu0 %1011
    %v1013 = vsel %vm1000, %v766, -inf
    %1014 = vmax.xlane.f32.xlu0 %v1013
    %v1015 = vpop.xlane.xlu0 %1014
    %v1016 = vsel %vm1000, %v769, -inf
    %1017 = vmax.xlane.f32.xlu0 %v1016
    %v1018 = vpop.xlane.xlu0 %1017
    %v1019 = vsel %vm1000, %v802, -inf
    %1020 = vmax.xlane.f32.xlu0 %v1019
    %v1021 = vpop.xlane.xlu0 %1020
    %v1022 = vsel %vm1000, %v804, -inf
    %1023 = vmax.xlane.f32.xlu0 %v1022
    %v1024 = vpop.xlane.xlu0 %1023
    %v1025 = vsel %vm1000, %v807, -inf
    %1026 = vmax.xlane.f32.xlu0 %v1025
    %v1027 = vpop.xlane.xlu0 %1026
    %v1028 = vsel %vm1000, %v840, -inf
    %1029 = vmax.xlane.f32.xlu0 %v1028
    %v1030 = vpop.xlane.xlu0 %1029
    %v1031 = vsel %vm1000, %v842, -inf
    %1032 = vmax.xlane.f32.xlu0 %v1031
    %v1033 = vpop.xlane.xlu0 %1032
    %v1034 = vsel %vm1000, %v845, -inf
    %1035 = vmax.xlane.f32.xlu0 %v1034
    %v1036 = vpop.xlane.xlu0 %1035
    %v1037 = vsel %vm1000, %v878, -inf
    %1038 = vmax.xlane.f32.xlu0 %v1037
    %v1039 = vpop.xlane.xlu0 %1038
    %v1040 = vsel %vm1000, %v880, -inf
    %1041 = vmax.xlane.f32.xlu0 %v1040
    %v1042 = vpop.xlane.xlu0 %1041
    %v1043 = vsel %vm1000, %v883, -inf
    %1044 = vmax.xlane.f32.xlu0 %v1043
    %v1045 = vpop.xlane.xlu0 %1044
    %v1046 = vsel %vm1000, %v916, -inf
    %1047 = vmax.xlane.f32.xlu0 %v1046
    %v1048 = vpop.xlane.xlu0 %1047
    %v1049 = vsel %vm1000, %v918, -inf
    %1050 = vmax.xlane.f32.xlu0 %v1049
    %v1051 = vpop.xlane.xlu0 %1050
    %v1052 = vsel %vm1000, %v921, -inf
    %1053 = vmax.xlane.f32.xlu0 %v1052
    %v1054 = vpop.xlane.xlu0 %1053
    %v1055 = vsel %vm1000, %v954, -inf
    %1056 = vmax.xlane.f32.xlu0 %v1055
    %v1057 = vpop.xlane.xlu0 %1056
    %v1058 = vsel %vm1000, %v956, -inf
    %1059 = vmax.xlane.f32.xlu0 %v1058
    %v1060 = vpop.xlane.xlu0 %1059
    %v1061 = vsel %vm1000, %v959, -inf
    %1062 = vmax.xlane.f32.xlu0 %v1061
    %v1063 = vpop.xlane.xlu0 %1062
    %v1064 = vsel %vm1000, %v992, -inf
    %1065 = vmax.xlane.f32.xlu0 %v1064
    %v1066 = vpop.xlane.xlu0 %1065
    %v1067 = vsel %vm1000, %v994, -inf
    %1068 = vmax.xlane.f32.xlu0 %v1067
    %v1069 = vpop.xlane.xlu0 %1068
    %v1070 = vsel %vm1000, %v997, -inf
    %1071 = vmax.xlane.f32.xlu0 %v1070
    %v1072 = vpop.xlane.xlu0 %1071
    %v1073 = vsub.f32 %v726, %v1003
    %v1074 = vsub.f32 %v728, %v1006
    %v1075 = vsub.f32 %v731, %v1009
    %v1076 = vsub.f32 %v764, %v1012
    %v1077 = vsub.f32 %v766, %v1015
    %v1078 = vsub.f32 %v769, %v1018
    %v1079 = vsub.f32 %v802, %v1021
    %v1080 = vsub.f32 %v804, %v1024
    %v1081 = vsub.f32 %v807, %v1027
    %v1082 = vsub.f32 %v840, %v1030
    %v1083 = vsub.f32 %v842, %v1033
    %v1084 = vsub.f32 %v845, %v1036
    %v1085 = vsub.f32 %v878, %v1039
    %v1086 = vsub.f32 %v880, %v1042
    %v1087 = vsub.f32 %v883, %v1045
    %v1088 = vsub.f32 %v916, %v1048
    %v1089 = vsub.f32 %v918, %v1051
    %v1090 = vsub.f32 %v921, %v1054
    %v1091 = vsub.f32 %v954, %v1057
    %v1092 = vsub.f32 %v956, %v1060
    %v1093 = vsub.f32 %v959, %v1063
    %v1094 = vsub.f32 %v992, %v1066
    %v1095 = vsub.f32 %v994, %v1069
    %v1096 = vsub.f32 %v997, %v1072
    %v1097 = vmul.f32 %v1073, 1.442695
    %v1098 = vpow.pop %v1097
    %v1099 = vmul.f32 %v1074, 1.442695
    %v1100 = vpow.pop %v1099
    %v1101 = vmul.f32 %v1075, 1.442695
    %v1102 = vpow.pop %v1101
    %v1103 = vmul.f32 %v1076, 1.442695
    %v1104 = vpow.pop %v1103
    %v1105 = vmul.f32 %v1077, 1.442695
    %v1106 = vpow.pop %v1105
    %v1107 = vmul.f32 %v1078, 1.442695
    %v1108 = vpow.pop %v1107
    %v1109 = vmul.f32 %v1079, 1.442695
    %v1110 = vpow.pop %v1109
    %v1111 = vmul.f32 %v1080, 1.442695
    %v1112 = vpow.pop %v1111
    %v1113 = vmul.f32 %v1081, 1.442695
    %v1114 = vpow.pop %v1113
    %v1115 = vmul.f32 %v1082, 1.442695
    %v1116 = vpow.pop %v1115
    %v1117 = vmul.f32 %v1083, 1.442695
    %v1118 = vpow.pop %v1117
    %v1119 = vmul.f32 %v1084, 1.442695
    %v1120 = vpow.pop %v1119
    %v1121 = vmul.f32 %v1085, 1.442695
    %v1122 = vpow.pop %v1121
    %v1123 = vmul.f32 %v1086, 1.442695
    %v1124 = vpow.pop %v1123
    %v1125 = vmul.f32 %v1087, 1.442695
    %v1126 = vpow.pop %v1125
    %v1127 = vmul.f32 %v1088, 1.442695
    %v1128 = vpow.pop %v1127
    %v1129 = vmul.f32 %v1089, 1.442695
    %v1130 = vpow.pop %v1129
    %v1131 = vmul.f32 %v1090, 1.442695
    %v1132 = vpow.pop %v1131
    %v1133 = vmul.f32 %v1091, 1.442695
    %v1134 = vpow.pop %v1133
    %v1135 = vmul.f32 %v1092, 1.442695
    %v1136 = vpow.pop %v1135
    %v1137 = vmul.f32 %v1093, 1.442695
    %v1138 = vpow.pop %v1137
    %v1139 = vmul.f32 %v1094, 1.442695
    %v1140 = vpow.pop %v1139
    %v1141 = vmul.f32 %v1095, 1.442695
    %v1142 = vpow.pop %v1141
    %v1143 = vmul.f32 %v1096, 1.442695
    %v1144 = vpow.pop %v1143
    %v1145 = vsel %vm1000, %v1098, 0.0
    %1146 = vadd.xlane.f32.xlu0 %v1145
    %v1147 = vpop.xlane.xlu0 %1146
    %v1148 = vsel %vm1000, %v1100, 0.0
    %1149 = vadd.xlane.f32.xlu0 %v1148
    %v1150 = vpop.xlane.xlu0 %1149
    %v1151 = vsel %vm1000, %v1102, 0.0
    %1152 = vadd.xlane.f32.xlu0 %v1151
    %v1153 = vpop.xlane.xlu0 %1152
    %v1154 = vsel %vm1000, %v1104, 0.0
    %1155 = vadd.xlane.f32.xlu0 %v1154
    %v1156 = vpop.xlane.xlu0 %1155
    %v1157 = vsel %vm1000, %v1106, 0.0
    %1158 = vadd.xlane.f32.xlu0 %v1157
    %v1159 = vpop.xlane.xlu0 %1158
    %v1160 = vsel %vm1000, %v1108, 0.0
    %1161 = vadd.xlane.f32.xlu0 %v1160
    %v1162 = vpop.xlane.xlu0 %1161
    %v1163 = vsel %vm1000, %v1110, 0.0
    %1164 = vadd.xlane.f32.xlu0 %v1163
    %v1165 = vpop.xlane.xlu0 %1164
    %v1166 = vsel %vm1000, %v1112, 0.0
    %1167 = vadd.xlane.f32.xlu0 %v1166
    %v1168 = vpop.xlane.xlu0 %1167
    %v1169 = vsel %vm1000, %v1114, 0.0
    %1170 = vadd.xlane.f32.xlu0 %v1169
    %v1171 = vpop.xlane.xlu0 %1170
    %v1172 = vsel %vm1000, %v1116, 0.0
    %1173 = vadd.xlane.f32.xlu0 %v1172
    %v1174 = vpop.xlane.xlu0 %1173
    %v1175 = vsel %vm1000, %v1118, 0.0
    %1176 = vadd.xlane.f32.xlu0 %v1175
    %v1177 = vpop.xlane.xlu0 %1176
    %v1178 = vsel %vm1000, %v1120, 0.0
    %1179 = vadd.xlane.f32.xlu0 %v1178
    %v1180 = vpop.xlane.xlu0 %1179
    %v1181 = vsel %vm1000, %v1122, 0.0
    %1182 = vadd.xlane.f32.xlu0 %v1181
    %v1183 = vpop.xlane.xlu0 %1182
    %v1184 = vsel %vm1000, %v1124, 0.0
    %1185 = vadd.xlane.f32.xlu0 %v1184
    %v1186 = vpop.xlane.xlu0 %1185
    %v1187 = vsel %vm1000, %v1126, 0.0
    %1188 = vadd.xlane.f32.xlu0 %v1187
    %v1189 = vpop.xlane.xlu0 %1188
    %v1190 = vsel %vm1000, %v1128, 0.0
    %1191 = vadd.xlane.f32.xlu0 %v1190
    %v1192 = vpop.xlane.xlu0 %1191
    %v1193 = vsel %vm1000, %v1130, 0.0
    %1194 = vadd.xlane.f32.xlu0 %v1193
    %v1195 = vpop.xlane.xlu0 %1194
    %v1196 = vsel %vm1000, %v1132, 0.0
    %1197 = vadd.xlane.f32.xlu0 %v1196
    %v1198 = vpop.xlane.xlu0 %1197
    %v1199 = vsel %vm1000, %v1134, 0.0
    %1200 = vadd.xlane.f32.xlu0 %v1199
    %v1201 = vpop.xlane.xlu0 %1200
    %v1202 = vsel %vm1000, %v1136, 0.0
    %1203 = vadd.xlane.f32.xlu0 %v1202
    %v1204 = vpop.xlane.xlu0 %1203
    %v1205 = vsel %vm1000, %v1138, 0.0
    %1206 = vadd.xlane.f32.xlu0 %v1205
    %v1207 = vpop.xlane.xlu0 %1206
    %v1208 = vsel %vm1000, %v1140, 0.0
    %1209 = vadd.xlane.f32.xlu0 %v1208
    %v1210 = vpop.xlane.xlu0 %1209
    %v1211 = vsel %vm1000, %v1142, 0.0
    %1212 = vadd.xlane.f32.xlu0 %v1211
    %v1213 = vpop.xlane.xlu0 %1212
    %v1214 = vsel %vm1000, %v1144, 0.0
    %1215 = vadd.xlane.f32.xlu0 %v1214
    %v1216 = vpop.xlane.xlu0 %1215
    %v1217 = vrcp.pop %v1147
    %v1218 = vrcp.pop %v1150
    %v1219 = vrcp.pop %v1153
    %v1220 = vrcp.pop %v1156
    %v1221 = vrcp.pop %v1159
    %v1222 = vrcp.pop %v1162
    %v1223 = vrcp.pop %v1165
    %v1224 = vrcp.pop %v1168
    %v1225 = vrcp.pop %v1171
    %v1226 = vrcp.pop %v1174
    %v1227 = vrcp.pop %v1177
    %v1228 = vrcp.pop %v1180
    %v1229 = vrcp.pop %v1183
    %v1230 = vrcp.pop %v1186
    %v1231 = vrcp.pop %v1189
    %v1232 = vrcp.pop %v1192
    %v1233 = vrcp.pop %v1195
    %v1234 = vrcp.pop %v1198
    %v1235 = vrcp.pop %v1201
    %v1236 = vrcp.pop %v1204
    %v1237 = vrcp.pop %v1207
    %v1238 = vrcp.pop %v1210
    %v1239 = vrcp.pop %v1213
    %v1240 = vrcp.pop %v1216
    %v1241 = vmul.f32 %v1098, %v1217
    %v1242 = vmul.f32 %v1100, %v1218
    %v1243 = vmul.f32 %v1102, %v1219
    %v1244 = vmul.f32 %v1104, %v1220
    %v1245 = vmul.f32 %v1106, %v1221
    %v1246 = vmul.f32 %v1108, %v1222
    %v1247 = vmul.f32 %v1110, %v1223
    %v1248 = vmul.f32 %v1112, %v1224
    %v1249 = vmul.f32 %v1114, %v1225
    %v1250 = vmul.f32 %v1116, %v1226
    %v1251 = vmul.f32 %v1118, %v1227
    %v1252 = vmul.f32 %v1120, %v1228
    %v1253 = vmul.f32 %v1122, %v1229
    %v1254 = vmul.f32 %v1124, %v1230
    %v1255 = vmul.f32 %v1126, %v1231
    %v1256 = vmul.f32 %v1128, %v1232
    %v1257 = vmul.f32 %v1130, %v1233
    %v1258 = vmul.f32 %v1132, %v1234
    %v1259 = vmul.f32 %v1134, %v1235
    %v1260 = vmul.f32 %v1136, %v1236
    %v1261 = vmul.f32 %v1138, %v1237
    %v1262 = vmul.f32 %v1140, %v1238
    %v1263 = vmul.f32 %v1142, %v1239
    %v1264 = vmul.f32 %v1144, %v1240
    %v1265 = vld [vmem:[%s7] sm:$0xf]
    %v1266 = vld [vmem:[%s7 + $0x4] sm:$0xf]
    %v1267 = vld [vmem:[%s7 + $0x8] sm:$0xf]
    %v1268 = vld [vmem:[%s7 + $0xc] sm:$0xf]
    %v1269 = vld [vmem:[%s7 + $0x10] sm:$0xf]
    %v1270 = vld [vmem:[%s7 + $0x14] sm:$0xf]
    %v1271 = vld [vmem:[%s7 + $0x18] sm:$0xf]
    %v1272 = vld [vmem:[%s7 + $0x1c] sm:$0xf]
    %v1273 = vpack.c.bf16 %v1242, %v1241
    %v1274 = vpack.c.bf16 %v1243, %v1243
    %v1275 = vpack.c.bf16 %v686, %v684
    %v1276 = vpack.c.bf16 %v688, %v688
    %v1278 = vsel %vm1000, %v1273, 0
    %v1281 = vsel %vm1000, %v1274, 0
    %vm1283 = vcmask 1043456
    %v1285 = vsel %vm1283, %v1276, 0
    %1287 = vmatpush.bf16.msra.mxu0 0
    %1288 = vmatpush.bf16.msra.mxu0 0
    %1289 = vmatpush.bf16.msra.mxu0 0
    %1290 = vmatpush.bf16.msra.mxu0 0
    %1291 = vmatpush.bf16.msra.mxu0 0
    %1292 = vmatpush.bf16.msra.mxu0 0
    %1293 = vmatpush.bf16.msra.mxu0 %v1285
    %1294 = vmatpush.bf16.msra.mxu0 %v1275
    %1295 = vmatmul.bf16.gmra.mxu0 %v1278
    %v1296 = vpop.f32.mrf.mxu0
    %v1297 = vadd.f32 0.0, %v1296
    %v1298 = vpop.f32.mrf.mxu0
    %v1299 = vadd.f32 0.0, %v1298
    %1300 = vmatmul.bf16.gmra.mxu0 %v1281
    %v1301 = vpop.f32.mrf.mxu0
    %v1302 = vadd.f32 0.0, %v1301
    %v1303 = vpop.f32.mrf.mxu0
    %1304 = vdwg.mxu0
    %v1305 = vpack.c.bf16 %v1299, %v1297
    %v1306 = vpack.c.bf16 %v1302, %v1302
    %v1307 = vpack.c.bf16 %v1245, %v1244
    %v1308 = vpack.c.bf16 %v1246, %v1246
    %1311 = vrot.lane.b32.xlu0 %v1275, 112
    %v1312 = vpop.permute.xlu0 %1311
    %1313 = vrot.lane.b32.xlu0 %v1276, 112
    %v1314 = vpop.permute.xlu0 %1313
    %v1317 = vsel %vm1000, %v1307, 0
    %v1320 = vsel %vm1000, %v1308, 0
    %v1323 = vsel %vm1283, %v1314, 0
    %1325 = vmatpush.bf16.msra.mxu0 0
    %1326 = vmatpush.bf16.msra.mxu0 0
    %1327 = vmatpush.bf16.msra.mxu0 0
    %1328 = vmatpush.bf16.msra.mxu0 0
    %1329 = vmatpush.bf16.msra.mxu0 0
    %1330 = vmatpush.bf16.msra.mxu0 0
    %1331 = vmatpush.bf16.msra.mxu0 %v1323
    %1332 = vmatpush.bf16.msra.mxu0 %v1312
    %1333 = vmatmul.bf16.gmra.mxu0 %v1317
    %v1334 = vpop.f32.mrf.mxu0
    %v1335 = vadd.f32 0.0, %v1334
    %v1336 = vpop.f32.mrf.mxu0
    %v1337 = vadd.f32 0.0, %v1336
    %1338 = vmatmul.bf16.gmra.mxu0 %v1320
    %v1339 = vpop.f32.mrf.mxu0
    %v1340 = vadd.f32 0.0, %v1339
    %v1341 = vpop.f32.mrf.mxu0
    %1342 = vdwg.mxu0
    %v1343 = vpack.c.bf16 %v1337, %v1335
    %v1344 = vpack.c.bf16 %v1340, %v1340
    %v1347 = vunpack.c.l.b16 %v1267
    %v1348 = vunpack.c.l.b16 %v1268
    %v1349 = vpack.c.b16 %v1348, %v1347
    %v1352 = vsel %vm703, %v1343, 0
    %v1355 = vsel %vm703, %v1344, 0
    %1357 = vmatpush.bf16.msra.mxu0 0
    %1358 = vmatpush.bf16.msra.mxu0 0
    %1359 = vmatpush.bf16.msra.mxu0 0
    %1360 = vmatpush.bf16.msra.mxu0 0
    %1361 = vmatpush.bf16.msra.mxu0 0
    %1362 = vmatpush.bf16.msra.mxu0 0
    %1363 = vmatpush.bf16.msra.mxu0 0
    %1364 = vmatpush.bf16.msra.mxu0 %v1349
    %1365 = vmatmul.bf16.gmra.mxu0 %v1352
    %v1366 = vpop.f32.mrf.mxu0
    %v1367 = vadd.f32 0.0, %v1366
    %v1368 = vpop.f32.mrf.mxu0
    %v1369 = vadd.f32 0.0, %v1368
    %1370 = vmatmul.bf16.gmra.mxu0 %v1355
    %v1371 = vpop.f32.mrf.mxu0
    %v1372 = vadd.f32 0.0, %v1371
    %v1373 = vpop.f32.mrf.mxu0
    %1374 = vdwg.mxu0
    %v1377 = vunpack.c.l.b16 %v1265
    %v1378 = vunpack.c.l.b16 %v1266
    %v1379 = vpack.c.b16 %v1378, %v1377
    %v1382 = vsel %vm703, %v1305, 0
    %v1385 = vsel %vm703, %v1306, 0
    %1387 = vmatpush.bf16.msra.mxu0 0
    %1388 = vmatpush.bf16.msra.mxu0 0
    %1389 = vmatpush.bf16.msra.mxu0 0
    %1390 = vmatpush.bf16.msra.mxu0 0
    %1391 = vmatpush.bf16.msra.mxu0 0
    %1392 = vmatpush.bf16.msra.mxu0 0
    %1393 = vmatpush.bf16.msra.mxu0 0
    %1394 = vmatpush.bf16.msra.mxu0 %v1379
    %1395 = vmatmul.bf16.gmra.mxu0 %v1382
    %v1396 = vpop.f32.mrf.mxu0
    %v1397 = vadd.f32 %v1367, %v1396
    %v1398 = vpop.f32.mrf.mxu0
    %v1399 = vadd.f32 %v1369, %v1398
    %1400 = vmatmul.bf16.gmra.mxu0 %v1385
    %v1401 = vpop.f32.mrf.mxu0
    %v1402 = vadd.f32 %v1372, %v1401
    %v1403 = vpop.f32.mrf.mxu0
    %1404 = vdwg.mxu0
    %v1405 = vpack.c.bf16 %v1248, %v1247
    %v1406 = vpack.c.bf16 %v1249, %v1249
    %1407 = vrot.lane.b32.xlu0 %v1275, 96
    %v1408 = vpop.permute.xlu0 %1407
    %1409 = vrot.lane.b32.xlu0 %v1276, 96
    %v1410 = vpop.permute.xlu0 %1409
    %v1413 = vsel %vm1000, %v1405, 0
    %v1416 = vsel %vm1000, %v1406, 0
    %v1419 = vsel %vm1283, %v1410, 0
    %1421 = vmatpush.bf16.msra.mxu0 0
    %1422 = vmatpush.bf16.msra.mxu0 0
    %1423 = vmatpush.bf16.msra.mxu0 0
    %1424 = vmatpush.bf16.msra.mxu0 0
    %1425 = vmatpush.bf16.msra.mxu0 0
    %1426 = vmatpush.bf16.msra.mxu0 0
    %1427 = vmatpush.bf16.msra.mxu0 %v1419
    %1428 = vmatpush.bf16.msra.mxu0 %v1408
    %1429 = vmatmul.bf16.gmra.mxu0 %v1413
    %v1430 = vpop.f32.mrf.mxu0
    %v1431 = vadd.f32 0.0, %v1430
    %v1432 = vpop.f32.mrf.mxu0
    %v1433 = vadd.f32 0.0, %v1432
    %1434 = vmatmul.bf16.gmra.mxu0 %v1416
    %v1435 = vpop.f32.mrf.mxu0
    %v1436 = vadd.f32 0.0, %v1435
    %v1437 = vpop.f32.mrf.mxu0
    %1438 = vdwg.mxu0
    %v1439 = vpack.c.bf16 %v1433, %v1431
    %v1440 = vpack.c.bf16 %v1436, %v1436
    %v1443 = vunpack.c.l.b16 %v1269
    %v1444 = vunpack.c.l.b16 %v1270
    %v1445 = vpack.c.b16 %v1444, %v1443
    %v1448 = vsel %vm703, %v1439, 0
    %v1451 = vsel %vm703, %v1440, 0
    %1453 = vmatpush.bf16.msra.mxu0 0
    %1454 = vmatpush.bf16.msra.mxu0 0
    %1455 = vmatpush.bf16.msra.mxu0 0
    %1456 = vmatpush.bf16.msra.mxu0 0
    %1457 = vmatpush.bf16.msra.mxu0 0
    %1458 = vmatpush.bf16.msra.mxu0 0
    %1459 = vmatpush.bf16.msra.mxu0 0
    %1460 = vmatpush.bf16.msra.mxu0 %v1445
    %1461 = vmatmul.bf16.gmra.mxu0 %v1448
    %v1462 = vpop.f32.mrf.mxu0
    %v1463 = vadd.f32 0.0, %v1462
    %v1464 = vpop.f32.mrf.mxu0
    %v1465 = vadd.f32 0.0, %v1464
    %1466 = vmatmul.bf16.gmra.mxu0 %v1451
    %v1467 = vpop.f32.mrf.mxu0
    %v1468 = vadd.f32 0.0, %v1467
    %v1469 = vpop.f32.mrf.mxu0
    %1470 = vdwg.mxu0
    %v1471 = vadd.f32 %v1397, %v1463
    %v1472 = vadd.f32 %v1399, %v1465
    %v1473 = vadd.f32 %v1402, %v1468
    %v1474 = vpack.c.bf16 %v1251, %v1250
    %v1475 = vpack.c.bf16 %v1252, %v1252
    %1476 = vrot.lane.b32.xlu0 %v1275, 80
    %v1477 = vpop.permute.xlu0 %1476
    %1478 = vrot.lane.b32.xlu0 %v1276, 80
    %v1479 = vpop.permute.xlu0 %1478
    %v1482 = vsel %vm1000, %v1474, 0
    %v1485 = vsel %vm1000, %v1475, 0
    %v1488 = vsel %vm1283, %v1479, 0
    %1490 = vmatpush.bf16.msra.mxu0 0
    %1491 = vmatpush.bf16.msra.mxu0 0
    %1492 = vmatpush.bf16.msra.mxu0 0
    %1493 = vmatpush.bf16.msra.mxu0 0
    %1494 = vmatpush.bf16.msra.mxu0 0
    %1495 = vmatpush.bf16.msra.mxu0 0
    %1496 = vmatpush.bf16.msra.mxu0 %v1488
    %1497 = vmatpush.bf16.msra.mxu0 %v1477
    %1498 = vmatmul.bf16.gmra.mxu0 %v1482
    %v1499 = vpop.f32.mrf.mxu0
    %v1500 = vadd.f32 0.0, %v1499
    %v1501 = vpop.f32.mrf.mxu0
    %v1502 = vadd.f32 0.0, %v1501
    %1503 = vmatmul.bf16.gmra.mxu0 %v1485
    %v1504 = vpop.f32.mrf.mxu0
    %v1505 = vadd.f32 0.0, %v1504
    %v1506 = vpop.f32.mrf.mxu0
    %1507 = vdwg.mxu0
    %v1508 = vpack.c.bf16 %v1502, %v1500
    %v1509 = vpack.c.bf16 %v1505, %v1505
    %v1512 = vunpack.c.l.b16 %v1271
    %v1513 = vunpack.c.l.b16 %v1272
    %v1514 = vpack.c.b16 %v1513, %v1512
    %v1517 = vsel %vm703, %v1508, 0
    %v1520 = vsel %vm703, %v1509, 0
    %1522 = vmatpush.bf16.msra.mxu0 0
    %1523 = vmatpush.bf16.msra.mxu0 0
    %1524 = vmatpush.bf16.msra.mxu0 0
    %1525 = vmatpush.bf16.msra.mxu0 0
    %1526 = vmatpush.bf16.msra.mxu0 0
    %1527 = vmatpush.bf16.msra.mxu0 0
    %1528 = vmatpush.bf16.msra.mxu0 0
    %1529 = vmatpush.bf16.msra.mxu0 %v1514
    %1530 = vmatmul.bf16.gmra.mxu0 %v1517
    %v1531 = vpop.f32.mrf.mxu0
    %v1532 = vadd.f32 0.0, %v1531
    %v1533 = vpop.f32.mrf.mxu0
    %v1534 = vadd.f32 0.0, %v1533
    %1535 = vmatmul.bf16.gmra.mxu0 %v1520
    %v1536 = vpop.f32.mrf.mxu0
    %v1537 = vadd.f32 0.0, %v1536
    %v1538 = vpop.f32.mrf.mxu0
    %1539 = vdwg.mxu0
    %v1540 = vadd.f32 %v1471, %v1532
    %v1541 = vadd.f32 %v1472, %v1534
    %v1542 = vadd.f32 %v1473, %v1537
    %v1543 = vpack.c.bf16 %v1254, %v1253
    %v1544 = vpack.c.bf16 %v1255, %v1255
    %v1545 = vpack.c.bf16 %v692, %v690
    %v1546 = vpack.c.bf16 %v694, %v694
    %v1548 = vsel %vm1000, %v1543, 0
    %v1551 = vsel %vm1000, %v1544, 0
    %v1554 = vsel %vm1283, %v1546, 0
    %1556 = vmatpush.bf16.msra.mxu0 0
    %1557 = vmatpush.bf16.msra.mxu0 0
    %1558 = vmatpush.bf16.msra.mxu0 0
    %1559 = vmatpush.bf16.msra.mxu0 0
    %1560 = vmatpush.bf16.msra.mxu0 0
    %1561 = vmatpush.bf16.msra.mxu0 0
    %1562 = vmatpush.bf16.msra.mxu0 %v1554
    %1563 = vmatpush.bf16.msra.mxu0 %v1545
    %1564 = vmatmul.bf16.gmra.mxu0 %v1548
    %v1565 = vpop.f32.mrf.mxu0
    %v1566 = vadd.f32 0.0, %v1565
    %v1567 = vpop.f32.mrf.mxu0
    %v1568 = vadd.f32 0.0, %v1567
    %1569 = vmatmul.bf16.gmra.mxu0 %v1551
    %v1570 = vpop.f32.mrf.mxu0
    %v1571 = vadd.f32 0.0, %v1570
    %v1572 = vpop.f32.mrf.mxu0
    %1573 = vdwg.mxu0
    %v1574 = vpack.c.bf16 %v1568, %v1566
    %v1575 = vpack.c.bf16 %v1571, %v1571
    %v1576 = vpack.c.bf16 %v1257, %v1256
    %v1577 = vpack.c.bf16 %v1258, %v1258
    %1580 = vrot.lane.b32.xlu0 %v1545, 112
    %v1581 = vpop.permute.xlu0 %1580
    %1582 = vrot.lane.b32.xlu0 %v1546, 112
    %v1583 = vpop.permute.xlu0 %1582
    %v1586 = vsel %vm1000, %v1576, 0
    %v1589 = vsel %vm1000, %v1577, 0
    %v1592 = vsel %vm1283, %v1583, 0
    %1594 = vmatpush.bf16.msra.mxu0 0
    %1595 = vmatpush.bf16.msra.mxu0 0
    %1596 = vmatpush.bf16.msra.mxu0 0
    %1597 = vmatpush.bf16.msra.mxu0 0
    %1598 = vmatpush.bf16.msra.mxu0 0
    %1599 = vmatpush.bf16.msra.mxu0 0
    %1600 = vmatpush.bf16.msra.mxu0 %v1592
    %1601 = vmatpush.bf16.msra.mxu0 %v1581
    %1602 = vmatmul.bf16.gmra.mxu0 %v1586
    %v1603 = vpop.f32.mrf.mxu0
    %v1604 = vadd.f32 0.0, %v1603
    %v1605 = vpop.f32.mrf.mxu0
    %v1606 = vadd.f32 0.0, %v1605
    %1607 = vmatmul.bf16.gmra.mxu0 %v1589
    %v1608 = vpop.f32.mrf.mxu0
    %v1609 = vadd.f32 0.0, %v1608
    %v1610 = vpop.f32.mrf.mxu0
    %1611 = vdwg.mxu0
    %v1612 = vpack.c.bf16 %v1606, %v1604
    %v1613 = vpack.c.bf16 %v1609, %v1609
    %v1615 = vsel %vm703, %v1612, 0
    %v1618 = vsel %vm703, %v1613, 0
    %1620 = vmatpush.bf16.msra.mxu0 0
    %1621 = vmatpush.bf16.msra.mxu0 0
    %1622 = vmatpush.bf16.msra.mxu0 0
    %1623 = vmatpush.bf16.msra.mxu0 0
    %1624 = vmatpush.bf16.msra.mxu0 0
    %1625 = vmatpush.bf16.msra.mxu0 0
    %1626 = vmatpush.bf16.msra.mxu0 0
    %1627 = vmatpush.bf16.msra.mxu0 %v1349
    %1628 = vmatmul.bf16.gmra.mxu0 %v1615
    %v1629 = vpop.f32.mrf.mxu0
    %v1630 = vadd.f32 0.0, %v1629
    %v1631 = vpop.f32.mrf.mxu0
    %v1632 = vadd.f32 0.0, %v1631
    %1633 = vmatmul.bf16.gmra.mxu0 %v1618
    %v1634 = vpop.f32.mrf.mxu0
    %v1635 = vadd.f32 0.0, %v1634
    %v1636 = vpop.f32.mrf.mxu0
    %1637 = vdwg.mxu0
    %v1639 = vsel %vm703, %v1574, 0
    %v1642 = vsel %vm703, %v1575, 0
    %1644 = vmatpush.bf16.msra.mxu0 0
    %1645 = vmatpush.bf16.msra.mxu0 0
    %1646 = vmatpush.bf16.msra.mxu0 0
    %1647 = vmatpush.bf16.msra.mxu0 0
    %1648 = vmatpush.bf16.msra.mxu0 0
    %1649 = vmatpush.bf16.msra.mxu0 0
    %1650 = vmatpush.bf16.msra.mxu0 0
    %1651 = vmatpush.bf16.msra.mxu0 %v1379
    %1652 = vmatmul.bf16.gmra.mxu0 %v1639
    %v1653 = vpop.f32.mrf.mxu0
    %v1654 = vadd.f32 %v1630, %v1653
    %v1655 = vpop.f32.mrf.mxu0
    %v1656 = vadd.f32 %v1632, %v1655
    %1657 = vmatmul.bf16.gmra.mxu0 %v1642
    %v1658 = vpop.f32.mrf.mxu0
    %v1659 = vadd.f32 %v1635, %v1658
    %v1660 = vpop.f32.mrf.mxu0
    %1661 = vdwg.mxu0
    %v1662 = vpack.c.bf16 %v1260, %v1259
    %v1663 = vpack.c.bf16 %v1261, %v1261
    %1664 = vrot.lane.b32.xlu0 %v1545, 96
    %v1665 = vpop.permute.xlu0 %1664
    %1666 = vrot.lane.b32.xlu0 %v1546, 96
    %v1667 = vpop.permute.xlu0 %1666
    %v1670 = vsel %vm1000, %v1662, 0
    %v1673 = vsel %vm1000, %v1663, 0
    %v1676 = vsel %vm1283, %v1667, 0
    %1678 = vmatpush.bf16.msra.mxu0 0
    %1679 = vmatpush.bf16.msra.mxu0 0
    %1680 = vmatpush.bf16.msra.mxu0 0
    %1681 = vmatpush.bf16.msra.mxu0 0
    %1682 = vmatpush.bf16.msra.mxu0 0
    %1683 = vmatpush.bf16.msra.mxu0 0
    %1684 = vmatpush.bf16.msra.mxu0 %v1676
    %1685 = vmatpush.bf16.msra.mxu0 %v1665
    %1686 = vmatmul.bf16.gmra.mxu0 %v1670
    %v1687 = vpop.f32.mrf.mxu0
    %v1688 = vadd.f32 0.0, %v1687
    %v1689 = vpop.f32.mrf.mxu0
    %v1690 = vadd.f32 0.0, %v1689
    %1691 = vmatmul.bf16.gmra.mxu0 %v1673
    %v1692 = vpop.f32.mrf.mxu0
    %v1693 = vadd.f32 0.0, %v1692
    %v1694 = vpop.f32.mrf.mxu0
    %1695 = vdwg.mxu0
    %v1696 = vpack.c.bf16 %v1690, %v1688
    %v1697 = vpack.c.bf16 %v1693, %v1693
    %v1699 = vsel %vm703, %v1696, 0
    %v1702 = vsel %vm703, %v1697, 0
    %1704 = vmatpush.bf16.msra.mxu0 0
    %1705 = vmatpush.bf16.msra.mxu0 0
    %1706 = vmatpush.bf16.msra.mxu0 0
    %1707 = vmatpush.bf16.msra.mxu0 0
    %1708 = vmatpush.bf16.msra.mxu0 0
    %1709 = vmatpush.bf16.msra.mxu0 0
    %1710 = vmatpush.bf16.msra.mxu0 0
    %1711 = vmatpush.bf16.msra.mxu0 %v1445
    %1712 = vmatmul.bf16.gmra.mxu0 %v1699
    %v1713 = vpop.f32.mrf.mxu0
    %v1714 = vadd.f32 0.0, %v1713
    %v1715 = vpop.f32.mrf.mxu0
    %v1716 = vadd.f32 0.0, %v1715
    %1717 = vmatmul.bf16.gmra.mxu0 %v1702
    %v1718 = vpop.f32.mrf.mxu0
    %v1719 = vadd.f32 0.0, %v1718
    %v1720 = vpop.f32.mrf.mxu0
    %1721 = vdwg.mxu0
    %v1722 = vadd.f32 %v1654, %v1714
    %v1723 = vadd.f32 %v1656, %v1716
    %v1724 = vadd.f32 %v1659, %v1719
    %v1725 = vpack.c.bf16 %v1263, %v1262
    %v1726 = vpack.c.bf16 %v1264, %v1264
    %1727 = vrot.lane.b32.xlu0 %v1545, 80
    %v1728 = vpop.permute.xlu0 %1727
    %1729 = vrot.lane.b32.xlu0 %v1546, 80
    %v1730 = vpop.permute.xlu0 %1729
    %v1733 = vsel %vm1000, %v1725, 0
    %v1736 = vsel %vm1000, %v1726, 0
    %v1739 = vsel %vm1283, %v1730, 0
    %1741 = vmatpush.bf16.msra.mxu0 0
    %1742 = vmatpush.bf16.msra.mxu0 0
    %1743 = vmatpush.bf16.msra.mxu0 0
    %1744 = vmatpush.bf16.msra.mxu0 0
    %1745 = vmatpush.bf16.msra.mxu0 0
    %1746 = vmatpush.bf16.msra.mxu0 0
    %1747 = vmatpush.bf16.msra.mxu0 %v1739
    %1748 = vmatpush.bf16.msra.mxu0 %v1728
    %1749 = vmatmul.bf16.gmra.mxu0 %v1733
    %v1750 = vpop.f32.mrf.mxu0
    %v1751 = vadd.f32 0.0, %v1750
    %v1752 = vpop.f32.mrf.mxu0
    %v1753 = vadd.f32 0.0, %v1752
    %1754 = vmatmul.bf16.gmra.mxu0 %v1736
    %v1755 = vpop.f32.mrf.mxu0
    %v1756 = vadd.f32 0.0, %v1755
    %v1757 = vpop.f32.mrf.mxu0
    %1758 = vdwg.mxu0
    %v1759 = vpack.c.bf16 %v1753, %v1751
    %v1760 = vpack.c.bf16 %v1756, %v1756
    %v1762 = vsel %vm703, %v1759, 0
    %v1765 = vsel %vm703, %v1760, 0
    %1767 = vmatpush.bf16.msra.mxu0 0
    %1768 = vmatpush.bf16.msra.mxu0 0
    %1769 = vmatpush.bf16.msra.mxu0 0
    %1770 = vmatpush.bf16.msra.mxu0 0
    %1771 = vmatpush.bf16.msra.mxu0 0
    %1772 = vmatpush.bf16.msra.mxu0 0
    %1773 = vmatpush.bf16.msra.mxu0 0
    %1774 = vmatpush.bf16.msra.mxu0 %v1514
    %1775 = vmatmul.bf16.gmra.mxu0 %v1762
    %v1776 = vpop.f32.mrf.mxu0
    %v1777 = vadd.f32 0.0, %v1776
    %v1778 = vpop.f32.mrf.mxu0
    %v1779 = vadd.f32 0.0, %v1778
    %1780 = vmatmul.bf16.gmra.mxu0 %v1765
    %v1781 = vpop.f32.mrf.mxu0
    %v1782 = vadd.f32 0.0, %v1781
    %v1783 = vpop.f32.mrf.mxu0
    %1784 = vdwg.mxu0
    %v1785 = vadd.f32 %v1722, %v1777
    %v1786 = vadd.f32 %v1723, %v1779
    %v1787 = vadd.f32 %v1724, %v1782
    %v1788 = vld [vmem:[%s8] sm:$0x1]
    %v1790 = vperm.slane %v1788, 0
    %v1792 = vadd.f32 %v1540, %v1790
    %v1793 = vadd.f32 %v1541, %v1790
    %v1794 = vadd.f32 %v1542, %v1790
    %v1795 = vadd.f32 %v1785, %v1790
    %v1796 = vadd.f32 %v1786, %v1790
    %v1797 = vadd.f32 %v1787, %v1790
    %v1798 = vperm.slane %v262, 0
    %v1799 = vperm.slane %v321, 0
    %v1802 = vmul.f32 %v1798, %v1792
    %v1803 = vmul.f32 %v1798, %v1793
    %v1804 = vmul.f32 %v1799, %v1795
    %v1805 = vmul.f32 %v1799, %v1796
    %v1806 = vadd.f32 %v49, %v1802
    %v1807 = vadd.f32 %v50, %v1803
    %v1808 = vadd.f32 %v51, %v1804
    %v1809 = vadd.f32 %v52, %v1805
    %v1810 = vperm.slane %v301, 0
    %v1811 = vperm.slane %v329, 0
    %1816 = vrot.lane.b32.xlu0 %v1794, 64
    %v1817 = vpop.permute.xlu0 %1816
    %1818 = vrot.lane.b32.xlu0 %v1797, 64
    %v1819 = vpop.permute.xlu0 %1818
    %v1822 = vmul.f32 %v1810, %v1817
    %v1823 = vmul.f32 %v1811, %v1819
    %v1824 = vadd.f32 %v53, %v1822
    %v1825 = vadd.f32 %v54, %v1823
    %v1826 = vsel %vm235, %v1806, 0.0
    %1827 = vadd.xlane.f32.xlu0 %v1826
    %v1828 = vpop.xlane.xlu0 %1827
    %v1829 = vsel %vm235, %v1807, 0.0
    %1830 = vadd.xlane.f32.xlu0 %v1829
    %v1831 = vpop.xlane.xlu0 %1830
    %v1832 = vsel %vm235, %v1808, 0.0
    %1833 = vadd.xlane.f32.xlu0 %v1832
    %v1834 = vpop.xlane.xlu0 %1833
    %v1835 = vsel %vm235, %v1809, 0.0
    %1836 = vadd.xlane.f32.xlu0 %v1835
    %v1837 = vpop.xlane.xlu0 %1836
    %v1838 = vmul.f32 %v1828, %v351
    %v1839 = vmul.f32 %v1831, %v351
    %v1840 = vmul.f32 %v1834, %v351
    %v1841 = vmul.f32 %v1837, %v351
    %v1842 = vsub.f32 %v1806, %v1838
    %v1843 = vsub.f32 %v1807, %v1839
    %v1844 = vsub.f32 %v1808, %v1840
    %v1845 = vsub.f32 %v1809, %v1841
    %v1846 = vmul.f32 %v1842, %v1842
    %v1847 = vmul.f32 %v1843, %v1843
    %v1848 = vmul.f32 %v1844, %v1844
    %v1849 = vmul.f32 %v1845, %v1845
    %v1850 = vsel %vm235, %v1846, 0.0
    %1851 = vadd.xlane.f32.xlu0 %v1850
    %v1852 = vpop.xlane.xlu0 %1851
    %v1853 = vsel %vm235, %v1847, 0.0
    %1854 = vadd.xlane.f32.xlu0 %v1853
    %v1855 = vpop.xlane.xlu0 %1854
    %v1856 = vsel %vm235, %v1848, 0.0
    %1857 = vadd.xlane.f32.xlu0 %v1856
    %v1858 = vpop.xlane.xlu0 %1857
    %v1859 = vsel %vm235, %v1849, 0.0
    %1860 = vadd.xlane.f32.xlu0 %v1859
    %v1861 = vpop.xlane.xlu0 %1860
    %v1862 = vmul.f32 %v1852, %v351
    %v1863 = vmul.f32 %v1855, %v351
    %v1864 = vmul.f32 %v1858, %v351
    %v1865 = vmul.f32 %v1861, %v351
    %v1866 = vadd.f32 %v1862, 1e-06
    %v1867 = vadd.f32 %v1863, 1e-06
    %v1868 = vadd.f32 %v1864, 1e-06
    %v1869 = vadd.f32 %v1865, 1e-06
    %v1870 = vrsqrt.pop %v1866
    %v1871 = vmul.f32 %v1870, %v1866
    %v1872 = vmul.f32 %v1871, %v1870
    %v1873 = vmul.f32 0.5, %v1872
    %v1874 = vsub.f32 1.5, %v1873
    %v1875 = vmul.f32 %v1870, %v1874
    %vm1876 = vweird.f32 %v1866
    %vm1877 = vweird.f32 %v1870
    %vm1878 = vmor %vm1876, %vm1877
    %v1879 = vsel %vm1878, %v1870, %v1875
    %v1880 = vrsqrt.pop %v1867
    %v1881 = vmul.f32 %v1880, %v1867
    %v1882 = vmul.f32 %v1881, %v1880
    %v1883 = vmul.f32 0.5, %v1882
    %v1884 = vsub.f32 1.5, %v1883
    %v1885 = vmul.f32 %v1880, %v1884
    %vm1886 = vweird.f32 %v1867
    %vm1887 = vweird.f32 %v1880
    %vm1888 = vmor %vm1886, %vm1887
    %v1889 = vsel %vm1888, %v1880, %v1885
    %v1890 = vrsqrt.pop %v1868
    %v1891 = vmul.f32 %v1890, %v1868
    %v1892 = vmul.f32 %v1891, %v1890
    %v1893 = vmul.f32 0.5, %v1892
    %v1894 = vsub.f32 1.5, %v1893
    %v1895 = vmul.f32 %v1890, %v1894
    %vm1896 = vweird.f32 %v1868
    %vm1897 = vweird.f32 %v1890
    %vm1898 = vmor %vm1896, %vm1897
    %v1899 = vsel %vm1898, %v1890, %v1895
    %v1900 = vrsqrt.pop %v1869
    %v1901 = vmul.f32 %v1900, %v1869
    %v1902 = vmul.f32 %v1901, %v1900
    %v1903 = vmul.f32 0.5, %v1902
    %v1904 = vsub.f32 1.5, %v1903
    %v1905 = vmul.f32 %v1900, %v1904
    %vm1906 = vweird.f32 %v1869
    %vm1907 = vweird.f32 %v1900
    %vm1908 = vmor %vm1906, %vm1907
    %v1909 = vsel %vm1908, %v1900, %v1905
    %v1910 = vmul.f32 %v1842, %v1879
    %v1911 = vmul.f32 %v1843, %v1889
    %v1912 = vmul.f32 %v1844, %v1899
    %v1913 = vmul.f32 %v1845, %v1909
    %v1914 = vadd.f32 %v275, 1.0
    %v1915 = vadd.f32 %v323, 1.0
    %v1918 = vperm.slane %v1914, 0
    %v1919 = vperm.slane %v1915, 0
    %v1922 = vmul.f32 %v1910, %v1918
    %v1923 = vmul.f32 %v1911, %v1918
    %v1924 = vmul.f32 %v1912, %v1919
    %v1925 = vmul.f32 %v1913, %v1919
    %1926 = vrot.lane.b32.xlu0 %v1798, 64
    %v1927 = vpop.permute.xlu0 %1926
    %1928 = vrot.lane.b32.xlu0 %v1799, 64
    %v1929 = vpop.permute.xlu0 %1928
    %v1932 = vadd.f32 %v1922, %v1927
    %v1933 = vadd.f32 %v1923, %v1927
    %v1934 = vadd.f32 %v1924, %v1929
    %v1935 = vadd.f32 %v1925, %v1929
    %v1936 = vsel %vm235, %v1824, 0.0
    %1937 = vadd.xlane.f32.xlu0 %v1936
    %v1938 = vpop.xlane.xlu0 %1937
    %v1939 = vsel %vm235, %v1825, 0.0
    %1940 = vadd.xlane.f32.xlu0 %v1939
    %v1941 = vpop.xlane.xlu0 %1940
    %v1942 = vmul.f32 %v1938, %v351
    %v1943 = vmul.f32 %v1941, %v351
    %v1944 = vsub.f32 %v1824, %v1942
    %v1945 = vsub.f32 %v1825, %v1943
    %v1946 = vmul.f32 %v1944, %v1944
    %v1947 = vmul.f32 %v1945, %v1945
    %v1948 = vsel %vm235, %v1946, 0.0
    %1949 = vadd.xlane.f32.xlu0 %v1948
    %v1950 = vpop.xlane.xlu0 %1949
    %v1951 = vsel %vm235, %v1947, 0.0
    %1952 = vadd.xlane.f32.xlu0 %v1951
    %v1953 = vpop.xlane.xlu0 %1952
    %v1954 = vmul.f32 %v1950, %v351
    %v1955 = vmul.f32 %v1953, %v351
    %v1956 = vadd.f32 %v1954, 1e-06
    %v1957 = vadd.f32 %v1955, 1e-06
    %v1958 = vrsqrt.pop %v1956
    %v1959 = vmul.f32 %v1958, %v1956
    %v1960 = vmul.f32 %v1959, %v1958
    %v1961 = vmul.f32 0.5, %v1960
    %v1962 = vsub.f32 1.5, %v1961
    %v1963 = vmul.f32 %v1958, %v1962
    %vm1964 = vweird.f32 %v1956
    %vm1965 = vweird.f32 %v1958
    %vm1966 = vmor %vm1964, %vm1965
    %v1967 = vsel %vm1966, %v1958, %v1963
    %v1968 = vrsqrt.pop %v1957
    %v1969 = vmul.f32 %v1968, %v1957
    %v1970 = vmul.f32 %v1969, %v1968
    %v1971 = vmul.f32 0.5, %v1970
    %v1972 = vsub.f32 1.5, %v1971
    %v1973 = vmul.f32 %v1968, %v1972
    %vm1974 = vweird.f32 %v1957
    %vm1975 = vweird.f32 %v1968
    %vm1976 = vmor %vm1974, %vm1975
    %v1977 = vsel %vm1976, %v1968, %v1973
    %v1978 = vmul.f32 %v1944, %v1967
    %v1979 = vmul.f32 %v1945, %v1977
    %v1980 = vadd.f32 %v314, 1.0
    %v1981 = vadd.f32 %v331, 1.0
    %v1984 = vperm.slane %v1980, 0
    %v1985 = vperm.slane %v1981, 0
    %v1988 = vmul.f32 %v1978, %v1984
    %v1989 = vmul.f32 %v1979, %v1985
    %1990 = vrot.lane.b32.xlu0 %v1810, 64
    %v1991 = vpop.permute.xlu0 %1990
    %1992 = vrot.lane.b32.xlu0 %v1811, 64
    %v1993 = vpop.permute.xlu0 %1992
    %v1996 = vadd.f32 %v1988, %v1991
    %v1997 = vadd.f32 %v1989, %v1993
    %v1998 = vsel %vm235, %v1932, 0.0
    %v1999 = vsel %vm235, %v1933, 0.0
    %v2000 = vsel %vm235, %v1934, 0.0
    %v2001 = vsel %vm235, %v1935, 0.0
    %2004 = vrot.lane.b32.xlu0 %v1996, 64
    %v2005 = vpop.permute.xlu0 %2004
    %2006 = vrot.lane.b32.xlu0 %v1997, 64
    %v2007 = vpop.permute.xlu0 %2006
    %v2010 = vsel %vm235, 0.0, %v2005
    %v2011 = vsel %vm235, 0.0, %v2007
    %v2012 = vpack.c.bf16 %v1999, %v1998
    %v2013 = vpack.c.bf16 %v2000, %v2010
    %v2014 = vpack.c.bf16 %v2011, %v2001
    %v2015 = vld [vmem:[%s9] sm:$0xff]
    %v2016 = vld [vmem:[%s9 + $0x8] sm:$0xff]
    %v2017 = vld [vmem:[%s9 + $0x10] sm:$0xff]
    %v2018 = vld [vmem:[%s9 + $0x18] sm:$0xff]
    %v2019 = vld [vmem:[%s9 + $0x20] sm:$0xff]
    %v2020 = vld [vmem:[%s9 + $0x28] sm:$0xff]
    %v2021 = vld [vmem:[%s9 + $0x30] sm:$0xff]
    %v2022 = vld [vmem:[%s9 + $0x38] sm:$0xff]
    %v2023 = vld [vmem:[%s9 + $0x40] sm:$0xff]
    %v2024 = vld [vmem:[%s9 + $0x48] sm:$0xff]
    %v2025 = vld [vmem:[%s9 + $0x50] sm:$0xff]
    %v2026 = vld [vmem:[%s9 + $0x58] sm:$0xff]
    %v2027 = vld [vmem:[%s9 + $0x60] sm:$0xff]
    %v2028 = vld [vmem:[%s9 + $0x68] sm:$0xff]
    %v2029 = vld [vmem:[%s9 + $0x70] sm:$0xff]
    %v2030 = vld [vmem:[%s9 + $0x78] sm:$0xff]
    %v2047 = vunpack.c.l.b16 %v2015
    %v2048 = vunpack.c.h.b16 %v2015
    %v2049 = vunpack.c.l.b16 %v2016
    %v2050 = vunpack.c.h.b16 %v2016
    %v2051 = vunpack.c.l.b16 %v2017
    %v2052 = vunpack.c.h.b16 %v2017
    %v2053 = vunpack.c.l.b16 %v2018
    %v2054 = vunpack.c.h.b16 %v2018
    %v2055 = vunpack.c.l.b16 %v2019
    %v2056 = vunpack.c.h.b16 %v2019
    %v2057 = vunpack.c.l.b16 %v2020
    %v2058 = vunpack.c.h.b16 %v2020
    %v2059 = vunpack.c.l.b16 %v2021
    %v2060 = vunpack.c.h.b16 %v2021
    %v2061 = vunpack.c.l.b16 %v2022
    %v2062 = vunpack.c.h.b16 %v2022
    %v2063 = vunpack.c.l.b16 %v2023
    %v2064 = vunpack.c.h.b16 %v2023
    %v2065 = vunpack.c.l.b16 %v2024
    %v2066 = vunpack.c.h.b16 %v2024
    %v2067 = vunpack.c.l.b16 %v2025
    %v2068 = vunpack.c.h.b16 %v2025
    %v2069 = vunpack.c.l.b16 %v2026
    %v2070 = vunpack.c.h.b16 %v2026
    %v2071 = vunpack.c.l.b16 %v2027
    %v2072 = vunpack.c.h.b16 %v2027
    %v2073 = vunpack.c.l.b16 %v2028
    %v2074 = vunpack.c.h.b16 %v2028
    %v2075 = vunpack.c.l.b16 %v2029
    %v2076 = vunpack.c.h.b16 %v2029
    %v2077 = vunpack.c.l.b16 %v2030
    %v2078 = vunpack.c.h.b16 %v2030
    %v2079 = vpack.c.b16 %v2049, %v2047
    %v2080 = vpack.c.b16 %v2050, %v2048
    %v2081 = vpack.c.b16 %v2053, %v2051
    %v2082 = vpack.c.b16 %v2054, %v2052
    %v2083 = vpack.c.b16 %v2057, %v2055
    %v2084 = vpack.c.b16 %v2058, %v2056
    %v2085 = vpack.c.b16 %v2061, %v2059
    %v2086 = vpack.c.b16 %v2062, %v2060
    %v2087 = vpack.c.b16 %v2065, %v2063
    %v2088 = vpack.c.b16 %v2066, %v2064
    %v2089 = vpack.c.b16 %v2069, %v2067
    %v2090 = vpack.c.b16 %v2070, %v2068
    %v2091 = vpack.c.b16 %v2073, %v2071
    %v2092 = vpack.c.b16 %v2074, %v2072
    %v2093 = vpack.c.b16 %v2077, %v2075
    %v2094 = vpack.c.b16 %v2078, %v2076
    %2111 = vmatpush.bf16.msra.mxu0 %v2093
    %2112 = vmatpush.bf16.msra.mxu0 %v2091
    %2113 = vmatpush.bf16.msra.mxu0 %v2089
    %2114 = vmatpush.bf16.msra.mxu0 %v2087
    %2115 = vmatpush.bf16.msra.mxu0 %v2085
    %2116 = vmatpush.bf16.msra.mxu0 %v2083
    %2117 = vmatpush.bf16.msra.mxu0 %v2081
    %2118 = vmatpush.bf16.msra.mxu0 %v2079
    %2119 = vmatmul.bf16.gmra.mxu0 %v2012
    %v2120 = vpop.f32.mrf.mxu0
    %v2121 = vadd.f32 0.0, %v2120
    %v2122 = vpop.f32.mrf.mxu0
    %v2123 = vadd.f32 0.0, %v2122
    %2124 = vmatmul.bf16.gmra.mxu0 %v2013
    %v2125 = vpop.f32.mrf.mxu0
    %v2126 = vadd.f32 0.0, %v2125
    %v2127 = vpop.f32.mrf.mxu0
    %v2128 = vadd.f32 0.0, %v2127
    %2129 = vmatmul.bf16.gmra.mxu0 %v2014
    %v2130 = vpop.f32.mrf.mxu0
    %v2131 = vadd.f32 0.0, %v2130
    %v2132 = vpop.f32.mrf.mxu0
    %v2133 = vadd.f32 0.0, %v2132
    %2134 = vdwg.mxu0
    %2135 = vmatpush.bf16.msra.mxu0 %v2094
    %2136 = vmatpush.bf16.msra.mxu0 %v2092
    %2137 = vmatpush.bf16.msra.mxu0 %v2090
    %2138 = vmatpush.bf16.msra.mxu0 %v2088
    %2139 = vmatpush.bf16.msra.mxu0 %v2086
    %2140 = vmatpush.bf16.msra.mxu0 %v2084
    %2141 = vmatpush.bf16.msra.mxu0 %v2082
    %2142 = vmatpush.bf16.msra.mxu0 %v2080
    %2143 = vmatmul.bf16.gmra.mxu0 %v2012
    %v2144 = vpop.f32.mrf.mxu0
    %v2145 = vadd.f32 0.0, %v2144
    %v2146 = vpop.f32.mrf.mxu0
    %v2147 = vadd.f32 0.0, %v2146
    %2148 = vmatmul.bf16.gmra.mxu0 %v2013
    %v2149 = vpop.f32.mrf.mxu0
    %v2150 = vadd.f32 0.0, %v2149
    %v2151 = vpop.f32.mrf.mxu0
    %v2152 = vadd.f32 0.0, %v2151
    %2153 = vmatmul.bf16.gmra.mxu0 %v2014
    %v2154 = vpop.f32.mrf.mxu0
    %v2155 = vadd.f32 0.0, %v2154
    %v2156 = vpop.f32.mrf.mxu0
    %v2157 = vadd.f32 0.0, %v2156
    %2158 = vdwg.mxu0
    %v2159 = vld [vmem:[%s10] sm:$0xff]
    %v2160 = vld [vmem:[%s10 + $0x8] sm:$0xff]
    %v2161 = vld [vmem:[%s10 + $0x10] sm:$0xff]
    %v2162 = vld [vmem:[%s10 + $0x18] sm:$0xff]
    %v2163 = vld [vmem:[%s10 + $0x20] sm:$0xff]
    %v2164 = vld [vmem:[%s10 + $0x28] sm:$0xff]
    %v2165 = vadd.f32 %v2121, %v2159
    %v2166 = vadd.f32 %v2145, %v2160
    %v2167 = vadd.f32 %v2123, %v2161
    %v2168 = vadd.f32 %v2147, %v2162
    %v2169 = vadd.f32 %v2126, %v2163
    %v2170 = vadd.f32 %v2150, %v2164
    %v2171 = vadd.f32 %v2128, %v2159
    %v2172 = vadd.f32 %v2152, %v2160
    %v2173 = vadd.f32 %v2131, %v2161
    %v2174 = vadd.f32 %v2155, %v2162
    %v2175 = vadd.f32 %v2133, %v2163
    %v2176 = vadd.f32 %v2157, %v2164
    %v2177 = vmul.f32 %v2165, %v2165
    %v2178 = vmul.f32 %v2166, %v2166
    %v2179 = vmul.f32 %v2167, %v2167
    %v2180 = vmul.f32 %v2168, %v2168
    %v2181 = vmul.f32 %v2169, %v2169
    %v2182 = vmul.f32 %v2170, %v2170
    %v2183 = vmul.f32 %v2171, %v2171
    %v2184 = vmul.f32 %v2172, %v2172
    %v2185 = vmul.f32 %v2173, %v2173
    %v2186 = vmul.f32 %v2174, %v2174
    %v2187 = vmul.f32 %v2175, %v2175
    %v2188 = vmul.f32 %v2176, %v2176
    %v2189 = vmul.f32 %v2165, %v2177
    %v2190 = vmul.f32 %v2166, %v2178
    %v2191 = vmul.f32 %v2167, %v2179
    %v2192 = vmul.f32 %v2168, %v2180
    %v2193 = vmul.f32 %v2169, %v2181
    %v2194 = vmul.f32 %v2170, %v2182
    %v2195 = vmul.f32 %v2171, %v2183
    %v2196 = vmul.f32 %v2172, %v2184
    %v2197 = vmul.f32 %v2173, %v2185
    %v2198 = vmul.f32 %v2174, %v2186
    %v2199 = vmul.f32 %v2175, %v2187
    %v2200 = vmul.f32 %v2176, %v2188
    %v2201 = vmul.f32 %v2189, 0.044715
    %v2202 = vmul.f32 %v2190, 0.044715
    %v2203 = vmul.f32 %v2191, 0.044715
    %v2204 = vmul.f32 %v2192, 0.044715
    %v2205 = vmul.f32 %v2193, 0.044715
    %v2206 = vmul.f32 %v2194, 0.044715
    %v2207 = vmul.f32 %v2195, 0.044715
    %v2208 = vmul.f32 %v2196, 0.044715
    %v2209 = vmul.f32 %v2197, 0.044715
    %v2210 = vmul.f32 %v2198, 0.044715
    %v2211 = vmul.f32 %v2199, 0.044715
    %v2212 = vmul.f32 %v2200, 0.044715
    %v2213 = vadd.f32 %v2165, %v2201
    %v2214 = vadd.f32 %v2166, %v2202
    %v2215 = vadd.f32 %v2167, %v2203
    %v2216 = vadd.f32 %v2168, %v2204
    %v2217 = vadd.f32 %v2169, %v2205
    %v2218 = vadd.f32 %v2170, %v2206
    %v2219 = vadd.f32 %v2171, %v2207
    %v2220 = vadd.f32 %v2172, %v2208
    %v2221 = vadd.f32 %v2173, %v2209
    %v2222 = vadd.f32 %v2174, %v2210
    %v2223 = vadd.f32 %v2175, %v2211
    %v2224 = vadd.f32 %v2176, %v2212
    %v2225 = vmul.f32 %v2213, 0.7978846
    %v2226 = vmul.f32 %v2214, 0.7978846
    %v2227 = vmul.f32 %v2215, 0.7978846
    %v2228 = vmul.f32 %v2216, 0.7978846
    %v2229 = vmul.f32 %v2217, 0.7978846
    %v2230 = vmul.f32 %v2218, 0.7978846
    %v2231 = vmul.f32 %v2219, 0.7978846
    %v2232 = vmul.f32 %v2220, 0.7978846
    %v2233 = vmul.f32 %v2221, 0.7978846
    %v2234 = vmul.f32 %v2222, 0.7978846
    %v2235 = vmul.f32 %v2223, 0.7978846
    %v2236 = vmul.f32 %v2224, 0.7978846
    %v2237 = vtanh.pop %v2225
    %v2238 = vtanh.pop %v2226
    %v2239 = vtanh.pop %v2227
    %v2240 = vtanh.pop %v2228
    %v2241 = vtanh.pop %v2229
    %v2242 = vtanh.pop %v2230
    %v2243 = vtanh.pop %v2231
    %v2244 = vtanh.pop %v2232
    %v2245 = vtanh.pop %v2233
    %v2246 = vtanh.pop %v2234
    %v2247 = vtanh.pop %v2235
    %v2248 = vtanh.pop %v2236
    %v2249 = vadd.f32 %v2237, 1.0
    %v2250 = vadd.f32 %v2238, 1.0
    %v2251 = vadd.f32 %v2239, 1.0
    %v2252 = vadd.f32 %v2240, 1.0
    %v2253 = vadd.f32 %v2241, 1.0
    %v2254 = vadd.f32 %v2242, 1.0
    %v2255 = vadd.f32 %v2243, 1.0
    %v2256 = vadd.f32 %v2244, 1.0
    %v2257 = vadd.f32 %v2245, 1.0
    %v2258 = vadd.f32 %v2246, 1.0
    %v2259 = vadd.f32 %v2247, 1.0
    %v2260 = vadd.f32 %v2248, 1.0
    %v2261 = vmul.f32 %v2249, 0.5
    %v2262 = vmul.f32 %v2250, 0.5
    %v2263 = vmul.f32 %v2251, 0.5
    %v2264 = vmul.f32 %v2252, 0.5
    %v2265 = vmul.f32 %v2253, 0.5
    %v2266 = vmul.f32 %v2254, 0.5
    %v2267 = vmul.f32 %v2255, 0.5
    %v2268 = vmul.f32 %v2256, 0.5
    %v2269 = vmul.f32 %v2257, 0.5
    %v2270 = vmul.f32 %v2258, 0.5
    %v2271 = vmul.f32 %v2259, 0.5
    %v2272 = vmul.f32 %v2260, 0.5
    %v2273 = vmul.f32 %v2165, %v2261
    %v2274 = vmul.f32 %v2166, %v2262
    %v2275 = vmul.f32 %v2167, %v2263
    %v2276 = vmul.f32 %v2168, %v2264
    %v2277 = vmul.f32 %v2169, %v2265
    %v2278 = vmul.f32 %v2170, %v2266
    %v2279 = vmul.f32 %v2171, %v2267
    %v2280 = vmul.f32 %v2172, %v2268
    %v2281 = vmul.f32 %v2173, %v2269
    %v2282 = vmul.f32 %v2174, %v2270
    %v2283 = vmul.f32 %v2175, %v2271
    %v2284 = vmul.f32 %v2176, %v2272
    %v2285 = vpack.c.bf16 %v2275, %v2273
    %v2286 = vpack.c.bf16 %v2276, %v2274
    %v2287 = vpack.c.bf16 %v2279, %v2277
    %v2288 = vpack.c.bf16 %v2280, %v2278
    %v2289 = vpack.c.bf16 %v2283, %v2281
    %v2290 = vpack.c.bf16 %v2284, %v2282
    %v2291 = vld [vmem:[%s11] sm:$0xf]
    %v2292 = vld [vmem:[%s11 + $0x4] sm:$0xf]
    %v2293 = vld [vmem:[%s11 + $0x8] sm:$0xf]
    %v2294 = vld [vmem:[%s11 + $0xc] sm:$0xf]
    %v2295 = vld [vmem:[%s11 + $0x10] sm:$0xf]
    %v2296 = vld [vmem:[%s11 + $0x14] sm:$0xf]
    %v2297 = vld [vmem:[%s11 + $0x18] sm:$0xf]
    %v2298 = vld [vmem:[%s11 + $0x1c] sm:$0xf]
    %v2299 = vld [vmem:[%s11 + $0x20] sm:$0xf]
    %v2300 = vld [vmem:[%s11 + $0x24] sm:$0xf]
    %v2301 = vld [vmem:[%s11 + $0x28] sm:$0xf]
    %v2302 = vld [vmem:[%s11 + $0x2c] sm:$0xf]
    %v2303 = vld [vmem:[%s11 + $0x30] sm:$0xf]
    %v2304 = vld [vmem:[%s11 + $0x34] sm:$0xf]
    %v2305 = vld [vmem:[%s11 + $0x38] sm:$0xf]
    %v2306 = vld [vmem:[%s11 + $0x3c] sm:$0xf]
    %v2307 = vld [vmem:[%s11 + $0x40] sm:$0xf]
    %v2308 = vld [vmem:[%s11 + $0x44] sm:$0xf]
    %v2309 = vld [vmem:[%s11 + $0x48] sm:$0xf]
    %v2310 = vld [vmem:[%s11 + $0x4c] sm:$0xf]
    %v2311 = vld [vmem:[%s11 + $0x50] sm:$0xf]
    %v2312 = vld [vmem:[%s11 + $0x54] sm:$0xf]
    %v2313 = vld [vmem:[%s11 + $0x58] sm:$0xf]
    %v2314 = vld [vmem:[%s11 + $0x5c] sm:$0xf]
    %v2315 = vld [vmem:[%s11 + $0x60] sm:$0xf]
    %v2316 = vld [vmem:[%s11 + $0x64] sm:$0xf]
    %v2317 = vld [vmem:[%s11 + $0x68] sm:$0xf]
    %v2318 = vld [vmem:[%s11 + $0x6c] sm:$0xf]
    %v2319 = vld [vmem:[%s11 + $0x70] sm:$0xf]
    %v2320 = vld [vmem:[%s11 + $0x74] sm:$0xf]
    %v2321 = vld [vmem:[%s11 + $0x78] sm:$0xf]
    %v2322 = vld [vmem:[%s11 + $0x7c] sm:$0xf]
    %v2355 = vunpack.c.l.b16 %v2291
    %v2356 = vunpack.c.l.b16 %v2292
    %v2357 = vunpack.c.l.b16 %v2293
    %v2358 = vunpack.c.l.b16 %v2294
    %v2359 = vunpack.c.l.b16 %v2295
    %v2360 = vunpack.c.l.b16 %v2296
    %v2361 = vunpack.c.l.b16 %v2297
    %v2362 = vunpack.c.l.b16 %v2298
    %v2363 = vunpack.c.l.b16 %v2299
    %v2364 = vunpack.c.l.b16 %v2300
    %v2365 = vunpack.c.l.b16 %v2301
    %v2366 = vunpack.c.l.b16 %v2302
    %v2367 = vunpack.c.l.b16 %v2303
    %v2368 = vunpack.c.l.b16 %v2304
    %v2369 = vunpack.c.l.b16 %v2305
    %v2370 = vunpack.c.l.b16 %v2306
    %v2371 = vunpack.c.l.b16 %v2307
    %v2372 = vunpack.c.l.b16 %v2308
    %v2373 = vunpack.c.l.b16 %v2309
    %v2374 = vunpack.c.l.b16 %v2310
    %v2375 = vunpack.c.l.b16 %v2311
    %v2376 = vunpack.c.l.b16 %v2312
    %v2377 = vunpack.c.l.b16 %v2313
    %v2378 = vunpack.c.l.b16 %v2314
    %v2379 = vunpack.c.l.b16 %v2315
    %v2380 = vunpack.c.l.b16 %v2316
    %v2381 = vunpack.c.l.b16 %v2317
    %v2382 = vunpack.c.l.b16 %v2318
    %v2383 = vunpack.c.l.b16 %v2319
    %v2384 = vunpack.c.l.b16 %v2320
    %v2385 = vunpack.c.l.b16 %v2321
    %v2386 = vunpack.c.l.b16 %v2322
    %v2387 = vpack.c.b16 %v2356, %v2355
    %v2388 = vpack.c.b16 %v2358, %v2357
    %v2389 = vpack.c.b16 %v2360, %v2359
    %v2390 = vpack.c.b16 %v2362, %v2361
    %v2391 = vpack.c.b16 %v2364, %v2363
    %v2392 = vpack.c.b16 %v2366, %v2365
    %v2393 = vpack.c.b16 %v2368, %v2367
    %v2394 = vpack.c.b16 %v2370, %v2369
    %v2395 = vpack.c.b16 %v2372, %v2371
    %v2396 = vpack.c.b16 %v2374, %v2373
    %v2397 = vpack.c.b16 %v2376, %v2375
    %v2398 = vpack.c.b16 %v2378, %v2377
    %v2399 = vpack.c.b16 %v2380, %v2379
    %v2400 = vpack.c.b16 %v2382, %v2381
    %v2401 = vpack.c.b16 %v2384, %v2383
    %v2402 = vpack.c.b16 %v2386, %v2385
    %2419 = vmatpush.bf16.msra.mxu0 %v2394
    %2420 = vmatpush.bf16.msra.mxu0 %v2393
    %2421 = vmatpush.bf16.msra.mxu0 %v2392
    %2422 = vmatpush.bf16.msra.mxu0 %v2391
    %2423 = vmatpush.bf16.msra.mxu0 %v2390
    %2424 = vmatpush.bf16.msra.mxu0 %v2389
    %2425 = vmatpush.bf16.msra.mxu0 %v2388
    %2426 = vmatpush.bf16.msra.mxu0 %v2387
    %2427 = vmatmul.bf16.gmra.mxu0 %v2285
    %v2428 = vpop.f32.mrf.mxu0
    %v2429 = vadd.f32 0.0, %v2428
    %v2430 = vpop.f32.mrf.mxu0
    %v2431 = vadd.f32 0.0, %v2430
    %2432 = vmatmul.bf16.gmra.mxu0 %v2287
    %v2433 = vpop.f32.mrf.mxu0
    %v2434 = vadd.f32 0.0, %v2433
    %v2435 = vpop.f32.mrf.mxu0
    %v2436 = vadd.f32 0.0, %v2435
    %2437 = vmatmul.bf16.gmra.mxu0 %v2289
    %v2438 = vpop.f32.mrf.mxu0
    %v2439 = vadd.f32 0.0, %v2438
    %v2440 = vpop.f32.mrf.mxu0
    %v2441 = vadd.f32 0.0, %v2440
    %2442 = vdwg.mxu0
    %2443 = vmatpush.bf16.msra.mxu0 %v2402
    %2444 = vmatpush.bf16.msra.mxu0 %v2401
    %2445 = vmatpush.bf16.msra.mxu0 %v2400
    %2446 = vmatpush.bf16.msra.mxu0 %v2399
    %2447 = vmatpush.bf16.msra.mxu0 %v2398
    %2448 = vmatpush.bf16.msra.mxu0 %v2397
    %2449 = vmatpush.bf16.msra.mxu0 %v2396
    %2450 = vmatpush.bf16.msra.mxu0 %v2395
    %2451 = vmatmul.bf16.gmra.mxu0 %v2286
    %v2452 = vpop.f32.mrf.mxu0
    %v2453 = vadd.f32 %v2429, %v2452
    %v2454 = vpop.f32.mrf.mxu0
    %v2455 = vadd.f32 %v2431, %v2454
    %2456 = vmatmul.bf16.gmra.mxu0 %v2288
    %v2457 = vpop.f32.mrf.mxu0
    %v2458 = vadd.f32 %v2434, %v2457
    %v2459 = vpop.f32.mrf.mxu0
    %v2460 = vadd.f32 %v2436, %v2459
    %2461 = vmatmul.bf16.gmra.mxu0 %v2290
    %v2462 = vpop.f32.mrf.mxu0
    %v2463 = vadd.f32 %v2439, %v2462
    %v2464 = vpop.f32.mrf.mxu0
    %v2465 = vadd.f32 %v2441, %v2464
    %2466 = vdwg.mxu0
    %v2467 = vld [vmem:[%s12] sm:$0x1]
    %v2469 = vperm.slane %v2467, 0
    %v2471 = vadd.f32 %v2453, %v2469
    %v2472 = vadd.f32 %v2455, %v2469
    %v2473 = vadd.f32 %v2458, %v2469
    %v2474 = vadd.f32 %v2460, %v2469
    %v2475 = vadd.f32 %v2463, %v2469
    %v2476 = vadd.f32 %v2465, %v2469
    %v2477 = vperm.slane %v275, 0
    %v2478 = vperm.slane %v323, 0
    %2485 = vrot.lane.b32.xlu0 %v2471, 64
    %v2486 = vpop.permute.xlu0 %2485
    %2487 = vrot.lane.b32.xlu0 %v2472, 64
    %v2488 = vpop.permute.xlu0 %2487
    %2489 = vrot.lane.b32.xlu0 %v2474, 64
    %v2490 = vpop.permute.xlu0 %2489
    %2491 = vrot.lane.b32.xlu0 %v2475, 64
    %v2492 = vpop.permute.xlu0 %2491
    %v2497 = vmul.f32 %v2477, %v2486
    %v2498 = vmul.f32 %v2477, %v2488
    %v2499 = vmul.f32 %v2478, %v2490
    %v2500 = vmul.f32 %v2478, %v2492
    %2505 = vrot.lane.b32.xlu0 %v2497, 64
    %v2506 = vpop.permute.xlu0 %2505
    %2507 = vrot.lane.b32.xlu0 %v2498, 64
    %v2508 = vpop.permute.xlu0 %2507
    %2509 = vrot.lane.b32.xlu0 %v2499, 64
    %v2510 = vpop.permute.xlu0 %2509
    %2511 = vrot.lane.b32.xlu0 %v2500, 64
    %v2512 = vpop.permute.xlu0 %2511
    %v2517 = vadd.f32 %v1806, %v2506
    %v2518 = vadd.f32 %v1807, %v2508
    %v2519 = vadd.f32 %v1808, %v2510
    %v2520 = vadd.f32 %v1809, %v2512
    %2521 = vst.msk [vmem:[#allocation2] sm:$0xff] %vm235, %v2517
    %2522 = vst.msk [vmem:[#allocation2 + $0x8] sm:$0xff] %vm235, %v2518
    %2523 = vst.msk [vmem:[#allocation2 + $0x10] sm:$0xff] %vm235, %v2519
    %2524 = vst.msk [vmem:[#allocation2 + $0x18] sm:$0xff] %vm235, %v2520
    %v2525 = vperm.slane %v314, 0
    %v2526 = vperm.slane %v331, 0
    %v2529 = vmul.f32 %v2525, %v2473
    %v2530 = vmul.f32 %v2526, %v2476
    %2533 = vrot.lane.b32.xlu0 %v2529, 64
    %v2534 = vpop.permute.xlu0 %2533
    %2535 = vrot.lane.b32.xlu0 %v2530, 64
    %v2536 = vpop.permute.xlu0 %2535
    %v2539 = vadd.f32 %v1824, %v2534
    %v2540 = vadd.f32 %v1825, %v2536
    %2541 = vst.msk [vmem:[#allocation4] sm:$0xff] %vm235, %v2539
    %2542 = vst.msk [vmem:[#allocation4 + $0x8] sm:$0xff] %vm235, %v2540
    // Predicated region
    $region54: #{joint_transformer_block.1} parent=1 // pred_check
      _
    $region55: #{joint_transformer_block.1} parent=1 // pred_check_branch
      %2544 = sbr.rel (0) target = $region57
    $region56: #{joint_transformer_block.1} parent=1 // pred_region
      %2546 = vsyncadd [#allocation3], 0
      %s2547 = sshll.u32 [#allocation2], 4
      %s2548 = int_to_ptr.vmem [resolvable:$true] %s2547
      %s2549 = sshll.u32 %s13, 4
      %s2550 = int_to_ptr.hbm [resolvable:$true] %s2549
      %2555 = dma.vmem_to_hbm [thread:$0]  %s2548, 512, %s2550, [#allocation3], 128, 128, 8
    $region57: #{joint_transformer_block.1} parent=1 // pred_fallthru
      _
    // Predicated region
    $region58: #{joint_transformer_block.1} parent=1 // pred_check
      _
    $region59: #{joint_transformer_block.1} parent=1 // pred_check_branch
      %2557 = sbr.rel (0) target = $region61
    $region60: #{joint_transformer_block.1} parent=1 // pred_region
      %2559 = vsyncadd [#allocation5], 0
      %s2560 = sshll.u32 [#allocation4], 4
      %s2561 = int_to_ptr.vmem [resolvable:$true] %s2560
      %s2562 = sshll.u32 %s14, 4
      %s2563 = int_to_ptr.hbm [resolvable:$true] %s2562
      %2568 = dma.vmem_to_hbm [thread:$0]  %s2561, 256, %s2563, [#allocation5], 128, 128, 8
    $region61: #{joint_transformer_block.1} parent=1 // pred_fallthru
      _
    // Predicated region
    $region62: #{joint_transformer_block.1} parent=1 // pred_check
      _
    $region63: #{joint_transformer_block.1} parent=1 // pred_check_branch
      %2570 = sbr.rel (0) target = $region65
    $region64: #{joint_transformer_block.1} parent=1 // pred_region
      %2572 = dma.done [#allocation3], 512
    $region65: #{joint_transformer_block.1} parent=1 // pred_fallthru
      _
    // Predicated region
    $region66: #{joint_transformer_block.1} parent=1 // pred_check
      _
    $region67: #{joint_transformer_block.1} parent=1 // pred_check_branch
      %2574 = sbr.rel (0) target = $region69
    $region68: #{joint_transformer_block.1} parent=1 // pred_region
      %2576 = dma.done [#allocation5], 256
    $region69: #{joint_transformer_block.1} parent=1 // pred_fallthru
      _
    %2577 = vsyncpa [#allocation3], 1
    %2578 = vsyncpa [#allocation5], 1

</llo_original>
